<compile_context>
chip_gen: v7x
topology: tpu7x:2x2x1
jax: 0.10.0
libtpu: 0.0.40
codegen_flags: <defaults>
</compile_context>

<pallas_src>
import math

import jax
import jax.numpy as jnp
from jax import lax
from jax.experimental import pallas as pl
from jax.experimental.pallas import tpu as pltpu

# ----------------------------------------------------------------------------
# Model hyper-parameters (small, consistent with RoBERTaModel.__init__ mapping)
# ----------------------------------------------------------------------------
VOCAB_SIZE = 100
VOCAB_PAD = 128                    # lane-dense padding for the logits matmul
NUM_HEADS = 4
HEAD_DIM = 8                       # model_parameters['hidden_size']
HIDDEN = HEAD_DIM * NUM_HEADS      # hidden_size * num_attention_heads = 32
NUM_LAYERS = 2
INTERMEDIATE = 64
MAX_POS = 16 * 2                   # max_position_embeddings * 2
TYPE_VOCAB = 1
INIT_RANGE = 0.02
LN_EPS = 1e-5
PADDING_IDX = 1                    # RoBERTa padding_idx

BATCH = 2
SEQ = 8

_SQRT_2_OVER_PI = math.sqrt(2.0 / math.pi)


# ----------------------------------------------------------------------------
# In-kernel helpers (all operate on VMEM values)
# ----------------------------------------------------------------------------
def _gelu_tanh(x):
    # TODO(synk): hidden_act assumed to be the tanh approximation (HF "gelu_new");
    # exact erf "gelu" (HF default) differs slightly.
    return 0.5 * x * (1.0 + jnp.tanh(
        _SQRT_2_OVER_PI * (x + 0.044715 * x * x * x)))


def _ln(x, g, b):
    # LayerNorm over the last (hidden) axis, f32 math.
    mu = jnp.mean(x, axis=-1, keepdims=True)
    xc = x - mu
    var = jnp.mean(xc * xc, axis=-1, keepdims=True)
    return xc * lax.rsqrt(var + LN_EPS) * g + b


def _dense(x, w_bf16, b, act=None):
    # MXU matmul: bf16 operands (weights pre-packed bf16), f32 accumulation;
    # bias add / GELU in f32.
    y = jnp.dot(x.astype(jnp.bfloat16), w_bf16,
                preferred_element_type=jnp.float32) + b
    if act == "gelu":
        y = _gelu_tanh(y)
    return y


# ----------------------------------------------------------------------------
# One fused kernel: emb-LN -> NUM_LAYERS encoder layers -> LM head
# (per grid step: one batch element; all weights resident in VMEM)
# ----------------------------------------------------------------------------
def _fused_forward_kernel(
    emb_ref,
    emb_ln_g_ref, emb_ln_b_ref,
    qkv_w_ref, qkv_b_ref,
    o_w_ref, o_b_ref,
    ln1_g_ref, ln1_b_ref,
    i_w_ref, i_b_ref,
    f_w_ref, f_b_ref,
    ln2_g_ref, ln2_b_ref,
    lm_dense_w_ref, lm_dense_b_ref,
    lm_ln_g_ref, lm_ln_b_ref,
    dec_w_ref, lm_bias_ref,
    logits_ref, hid_ref, attn_ref,
):
    # ---- embeddings layernorm ----------------------------------------------
    h = _ln(emb_ref[0].astype(jnp.float32), emb_ln_g_ref[...], emb_ln_b_ref[...])
    hid_ref[0, 0] = h

    # ---- encoder layers (statically unrolled) -------------------------------
    for layer in range(NUM_LAYERS):
        # fused Q|K|V projection (scale 1/sqrt(head_dim) pre-folded into Q)
        qkv = _dense(h, qkv_w_ref[layer], qkv_b_ref[layer])
        q = qkv[:, 0 * HIDDEN:1 * HIDDEN]
        k = qkv[:, 1 * HIDDEN:2 * HIDDEN]
        v = qkv[:, 2 * HIDDEN:3 * HIDDEN]

        # per-head attention (statically unrolled; everything stays in VMEM)
        # TODO(synk): attention_mask=None semantics only (no padding mask).
        ctx_parts = []
        for head in range(NUM_HEADS):
            lo = head * HEAD_DIM
            q_h = q[:, lo:lo + HEAD_DIM]
            k_h = k[:, lo:lo + HEAD_DIM]
            v_h = v[:, lo:lo + HEAD_DIM]
            s = lax.dot_general(q_h, k_h, (((1,), (1,)), ((), ())),
                                preferred_element_type=jnp.float32)
            s = s - jnp.max(s, axis=-1, keepdims=True)
            e = jnp.exp(s)
            p = e * pl.reciprocal(jnp.sum(e, axis=-1, keepdims=True), approx=True)
            attn_ref[layer, 0, head] = p
            ctx_parts.append(jnp.dot(p, v_h, preferred_element_type=jnp.float32))
        ctx = jnp.concatenate(ctx_parts, axis=1)

        # attention output projection + fused residual + LN1
        attn_out = _dense(ctx, o_w_ref[layer], o_b_ref[layer])
        h = _ln(attn_out + h, ln1_g_ref[layer], ln1_b_ref[layer])

        # FFN (GELU fused) + fused residual + LN2
        inter = _dense(h, i_w_ref[layer], i_b_ref[layer], act="gelu")
        ffn_out = _dense(inter, f_w_ref[layer], f_b_ref[layer])
        h = _ln(ffn_out + h, ln2_g_ref[layer], ln2_b_ref[layer])

        hid_ref[layer + 1, 0] = h

    # ---- LM head: dense -> gelu -> LN -> tied decoder (vocab padded to 128) --
    x = _dense(h, lm_dense_w_ref[...], lm_dense_b_ref[...], act="gelu")
    x = _ln(x, lm_ln_g_ref[...], lm_ln_b_ref[...])
    logits_ref[0] = _dense(x, dec_w_ref[...], lm_bias_ref[...])


def fused_forward(packed, emb):
    b, s, _ = emb.shape

    def w_spec(arr):
        nd = arr.ndim
        return pl.BlockSpec(arr.shape, lambda i, _nd=nd: (0,) * _nd)

    in_arrays = [
        emb,
        packed["emb_ln_g"], packed["emb_ln_b"],
        packed["qkv_w"], packed["qkv_b"],
        packed["o_w"], packed["o_b"],
        packed["ln1_g"], packed["ln1_b"],
        packed["i_w"], packed["i_b"],
        packed["f_w"], packed["f_b"],
        packed["ln2_g"], packed["ln2_b"],
        packed["lm_dense_w"], packed["lm_dense_b"],
        packed["lm_ln_g"], packed["lm_ln_b"],
        packed["dec_w_pad"], packed["lm_bias_pad"],
    ]
    in_specs = [pl.BlockSpec((1, s, HIDDEN), lambda i: (i, 0, 0))]
    in_specs += [w_spec(a) for a in in_arrays[1:]]

    out_shape = (
        jax.ShapeDtypeStruct((b, s, VOCAB_PAD), jnp.float32),
        jax.ShapeDtypeStruct((NUM_LAYERS + 1, b, s, HIDDEN), jnp.float32),
        jax.ShapeDtypeStruct((NUM_LAYERS, b, NUM_HEADS, s, s), jnp.float32),
    )
    out_specs = (
        pl.BlockSpec((1, s, VOCAB_PAD), lambda i: (i, 0, 0)),
        pl.BlockSpec((NUM_LAYERS + 1, 1, s, HIDDEN), lambda i: (0, i, 0, 0)),
        pl.BlockSpec((NUM_LAYERS, 1, NUM_HEADS, s, s), lambda i: (0, i, 0, 0, 0)),
    )

    return pl.pallas_call(
        _fused_forward_kernel,
        out_shape=out_shape,
        grid=(b,),
        in_specs=in_specs,
        out_specs=out_specs,
        compiler_params=pltpu.CompilerParams(
            dimension_semantics=("parallel",)),   # 2-way split across TCs on v7x
    )(*in_arrays)


# ----------------------------------------------------------------------------
# Parameter initialization (deterministic, mimics HF init: N(0, 0.02))
# ----------------------------------------------------------------------------
def init_params(key):
    keys = iter(jax.random.split(key, 64))

    def normal(shape):
        return (INIT_RANGE * jax.random.normal(next(keys), shape)).astype(jnp.float32)

    params = {
        "word_emb": normal((VOCAB_SIZE, HIDDEN)).at[PADDING_IDX].set(0.0),
        "pos_emb": normal((MAX_POS, HIDDEN)),
        "tok_emb": normal((TYPE_VOCAB, HIDDEN)),
        "emb_ln_g": jnp.ones((HIDDEN,), jnp.float32),
        "emb_ln_b": jnp.zeros((HIDDEN,), jnp.float32),
        "layers": [],
        "lm_dense_w": normal((HIDDEN, HIDDEN)),
        "lm_dense_b": jnp.zeros((HIDDEN,), jnp.float32),
        "lm_ln_g": jnp.ones((HIDDEN,), jnp.float32),
        "lm_ln_b": jnp.zeros((HIDDEN,), jnp.float32),
        "lm_bias": jnp.zeros((VOCAB_SIZE,), jnp.float32),
    }
    for _ in range(NUM_LAYERS):
        params["layers"].append({
            "q_w": normal((HIDDEN, HIDDEN)), "q_b": jnp.zeros((HIDDEN,), jnp.float32),
            "k_w": normal((HIDDEN, HIDDEN)), "k_b": jnp.zeros((HIDDEN,), jnp.float32),
            "v_w": normal((HIDDEN, HIDDEN)), "v_b": jnp.zeros((HIDDEN,), jnp.float32),
            "o_w": normal((HIDDEN, HIDDEN)), "o_b": jnp.zeros((HIDDEN,), jnp.float32),
            "ln1_g": jnp.ones((HIDDEN,), jnp.float32),
            "ln1_b": jnp.zeros((HIDDEN,), jnp.float32),
            "i_w": normal((HIDDEN, INTERMEDIATE)),
            "i_b": jnp.zeros((INTERMEDIATE,), jnp.float32),
            "f_w": normal((INTERMEDIATE, HIDDEN)),
            "f_b": jnp.zeros((HIDDEN,), jnp.float32),
            "ln2_g": jnp.ones((HIDDEN,), jnp.float32),
            "ln2_b": jnp.zeros((HIDDEN,), jnp.float32),
        })
    return params


def pack_params(params):
    """One-time packing: QKV fusion (scale folded into Q), layer stacking,
    bf16 dense weights, pre-transposed + lane-padded tied decoder weight."""
    scale = 1.0 / math.sqrt(HEAD_DIM)
    layers = params["layers"]

    def stack_b(name, width):
        return jnp.stack([l[name].reshape(1, width) for l in layers])

    def bf16(x):
        return x.astype(jnp.bfloat16)

    packed = {
        "word_emb": params["word_emb"],
        "pos_emb": params["pos_emb"],
        "tok_emb": params["tok_emb"],
        "emb_ln_g": params["emb_ln_g"].reshape(1, HIDDEN),
        "emb_ln_b": params["emb_ln_b"].reshape(1, HIDDEN),
        # dense matmul weights packed to bf16 once (MXU operands anyway)
        "qkv_w": bf16(jnp.stack([jnp.concatenate(
            [l["q_w"] * scale, l["k_w"], l["v_w"]], axis=1) for l in layers])),
        "qkv_b": jnp.stack([jnp.concatenate(
            [l["q_b"] * scale, l["k_b"], l["v_b"]]).reshape(1, 3 * HIDDEN)
            for l in layers]),
        "o_w": bf16(jnp.stack([l["o_w"] for l in layers])),
        "o_b": stack_b("o_b", HIDDEN),
        "ln1_g": stack_b("ln1_g", HIDDEN),
        "ln1_b": stack_b("ln1_b", HIDDEN),
        "i_w": bf16(jnp.stack([l["i_w"] for l in layers])),
        "i_b": stack_b("i_b", INTERMEDIATE),
        "f_w": bf16(jnp.stack([l["f_w"] for l in layers])),
        "f_b": stack_b("f_b", HIDDEN),
        "ln2_g": stack_b("ln2_g", HIDDEN),
        "ln2_b": stack_b("ln2_b", HIDDEN),
        "lm_dense_w": bf16(params["lm_dense_w"]),
        "lm_dense_b": params["lm_dense_b"].reshape(1, HIDDEN),
        "lm_ln_g": params["lm_ln_g"].reshape(1, HIDDEN),
        "lm_ln_b": params["lm_ln_b"].reshape(1, HIDDEN),
        # tied decoder weight: pre-transposed once, vocab padded 100 -> 128, bf16
        "dec_w_pad": bf16(jnp.zeros((HIDDEN, VOCAB_PAD), jnp.float32)
                          .at[:, :VOCAB_SIZE].set(params["word_emb"].T)),
        "lm_bias_pad": jnp.zeros((1, VOCAB_PAD), jnp.float32)
                          .at[0, :VOCAB_SIZE].set(params["lm_bias"]),
    }
    return packed


# ----------------------------------------------------------------------------
# Full forward pass (eval mode: dropout is identity)
# ----------------------------------------------------------------------------
def roberta_forward(packed, input_ids):
    b, s = input_ids.shape

    # --- RobertaEmbeddings (gathers stay in plain JAX) ------------------------
    mask = (input_ids != PADDING_IDX).astype(jnp.int32)
    position_ids = jnp.cumsum(mask, axis=1) * mask + PADDING_IDX
    token_type_ids = jnp.zeros_like(input_ids)

    emb = (jnp.take(packed["word_emb"], input_ids, axis=0)
           + jnp.take(packed["pos_emb"], position_ids, axis=0)
           + jnp.take(packed["tok_emb"], token_type_ids, axis=0))

    # --- fused Pallas kernel: LN + encoder + LM head --------------------------
    logits_pad, hid, attn = fused_forward(packed, emb)

    logits = logits_pad[:, :, :VOCAB_SIZE]
    hidden_states = tuple(hid[i] for i in range(NUM_LAYERS + 1))
    attentions = tuple(attn[i] for i in range(NUM_LAYERS))
    return logits, hidden_states, attentions


# ----------------------------------------------------------------------------
if __name__ == "__main__":
    key = jax.random.PRNGKey(0)
    pkey, dkey = jax.random.split(key)

    params = init_params(pkey)
    packed = pack_params(params)
    input_ids = jax.random.randint(dkey, (BATCH, SEQ), 3, VOCAB_SIZE, dtype=jnp.int32)

    fwd = jax.jit(roberta_forward)
    logits, hidden_states, attentions = fwd(packed, input_ids)
    jax.block_until_ready(logits)
    jax.block_until_ready(hidden_states)
    jax.block_until_ready(attentions)

    assert logits.shape == (BATCH, SEQ, VOCAB_SIZE)
    assert len(hidden_states) == NUM_LAYERS + 1
    assert hidden_states[0].shape == (BATCH, SEQ, HIDDEN)
    assert len(attentions) == NUM_LAYERS
    assert attentions[0].shape == (BATCH, NUM_HEADS, SEQ, SEQ)
    assert bool(jnp.all(jnp.isfinite(logits)))

    print("KERNEL_OK")
</pallas_src>

<mosaic_0001>
module attributes {stable_mosaic.version = 11 : i64} {
  func.func @_fused_forward_kernel(%arg0: i32, %arg1: memref<1x8x32xf32, #tpu.memory_space<vmem>>, %arg2: memref<1x32xf32, #tpu.memory_space<vmem>>, %arg3: memref<1x32xf32, #tpu.memory_space<vmem>>, %arg4: memref<2x32x96xbf16, #tpu.memory_space<vmem>>, %arg5: memref<2x1x96xf32, #tpu.memory_space<vmem>>, %arg6: memref<2x32x32xbf16, #tpu.memory_space<vmem>>, %arg7: memref<2x1x32xf32, #tpu.memory_space<vmem>>, %arg8: memref<2x1x32xf32, #tpu.memory_space<vmem>>, %arg9: memref<2x1x32xf32, #tpu.memory_space<vmem>>, %arg10: memref<2x32x64xbf16, #tpu.memory_space<vmem>>, %arg11: memref<2x1x64xf32, #tpu.memory_space<vmem>>, %arg12: memref<2x64x32xbf16, #tpu.memory_space<vmem>>, %arg13: memref<2x1x32xf32, #tpu.memory_space<vmem>>, %arg14: memref<2x1x32xf32, #tpu.memory_space<vmem>>, %arg15: memref<2x1x32xf32, #tpu.memory_space<vmem>>, %arg16: memref<32x32xbf16, #tpu.memory_space<vmem>>, %arg17: memref<1x32xf32, #tpu.memory_space<vmem>>, %arg18: memref<1x32xf32, #tpu.memory_space<vmem>>, %arg19: memref<1x32xf32, #tpu.memory_space<vmem>>, %arg20: memref<32x128xbf16, #tpu.memory_space<vmem>>, %arg21: memref<1x128xf32, #tpu.memory_space<vmem>>, %arg22: memref<1x8x128xf32, #tpu.memory_space<vmem>>, %arg23: memref<3x1x8x32xf32, #tpu.memory_space<vmem>>, %arg24: memref<2x1x4x8x8xf32, #tpu.memory_space<vmem>>) attributes {dimension_semantics = [#tpu.dimension_semantics<parallel>], iteration_bounds = array<i64: 2>, scalar_prefetch = 0 : i64, scratch_operands = 0 : i64, tpu.core_type = #tpu.core_type<tc>, window_params = [{transform_indices = @transform_0, window_bounds = array<i64: 1, 8, 32>}, {pipeline_mode = #tpu.pipeline_mode<synchronous>, transform_indices = @transform_1, window_bounds = array<i64: 1, 32>}, {pipeline_mode = #tpu.pipeline_mode<synchronous>, transform_indices = @transform_2, window_bounds = array<i64: 1, 32>}, {pipeline_mode = #tpu.pipeline_mode<synchronous>, transform_indices = @transform_3, window_bounds = array<i64: 2, 32, 96>}, {pipeline_mode = #tpu.pipeline_mode<synchronous>, transform_indices = @transform_4, window_bounds = array<i64: 2, 1, 96>}, {pipeline_mode = #tpu.pipeline_mode<synchronous>, transform_indices = @transform_5, window_bounds = array<i64: 2, 32, 32>}, {pipeline_mode = #tpu.pipeline_mode<synchronous>, transform_indices = @transform_6, window_bounds = array<i64: 2, 1, 32>}, {pipeline_mode = #tpu.pipeline_mode<synchronous>, transform_indices = @transform_7, window_bounds = array<i64: 2, 1, 32>}, {pipeline_mode = #tpu.pipeline_mode<synchronous>, transform_indices = @transform_8, window_bounds = array<i64: 2, 1, 32>}, {pipeline_mode = #tpu.pipeline_mode<synchronous>, transform_indices = @transform_9, window_bounds = array<i64: 2, 32, 64>}, {pipeline_mode = #tpu.pipeline_mode<synchronous>, transform_indices = @transform_10, window_bounds = array<i64: 2, 1, 64>}, {pipeline_mode = #tpu.pipeline_mode<synchronous>, transform_indices = @transform_11, window_bounds = array<i64: 2, 64, 32>}, {pipeline_mode = #tpu.pipeline_mode<synchronous>, transform_indices = @transform_12, window_bounds = array<i64: 2, 1, 32>}, {pipeline_mode = #tpu.pipeline_mode<synchronous>, transform_indices = @transform_13, window_bounds = array<i64: 2, 1, 32>}, {pipeline_mode = #tpu.pipeline_mode<synchronous>, transform_indices = @transform_14, window_bounds = array<i64: 2, 1, 32>}, {pipeline_mode = #tpu.pipeline_mode<synchronous>, transform_indices = @transform_15, window_bounds = array<i64: 32, 32>}, {pipeline_mode = #tpu.pipeline_mode<synchronous>, transform_indices = @transform_16, window_bounds = array<i64: 1, 32>}, {pipeline_mode = #tpu.pipeline_mode<synchronous>, transform_indices = @transform_17, window_bounds = array<i64: 1, 32>}, {pipeline_mode = #tpu.pipeline_mode<synchronous>, transform_indices = @transform_18, window_bounds = array<i64: 1, 32>}, {pipeline_mode = #tpu.pipeline_mode<synchronous>, transform_indices = @transform_19, window_bounds = array<i64: 32, 128>}, {pipeline_mode = #tpu.pipeline_mode<synchronous>, transform_indices = @transform_20, window_bounds = array<i64: 1, 128>}, {transform_indices = @transform_21, window_bounds = array<i64: 1, 8, 128>}, {transform_indices = @transform_22, window_bounds = array<i64: 3, 1, 8, 32>}, {transform_indices = @transform_23, window_bounds = array<i64: 2, 1, 4, 8, 8>}]} {
    %c0 = arith.constant 0 : index
    %c0_0 = arith.constant 0 : index
    %c0_1 = arith.constant 0 : index
    %0 = vector.load %arg1[%c0, %c0_0, %c0_1] : memref<1x8x32xf32, #tpu.memory_space<vmem>>, vector<1x8x32xf32>
    %1 = vector.shape_cast %0 : vector<1x8x32xf32> to vector<8x32xf32>
    %c0_2 = arith.constant 0 : index
    %c0_3 = arith.constant 0 : index
    %2 = vector.load %arg2[%c0_2, %c0_3] : memref<1x32xf32, #tpu.memory_space<vmem>>, vector<1x32xf32>
    %c0_4 = arith.constant 0 : index
    %c0_5 = arith.constant 0 : index
    %3 = vector.load %arg3[%c0_4, %c0_5] : memref<1x32xf32, #tpu.memory_space<vmem>>, vector<1x32xf32>
    %cst = arith.constant dense<0.000000e+00> : vector<8xf32>
    %4 = vector.multi_reduction <add>, %1, %cst [1] : vector<8x32xf32> to vector<8xf32>
    %5 = vector.shape_cast %4 : vector<8xf32> to vector<8x1xf32>
    %cst_6 = arith.constant 3.200000e+01 : f32
    %6 = vector.broadcast %cst_6 : f32 to vector<8x1xf32>
    %7 = arith.divf %5, %6 : vector<8x1xf32>
    %8 = vector.broadcast %7 : vector<8x1xf32> to vector<8x32xf32>
    %9 = arith.subf %1, %8 : vector<8x32xf32>
    %10 = arith.mulf %9, %9 : vector<8x32xf32>
    %cst_7 = arith.constant dense<0.000000e+00> : vector<8xf32>
    %11 = vector.multi_reduction <add>, %10, %cst_7 [1] : vector<8x32xf32> to vector<8xf32>
    %12 = vector.shape_cast %11 : vector<8xf32> to vector<8x1xf32>
    %cst_8 = arith.constant 3.200000e+01 : f32
    %13 = vector.broadcast %cst_8 : f32 to vector<8x1xf32>
    %14 = arith.divf %12, %13 : vector<8x1xf32>
    %cst_9 = arith.constant 9.99999974E-6 : f32
    %15 = vector.broadcast %cst_9 : f32 to vector<8x1xf32>
    %16 = arith.addf %14, %15 : vector<8x1xf32>
    %17 = math.rsqrt %16 : vector<8x1xf32>
    %18 = vector.broadcast %17 : vector<8x1xf32> to vector<8x32xf32>
    %19 = arith.mulf %9, %18 : vector<8x32xf32>
    %20 = vector.broadcast %2 : vector<1x32xf32> to vector<8x32xf32>
    %21 = arith.mulf %19, %20 : vector<8x32xf32>
    %22 = vector.broadcast %3 : vector<1x32xf32> to vector<8x32xf32>
    %23 = arith.addf %21, %22 : vector<8x32xf32>
    %c0_10 = arith.constant 0 : index
    %c0_11 = arith.constant 0 : index
    %c0_12 = arith.constant 0 : index
    %c0_13 = arith.constant 0 : index
    %24 = vector.load %arg23[%c0_10, %c0_11, %c0_12, %c0_13] : memref<3x1x8x32xf32, #tpu.memory_space<vmem>>, vector<1x1x8x32xf32>
    %25 = vector.shape_cast %24 : vector<1x1x8x32xf32> to vector<8x32xf32>
    %26 = vector.shape_cast %23 : vector<8x32xf32> to vector<1x1x8x32xf32>
    tpu.vector_store %arg23[%c0_10, %c0_11, %c0_12, %c0_13], %26 {strides = array<i32>} : memref<3x1x8x32xf32, #tpu.memory_space<vmem>>, vector<1x1x8x32xf32>,
    %c0_14 = arith.constant 0 : index
    %c0_15 = arith.constant 0 : index
    %c0_16 = arith.constant 0 : index
    %27 = vector.load %arg4[%c0_14, %c0_15, %c0_16] : memref<2x32x96xbf16, #tpu.memory_space<vmem>>, vector<1x32x96xbf16>
    %28 = vector.shape_cast %27 : vector<1x32x96xbf16> to vector<32x96xbf16>
    %c0_17 = arith.constant 0 : index
    %c0_18 = arith.constant 0 : index
    %c0_19 = arith.constant 0 : index
    %29 = vector.load %arg5[%c0_17, %c0_18, %c0_19] : memref<2x1x96xf32, #tpu.memory_space<vmem>>, vector<1x1x96xf32>
    %30 = vector.shape_cast %29 : vector<1x1x96xf32> to vector<1x96xf32>
    %31 = arith.truncf %23 : vector<8x32xf32> to vector<8x32xbf16>
    %cst_20 = arith.constant dense<0.000000e+00> : vector<8x96xf32>
    %32 = tpu.matmul %31, %28, %cst_20 {dimension_numbers = #tpu.dot_dimension_numbers<[1], [0], [0], [1], [0, 0, 1, 1], [], []>} : vector<8x32xbf16>, vector<32x96xbf16>, vector<8x96xf32> -> vector<8x96xf32>
    %33 = vector.broadcast %30 : vector<1x96xf32> to vector<8x96xf32>
    %34 = arith.addf %32, %33 : vector<8x96xf32>
    %35 = vector.extract_strided_slice %34 {offsets = [0, 0], sizes = [8, 32], strides = [1, 1]} : vector<8x96xf32> to vector<8x32xf32>
    %36 = vector.extract_strided_slice %34 {offsets = [0, 32], sizes = [8, 32], strides = [1, 1]} : vector<8x96xf32> to vector<8x32xf32>
    %37 = vector.extract_strided_slice %34 {offsets = [0, 64], sizes = [8, 32], strides = [1, 1]} : vector<8x96xf32> to vector<8x32xf32>
    %38 = vector.extract_strided_slice %35 {offsets = [0, 0], sizes = [8, 8], strides = [1, 1]} : vector<8x32xf32> to vector<8x8xf32>
    %39 = vector.extract_strided_slice %36 {offsets = [0, 0], sizes = [8, 8], strides = [1, 1]} : vector<8x32xf32> to vector<8x8xf32>
    %40 = vector.extract_strided_slice %37 {offsets = [0, 0], sizes = [8, 8], strides = [1, 1]} : vector<8x32xf32> to vector<8x8xf32>
    %cst_21 = arith.constant dense<0.000000e+00> : vector<8x8xf32>
    %41 = tpu.matmul %38, %39, %cst_21 {dimension_numbers = #tpu.dot_dimension_numbers<[1], [1], [0], [0], [0, 0, 1, 0], [], []>} : vector<8x8xf32>, vector<8x8xf32>, vector<8x8xf32> -> vector<8x8xf32>
    %cst_22 = arith.constant dense<0xFF800000> : vector<8xf32>
    %42 = vector.multi_reduction <maximumf>, %41, %cst_22 [1] : vector<8x8xf32> to vector<8xf32>
    %43 = vector.shape_cast %42 : vector<8xf32> to vector<8x1xf32>
    %44 = vector.broadcast %43 : vector<8x1xf32> to vector<8x8xf32>
    %45 = arith.subf %41, %44 : vector<8x8xf32>
    %46 = math.exp %45 : vector<8x8xf32>
    %cst_23 = arith.constant dense<0.000000e+00> : vector<8xf32>
    %47 = vector.multi_reduction <add>, %46, %cst_23 [1] : vector<8x8xf32> to vector<8xf32>
    %48 = vector.shape_cast %47 : vector<8xf32> to vector<8x1xf32>
    %49 = tpu.reciprocal %48 {approx = true} : vector<8x1xf32> -> vector<8x1xf32>
    %50 = vector.broadcast %49 : vector<8x1xf32> to vector<8x8xf32>
    %51 = arith.mulf %46, %50 : vector<8x8xf32>
    %c0_24 = arith.constant 0 : index
    %c0_25 = arith.constant 0 : index
    %c0_26 = arith.constant 0 : index
    %c0_27 = arith.constant 0 : index
    %c0_28 = arith.constant 0 : index
    %52 = vector.load %arg24[%c0_24, %c0_25, %c0_26, %c0_27, %c0_28] : memref<2x1x4x8x8xf32, #tpu.memory_space<vmem>>, vector<1x1x1x8x8xf32>
    %53 = vector.shape_cast %52 : vector<1x1x1x8x8xf32> to vector<8x8xf32>
    %54 = vector.shape_cast %51 : vector<8x8xf32> to vector<1x1x1x8x8xf32>
    tpu.vector_store %arg24[%c0_24, %c0_25, %c0_26, %c0_27, %c0_28], %54 {strides = array<i32>} : memref<2x1x4x8x8xf32, #tpu.memory_space<vmem>>, vector<1x1x1x8x8xf32>,
    %cst_29 = arith.constant dense<0.000000e+00> : vector<8x8xf32>
    %55 = tpu.matmul %51, %40, %cst_29 {dimension_numbers = #tpu.dot_dimension_numbers<[1], [0], [0], [1], [0, 0, 1, 1], [], []>} : vector<8x8xf32>, vector<8x8xf32>, vector<8x8xf32> -> vector<8x8xf32>
    %56 = vector.extract_strided_slice %35 {offsets = [0, 8], sizes = [8, 8], strides = [1, 1]} : vector<8x32xf32> to vector<8x8xf32>
    %57 = vector.extract_strided_slice %36 {offsets = [0, 8], sizes = [8, 8], strides = [1, 1]} : vector<8x32xf32> to vector<8x8xf32>
    %58 = vector.extract_strided_slice %37 {offsets = [0, 8], sizes = [8, 8], strides = [1, 1]} : vector<8x32xf32> to vector<8x8xf32>
    %cst_30 = arith.constant dense<0.000000e+00> : vector<8x8xf32>
    %59 = tpu.matmul %56, %57, %cst_30 {dimension_numbers = #tpu.dot_dimension_numbers<[1], [1], [0], [0], [0, 0, 1, 0], [], []>} : vector<8x8xf32>, vector<8x8xf32>, vector<8x8xf32> -> vector<8x8xf32>
    %cst_31 = arith.constant dense<0xFF800000> : vector<8xf32>
    %60 = vector.multi_reduction <maximumf>, %59, %cst_31 [1] : vector<8x8xf32> to vector<8xf32>
    %61 = vector.shape_cast %60 : vector<8xf32> to vector<8x1xf32>
    %62 = vector.broadcast %61 : vector<8x1xf32> to vector<8x8xf32>
    %63 = arith.subf %59, %62 : vector<8x8xf32>
    %64 = math.exp %63 : vector<8x8xf32>
    %cst_32 = arith.constant dense<0.000000e+00> : vector<8xf32>
    %65 = vector.multi_reduction <add>, %64, %cst_32 [1] : vector<8x8xf32> to vector<8xf32>
    %66 = vector.shape_cast %65 : vector<8xf32> to vector<8x1xf32>
    %67 = tpu.reciprocal %66 {approx = true} : vector<8x1xf32> -> vector<8x1xf32>
    %68 = vector.broadcast %67 : vector<8x1xf32> to vector<8x8xf32>
    %69 = arith.mulf %64, %68 : vector<8x8xf32>
    %c0_33 = arith.constant 0 : index
    %c0_34 = arith.constant 0 : index
    %c1 = arith.constant 1 : index
    %c0_35 = arith.constant 0 : index
    %c0_36 = arith.constant 0 : index
    %70 = vector.load %arg24[%c0_33, %c0_34, %c1, %c0_35, %c0_36] : memref<2x1x4x8x8xf32, #tpu.memory_space<vmem>>, vector<1x1x1x8x8xf32>
    %71 = vector.shape_cast %70 : vector<1x1x1x8x8xf32> to vector<8x8xf32>
    %72 = vector.shape_cast %69 : vector<8x8xf32> to vector<1x1x1x8x8xf32>
    tpu.vector_store %arg24[%c0_33, %c0_34, %c1, %c0_35, %c0_36], %72 {strides = array<i32>} : memref<2x1x4x8x8xf32, #tpu.memory_space<vmem>>, vector<1x1x1x8x8xf32>,
    %cst_37 = arith.constant dense<0.000000e+00> : vector<8x8xf32>
    %73 = tpu.matmul %69, %58, %cst_37 {dimension_numbers = #tpu.dot_dimension_numbers<[1], [0], [0], [1], [0, 0, 1, 1], [], []>} : vector<8x8xf32>, vector<8x8xf32>, vector<8x8xf32> -> vector<8x8xf32>
    %74 = vector.extract_strided_slice %35 {offsets = [0, 16], sizes = [8, 8], strides = [1, 1]} : vector<8x32xf32> to vector<8x8xf32>
    %75 = vector.extract_strided_slice %36 {offsets = [0, 16], sizes = [8, 8], strides = [1, 1]} : vector<8x32xf32> to vector<8x8xf32>
    %76 = vector.extract_strided_slice %37 {offsets = [0, 16], sizes = [8, 8], strides = [1, 1]} : vector<8x32xf32> to vector<8x8xf32>
    %cst_38 = arith.constant dense<0.000000e+00> : vector<8x8xf32>
    %77 = tpu.matmul %74, %75, %cst_38 {dimension_numbers = #tpu.dot_dimension_numbers<[1], [1], [0], [0], [0, 0, 1, 0], [], []>} : vector<8x8xf32>, vector<8x8xf32>, vector<8x8xf32> -> vector<8x8xf32>
    %cst_39 = arith.constant dense<0xFF800000> : vector<8xf32>
    %78 = vector.multi_reduction <maximumf>, %77, %cst_39 [1] : vector<8x8xf32> to vector<8xf32>
    %79 = vector.shape_cast %78 : vector<8xf32> to vector<8x1xf32>
    %80 = vector.broadcast %79 : vector<8x1xf32> to vector<8x8xf32>
    %81 = arith.subf %77, %80 : vector<8x8xf32>
    %82 = math.exp %81 : vector<8x8xf32>
    %cst_40 = arith.constant dense<0.000000e+00> : vector<8xf32>
    %83 = vector.multi_reduction <add>, %82, %cst_40 [1] : vector<8x8xf32> to vector<8xf32>
    %84 = vector.shape_cast %83 : vector<8xf32> to vector<8x1xf32>
    %85 = tpu.reciprocal %84 {approx = true} : vector<8x1xf32> -> vector<8x1xf32>
    %86 = vector.broadcast %85 : vector<8x1xf32> to vector<8x8xf32>
    %87 = arith.mulf %82, %86 : vector<8x8xf32>
    %c0_41 = arith.constant 0 : index
    %c0_42 = arith.constant 0 : index
    %c2 = arith.constant 2 : index
    %c0_43 = arith.constant 0 : index
    %c0_44 = arith.constant 0 : index
    %88 = vector.load %arg24[%c0_41, %c0_42, %c2, %c0_43, %c0_44] : memref<2x1x4x8x8xf32, #tpu.memory_space<vmem>>, vector<1x1x1x8x8xf32>
    %89 = vector.shape_cast %88 : vector<1x1x1x8x8xf32> to vector<8x8xf32>
    %90 = vector.shape_cast %87 : vector<8x8xf32> to vector<1x1x1x8x8xf32>
    tpu.vector_store %arg24[%c0_41, %c0_42, %c2, %c0_43, %c0_44], %90 {strides = array<i32>} : memref<2x1x4x8x8xf32, #tpu.memory_space<vmem>>, vector<1x1x1x8x8xf32>,
    %cst_45 = arith.constant dense<0.000000e+00> : vector<8x8xf32>
    %91 = tpu.matmul %87, %76, %cst_45 {dimension_numbers = #tpu.dot_dimension_numbers<[1], [0], [0], [1], [0, 0, 1, 1], [], []>} : vector<8x8xf32>, vector<8x8xf32>, vector<8x8xf32> -> vector<8x8xf32>
    %92 = vector.extract_strided_slice %35 {offsets = [0, 24], sizes = [8, 8], strides = [1, 1]} : vector<8x32xf32> to vector<8x8xf32>
    %93 = vector.extract_strided_slice %36 {offsets = [0, 24], sizes = [8, 8], strides = [1, 1]} : vector<8x32xf32> to vector<8x8xf32>
    %94 = vector.extract_strided_slice %37 {offsets = [0, 24], sizes = [8, 8], strides = [1, 1]} : vector<8x32xf32> to vector<8x8xf32>
    %cst_46 = arith.constant dense<0.000000e+00> : vector<8x8xf32>
    %95 = tpu.matmul %92, %93, %cst_46 {dimension_numbers = #tpu.dot_dimension_numbers<[1], [1], [0], [0], [0, 0, 1, 0], [], []>} : vector<8x8xf32>, vector<8x8xf32>, vector<8x8xf32> -> vector<8x8xf32>
    %cst_47 = arith.constant dense<0xFF800000> : vector<8xf32>
    %96 = vector.multi_reduction <maximumf>, %95, %cst_47 [1] : vector<8x8xf32> to vector<8xf32>
    %97 = vector.shape_cast %96 : vector<8xf32> to vector<8x1xf32>
    %98 = vector.broadcast %97 : vector<8x1xf32> to vector<8x8xf32>
    %99 = arith.subf %95, %98 : vector<8x8xf32>
    %100 = math.exp %99 : vector<8x8xf32>
    %cst_48 = arith.constant dense<0.000000e+00> : vector<8xf32>
    %101 = vector.multi_reduction <add>, %100, %cst_48 [1] : vector<8x8xf32> to vector<8xf32>
    %102 = vector.shape_cast %101 : vector<8xf32> to vector<8x1xf32>
    %103 = tpu.reciprocal %102 {approx = true} : vector<8x1xf32> -> vector<8x1xf32>
    %104 = vector.broadcast %103 : vector<8x1xf32> to vector<8x8xf32>
    %105 = arith.mulf %100, %104 : vector<8x8xf32>
    %c0_49 = arith.constant 0 : index
    %c0_50 = arith.constant 0 : index
    %c3 = arith.constant 3 : index
    %c0_51 = arith.constant 0 : index
    %c0_52 = arith.constant 0 : index
    %106 = vector.load %arg24[%c0_49, %c0_50, %c3, %c0_51, %c0_52] : memref<2x1x4x8x8xf32, #tpu.memory_space<vmem>>, vector<1x1x1x8x8xf32>
    %107 = vector.shape_cast %106 : vector<1x1x1x8x8xf32> to vector<8x8xf32>
    %108 = vector.shape_cast %105 : vector<8x8xf32> to vector<1x1x1x8x8xf32>
    tpu.vector_store %arg24[%c0_49, %c0_50, %c3, %c0_51, %c0_52], %108 {strides = array<i32>} : memref<2x1x4x8x8xf32, #tpu.memory_space<vmem>>, vector<1x1x1x8x8xf32>,
    %cst_53 = arith.constant dense<0.000000e+00> : vector<8x8xf32>
    %109 = tpu.matmul %105, %94, %cst_53 {dimension_numbers = #tpu.dot_dimension_numbers<[1], [0], [0], [1], [0, 0, 1, 1], [], []>} : vector<8x8xf32>, vector<8x8xf32>, vector<8x8xf32> -> vector<8x8xf32>
    %110 = tpu.concatenate %55, %73, %91, %109 in 1 : vector<8x8xf32>, vector<8x8xf32>, vector<8x8xf32>, vector<8x8xf32> -> vector<8x32xf32>
    %c0_54 = arith.constant 0 : index
    %c0_55 = arith.constant 0 : index
    %c0_56 = arith.constant 0 : index
    %111 = vector.load %arg6[%c0_54, %c0_55, %c0_56] : memref<2x32x32xbf16, #tpu.memory_space<vmem>>, vector<1x32x32xbf16>
    %112 = vector.shape_cast %111 : vector<1x32x32xbf16> to vector<32x32xbf16>
    %c0_57 = arith.constant 0 : index
    %c0_58 = arith.constant 0 : index
    %c0_59 = arith.constant 0 : index
    %113 = vector.load %arg7[%c0_57, %c0_58, %c0_59] : memref<2x1x32xf32, #tpu.memory_space<vmem>>, vector<1x1x32xf32>
    %114 = vector.shape_cast %113 : vector<1x1x32xf32> to vector<1x32xf32>
    %115 = arith.truncf %110 : vector<8x32xf32> to vector<8x32xbf16>
    %cst_60 = arith.constant dense<0.000000e+00> : vector<8x32xf32>
    %116 = tpu.matmul %115, %112, %cst_60 {dimension_numbers = #tpu.dot_dimension_numbers<[1], [0], [0], [1], [0, 0, 1, 1], [], []>} : vector<8x32xbf16>, vector<32x32xbf16>, vector<8x32xf32> -> vector<8x32xf32>
    %117 = vector.broadcast %114 : vector<1x32xf32> to vector<8x32xf32>
    %118 = arith.addf %116, %117 : vector<8x32xf32>
    %119 = arith.addf %118, %23 : vector<8x32xf32>
    %c0_61 = arith.constant 0 : index
    %c0_62 = arith.constant 0 : index
    %c0_63 = arith.constant 0 : index
    %120 = vector.load %arg8[%c0_61, %c0_62, %c0_63] : memref<2x1x32xf32, #tpu.memory_space<vmem>>, vector<1x1x32xf32>
    %121 = vector.shape_cast %120 : vector<1x1x32xf32> to vector<1x32xf32>
    %c0_64 = arith.constant 0 : index
    %c0_65 = arith.constant 0 : index
    %c0_66 = arith.constant 0 : index
    %122 = vector.load %arg9[%c0_64, %c0_65, %c0_66] : memref<2x1x32xf32, #tpu.memory_space<vmem>>, vector<1x1x32xf32>
    %123 = vector.shape_cast %122 : vector<1x1x32xf32> to vector<1x32xf32>
    %cst_67 = arith.constant dense<0.000000e+00> : vector<8xf32>
    %124 = vector.multi_reduction <add>, %119, %cst_67 [1] : vector<8x32xf32> to vector<8xf32>
    %125 = vector.shape_cast %124 : vector<8xf32> to vector<8x1xf32>
    %cst_68 = arith.constant 3.200000e+01 : f32
    %126 = vector.broadcast %cst_68 : f32 to vector<8x1xf32>
    %127 = arith.divf %125, %126 : vector<8x1xf32>
    %128 = vector.broadcast %127 : vector<8x1xf32> to vector<8x32xf32>
    %129 = arith.subf %119, %128 : vector<8x32xf32>
    %130 = arith.mulf %129, %129 : vector<8x32xf32>
    %cst_69 = arith.constant dense<0.000000e+00> : vector<8xf32>
    %131 = vector.multi_reduction <add>, %130, %cst_69 [1] : vector<8x32xf32> to vector<8xf32>
    %132 = vector.shape_cast %131 : vector<8xf32> to vector<8x1xf32>
    %cst_70 = arith.constant 3.200000e+01 : f32
    %133 = vector.broadcast %cst_70 : f32 to vector<8x1xf32>
    %134 = arith.divf %132, %133 : vector<8x1xf32>
    %cst_71 = arith.constant 9.99999974E-6 : f32
    %135 = vector.broadcast %cst_71 : f32 to vector<8x1xf32>
    %136 = arith.addf %134, %135 : vector<8x1xf32>
    %137 = math.rsqrt %136 : vector<8x1xf32>
    %138 = vector.broadcast %137 : vector<8x1xf32> to vector<8x32xf32>
    %139 = arith.mulf %129, %138 : vector<8x32xf32>
    %140 = vector.broadcast %121 : vector<1x32xf32> to vector<8x32xf32>
    %141 = arith.mulf %139, %140 : vector<8x32xf32>
    %142 = vector.broadcast %123 : vector<1x32xf32> to vector<8x32xf32>
    %143 = arith.addf %141, %142 : vector<8x32xf32>
    %c0_72 = arith.constant 0 : index
    %c0_73 = arith.constant 0 : index
    %c0_74 = arith.constant 0 : index
    %144 = vector.load %arg10[%c0_72, %c0_73, %c0_74] : memref<2x32x64xbf16, #tpu.memory_space<vmem>>, vector<1x32x64xbf16>
    %145 = vector.shape_cast %144 : vector<1x32x64xbf16> to vector<32x64xbf16>
    %c0_75 = arith.constant 0 : index
    %c0_76 = arith.constant 0 : index
    %c0_77 = arith.constant 0 : index
    %146 = vector.load %arg11[%c0_75, %c0_76, %c0_77] : memref<2x1x64xf32, #tpu.memory_space<vmem>>, vector<1x1x64xf32>
    %147 = vector.shape_cast %146 : vector<1x1x64xf32> to vector<1x64xf32>
    %148 = arith.truncf %143 : vector<8x32xf32> to vector<8x32xbf16>
    %cst_78 = arith.constant dense<0.000000e+00> : vector<8x64xf32>
    %149 = tpu.matmul %148, %145, %cst_78 {dimension_numbers = #tpu.dot_dimension_numbers<[1], [0], [0], [1], [0, 0, 1, 1], [], []>} : vector<8x32xbf16>, vector<32x64xbf16>, vector<8x64xf32> -> vector<8x64xf32>
    %150 = vector.broadcast %147 : vector<1x64xf32> to vector<8x64xf32>
    %151 = arith.addf %149, %150 : vector<8x64xf32>
    %cst_79 = arith.constant 5.000000e-01 : f32
    %152 = vector.broadcast %cst_79 : f32 to vector<8x64xf32>
    %153 = arith.mulf %152, %151 : vector<8x64xf32>
    %cst_80 = arith.constant 4.471500e-02 : f32
    %154 = vector.broadcast %cst_80 : f32 to vector<8x64xf32>
    %155 = arith.mulf %154, %151 : vector<8x64xf32>
    %156 = arith.mulf %155, %151 : vector<8x64xf32>
    %157 = arith.mulf %156, %151 : vector<8x64xf32>
    %158 = arith.addf %151, %157 : vector<8x64xf32>
    %cst_81 = arith.constant 0.797884583 : f32
    %159 = vector.broadcast %cst_81 : f32 to vector<8x64xf32>
    %160 = arith.mulf %159, %158 : vector<8x64xf32>
    %161 = math.tanh %160 : vector<8x64xf32>
    %cst_82 = arith.constant 1.000000e+00 : f32
    %162 = vector.broadcast %cst_82 : f32 to vector<8x64xf32>
    %163 = arith.addf %162, %161 : vector<8x64xf32>
    %164 = arith.mulf %153, %163 : vector<8x64xf32>
    %c0_83 = arith.constant 0 : index
    %c0_84 = arith.constant 0 : index
    %c0_85 = arith.constant 0 : index
    %165 = vector.load %arg12[%c0_83, %c0_84, %c0_85] : memref<2x64x32xbf16, #tpu.memory_space<vmem>>, vector<1x64x32xbf16>
    %166 = vector.shape_cast %165 : vector<1x64x32xbf16> to vector<64x32xbf16>
    %c0_86 = arith.constant 0 : index
    %c0_87 = arith.constant 0 : index
    %c0_88 = arith.constant 0 : index
    %167 = vector.load %arg13[%c0_86, %c0_87, %c0_88] : memref<2x1x32xf32, #tpu.memory_space<vmem>>, vector<1x1x32xf32>
    %168 = vector.shape_cast %167 : vector<1x1x32xf32> to vector<1x32xf32>
    %169 = arith.truncf %164 : vector<8x64xf32> to vector<8x64xbf16>
    %cst_89 = arith.constant dense<0.000000e+00> : vector<8x32xf32>
    %170 = tpu.matmul %169, %166, %cst_89 {dimension_numbers = #tpu.dot_dimension_numbers<[1], [0], [0], [1], [0, 0, 1, 1], [], []>} : vector<8x64xbf16>, vector<64x32xbf16>, vector<8x32xf32> -> vector<8x32xf32>
    %171 = vector.broadcast %168 : vector<1x32xf32> to vector<8x32xf32>
    %172 = arith.addf %170, %171 : vector<8x32xf32>
    %173 = arith.addf %172, %143 : vector<8x32xf32>
    %c0_90 = arith.constant 0 : index
    %c0_91 = arith.constant 0 : index
    %c0_92 = arith.constant 0 : index
    %174 = vector.load %arg14[%c0_90, %c0_91, %c0_92] : memref<2x1x32xf32, #tpu.memory_space<vmem>>, vector<1x1x32xf32>
    %175 = vector.shape_cast %174 : vector<1x1x32xf32> to vector<1x32xf32>
    %c0_93 = arith.constant 0 : index
    %c0_94 = arith.constant 0 : index
    %c0_95 = arith.constant 0 : index
    %176 = vector.load %arg15[%c0_93, %c0_94, %c0_95] : memref<2x1x32xf32, #tpu.memory_space<vmem>>, vector<1x1x32xf32>
    %177 = vector.shape_cast %176 : vector<1x1x32xf32> to vector<1x32xf32>
    %cst_96 = arith.constant dense<0.000000e+00> : vector<8xf32>
    %178 = vector.multi_reduction <add>, %173, %cst_96 [1] : vector<8x32xf32> to vector<8xf32>
    %179 = vector.shape_cast %178 : vector<8xf32> to vector<8x1xf32>
    %cst_97 = arith.constant 3.200000e+01 : f32
    %180 = vector.broadcast %cst_97 : f32 to vector<8x1xf32>
    %181 = arith.divf %179, %180 : vector<8x1xf32>
    %182 = vector.broadcast %181 : vector<8x1xf32> to vector<8x32xf32>
    %183 = arith.subf %173, %182 : vector<8x32xf32>
    %184 = arith.mulf %183, %183 : vector<8x32xf32>
    %cst_98 = arith.constant dense<0.000000e+00> : vector<8xf32>
    %185 = vector.multi_reduction <add>, %184, %cst_98 [1] : vector<8x32xf32> to vector<8xf32>
    %186 = vector.shape_cast %185 : vector<8xf32> to vector<8x1xf32>
    %cst_99 = arith.constant 3.200000e+01 : f32
    %187 = vector.broadcast %cst_99 : f32 to vector<8x1xf32>
    %188 = arith.divf %186, %187 : vector<8x1xf32>
    %cst_100 = arith.constant 9.99999974E-6 : f32
    %189 = vector.broadcast %cst_100 : f32 to vector<8x1xf32>
    %190 = arith.addf %188, %189 : vector<8x1xf32>
    %191 = math.rsqrt %190 : vector<8x1xf32>
    %192 = vector.broadcast %191 : vector<8x1xf32> to vector<8x32xf32>
    %193 = arith.mulf %183, %192 : vector<8x32xf32>
    %194 = vector.broadcast %175 : vector<1x32xf32> to vector<8x32xf32>
    %195 = arith.mulf %193, %194 : vector<8x32xf32>
    %196 = vector.broadcast %177 : vector<1x32xf32> to vector<8x32xf32>
    %197 = arith.addf %195, %196 : vector<8x32xf32>
    %c1_101 = arith.constant 1 : index
    %c0_102 = arith.constant 0 : index
    %c0_103 = arith.constant 0 : index
    %c0_104 = arith.constant 0 : index
    %198 = vector.load %arg23[%c1_101, %c0_102, %c0_103, %c0_104] : memref<3x1x8x32xf32, #tpu.memory_space<vmem>>, vector<1x1x8x32xf32>
    %199 = vector.shape_cast %198 : vector<1x1x8x32xf32> to vector<8x32xf32>
    %200 = vector.shape_cast %197 : vector<8x32xf32> to vector<1x1x8x32xf32>
    tpu.vector_store %arg23[%c1_101, %c0_102, %c0_103, %c0_104], %200 {strides = array<i32>} : memref<3x1x8x32xf32, #tpu.memory_space<vmem>>, vector<1x1x8x32xf32>,
    %c1_105 = arith.constant 1 : index
    %c0_106 = arith.constant 0 : index
    %c0_107 = arith.constant 0 : index
    %201 = vector.load %arg4[%c1_105, %c0_106, %c0_107] : memref<2x32x96xbf16, #tpu.memory_space<vmem>>, vector<1x32x96xbf16>
    %202 = vector.shape_cast %201 : vector<1x32x96xbf16> to vector<32x96xbf16>
    %c1_108 = arith.constant 1 : index
    %c0_109 = arith.constant 0 : index
    %c0_110 = arith.constant 0 : index
    %203 = vector.load %arg5[%c1_108, %c0_109, %c0_110] : memref<2x1x96xf32, #tpu.memory_space<vmem>>, vector<1x1x96xf32>
    %204 = vector.shape_cast %203 : vector<1x1x96xf32> to vector<1x96xf32>
    %205 = arith.truncf %197 : vector<8x32xf32> to vector<8x32xbf16>
    %cst_111 = arith.constant dense<0.000000e+00> : vector<8x96xf32>
    %206 = tpu.matmul %205, %202, %cst_111 {dimension_numbers = #tpu.dot_dimension_numbers<[1], [0], [0], [1], [0, 0, 1, 1], [], []>} : vector<8x32xbf16>, vector<32x96xbf16>, vector<8x96xf32> -> vector<8x96xf32>
    %207 = vector.broadcast %204 : vector<1x96xf32> to vector<8x96xf32>
    %208 = arith.addf %206, %207 : vector<8x96xf32>
    %209 = vector.extract_strided_slice %208 {offsets = [0, 0], sizes = [8, 32], strides = [1, 1]} : vector<8x96xf32> to vector<8x32xf32>
    %210 = vector.extract_strided_slice %208 {offsets = [0, 32], sizes = [8, 32], strides = [1, 1]} : vector<8x96xf32> to vector<8x32xf32>
    %211 = vector.extract_strided_slice %208 {offsets = [0, 64], sizes = [8, 32], strides = [1, 1]} : vector<8x96xf32> to vector<8x32xf32>
    %212 = vector.extract_strided_slice %209 {offsets = [0, 0], sizes = [8, 8], strides = [1, 1]} : vector<8x32xf32> to vector<8x8xf32>
    %213 = vector.extract_strided_slice %210 {offsets = [0, 0], sizes = [8, 8], strides = [1, 1]} : vector<8x32xf32> to vector<8x8xf32>
    %214 = vector.extract_strided_slice %211 {offsets = [0, 0], sizes = [8, 8], strides = [1, 1]} : vector<8x32xf32> to vector<8x8xf32>
    %cst_112 = arith.constant dense<0.000000e+00> : vector<8x8xf32>
    %215 = tpu.matmul %212, %213, %cst_112 {dimension_numbers = #tpu.dot_dimension_numbers<[1], [1], [0], [0], [0, 0, 1, 0], [], []>} : vector<8x8xf32>, vector<8x8xf32>, vector<8x8xf32> -> vector<8x8xf32>
    %cst_113 = arith.constant dense<0xFF800000> : vector<8xf32>
    %216 = vector.multi_reduction <maximumf>, %215, %cst_113 [1] : vector<8x8xf32> to vector<8xf32>
    %217 = vector.shape_cast %216 : vector<8xf32> to vector<8x1xf32>
    %218 = vector.broadcast %217 : vector<8x1xf32> to vector<8x8xf32>
    %219 = arith.subf %215, %218 : vector<8x8xf32>
    %220 = math.exp %219 : vector<8x8xf32>
    %cst_114 = arith.constant dense<0.000000e+00> : vector<8xf32>
    %221 = vector.multi_reduction <add>, %220, %cst_114 [1] : vector<8x8xf32> to vector<8xf32>
    %222 = vector.shape_cast %221 : vector<8xf32> to vector<8x1xf32>
    %223 = tpu.reciprocal %222 {approx = true} : vector<8x1xf32> -> vector<8x1xf32>
    %224 = vector.broadcast %223 : vector<8x1xf32> to vector<8x8xf32>
    %225 = arith.mulf %220, %224 : vector<8x8xf32>
    %c1_115 = arith.constant 1 : index
    %c0_116 = arith.constant 0 : index
    %c0_117 = arith.constant 0 : index
    %c0_118 = arith.constant 0 : index
    %c0_119 = arith.constant 0 : index
    %226 = vector.load %arg24[%c1_115, %c0_116, %c0_117, %c0_118, %c0_119] : memref<2x1x4x8x8xf32, #tpu.memory_space<vmem>>, vector<1x1x1x8x8xf32>
    %227 = vector.shape_cast %226 : vector<1x1x1x8x8xf32> to vector<8x8xf32>
    %228 = vector.shape_cast %225 : vector<8x8xf32> to vector<1x1x1x8x8xf32>
    tpu.vector_store %arg24[%c1_115, %c0_116, %c0_117, %c0_118, %c0_119], %228 {strides = array<i32>} : memref<2x1x4x8x8xf32, #tpu.memory_space<vmem>>, vector<1x1x1x8x8xf32>,
    %cst_120 = arith.constant dense<0.000000e+00> : vector<8x8xf32>
    %229 = tpu.matmul %225, %214, %cst_120 {dimension_numbers = #tpu.dot_dimension_numbers<[1], [0], [0], [1], [0, 0, 1, 1], [], []>} : vector<8x8xf32>, vector<8x8xf32>, vector<8x8xf32> -> vector<8x8xf32>
    %230 = vector.extract_strided_slice %209 {offsets = [0, 8], sizes = [8, 8], strides = [1, 1]} : vector<8x32xf32> to vector<8x8xf32>
    %231 = vector.extract_strided_slice %210 {offsets = [0, 8], sizes = [8, 8], strides = [1, 1]} : vector<8x32xf32> to vector<8x8xf32>
    %232 = vector.extract_strided_slice %211 {offsets = [0, 8], sizes = [8, 8], strides = [1, 1]} : vector<8x32xf32> to vector<8x8xf32>
    %cst_121 = arith.constant dense<0.000000e+00> : vector<8x8xf32>
    %233 = tpu.matmul %230, %231, %cst_121 {dimension_numbers = #tpu.dot_dimension_numbers<[1], [1], [0], [0], [0, 0, 1, 0], [], []>} : vector<8x8xf32>, vector<8x8xf32>, vector<8x8xf32> -> vector<8x8xf32>
    %cst_122 = arith.constant dense<0xFF800000> : vector<8xf32>
    %234 = vector.multi_reduction <maximumf>, %233, %cst_122 [1] : vector<8x8xf32> to vector<8xf32>
    %235 = vector.shape_cast %234 : vector<8xf32> to vector<8x1xf32>
    %236 = vector.broadcast %235 : vector<8x1xf32> to vector<8x8xf32>
    %237 = arith.subf %233, %236 : vector<8x8xf32>
    %238 = math.exp %237 : vector<8x8xf32>
    %cst_123 = arith.constant dense<0.000000e+00> : vector<8xf32>
    %239 = vector.multi_reduction <add>, %238, %cst_123 [1] : vector<8x8xf32> to vector<8xf32>
    %240 = vector.shape_cast %239 : vector<8xf32> to vector<8x1xf32>
    %241 = tpu.reciprocal %240 {approx = true} : vector<8x1xf32> -> vector<8x1xf32>
    %242 = vector.broadcast %241 : vector<8x1xf32> to vector<8x8xf32>
    %243 = arith.mulf %238, %242 : vector<8x8xf32>
    %c1_124 = arith.constant 1 : index
    %c0_125 = arith.constant 0 : index
    %c1_126 = arith.constant 1 : index
    %c0_127 = arith.constant 0 : index
    %c0_128 = arith.constant 0 : index
    %244 = vector.load %arg24[%c1_124, %c0_125, %c1_126, %c0_127, %c0_128] : memref<2x1x4x8x8xf32, #tpu.memory_space<vmem>>, vector<1x1x1x8x8xf32>
    %245 = vector.shape_cast %244 : vector<1x1x1x8x8xf32> to vector<8x8xf32>
    %246 = vector.shape_cast %243 : vector<8x8xf32> to vector<1x1x1x8x8xf32>
    tpu.vector_store %arg24[%c1_124, %c0_125, %c1_126, %c0_127, %c0_128], %246 {strides = array<i32>} : memref<2x1x4x8x8xf32, #tpu.memory_space<vmem>>, vector<1x1x1x8x8xf32>,
    %cst_129 = arith.constant dense<0.000000e+00> : vector<8x8xf32>
    %247 = tpu.matmul %243, %232, %cst_129 {dimension_numbers = #tpu.dot_dimension_numbers<[1], [0], [0], [1], [0, 0, 1, 1], [], []>} : vector<8x8xf32>, vector<8x8xf32>, vector<8x8xf32> -> vector<8x8xf32>
    %248 = vector.extract_strided_slice %209 {offsets = [0, 16], sizes = [8, 8], strides = [1, 1]} : vector<8x32xf32> to vector<8x8xf32>
    %249 = vector.extract_strided_slice %210 {offsets = [0, 16], sizes = [8, 8], strides = [1, 1]} : vector<8x32xf32> to vector<8x8xf32>
    %250 = vector.extract_strided_slice %211 {offsets = [0, 16], sizes = [8, 8], strides = [1, 1]} : vector<8x32xf32> to vector<8x8xf32>
    %cst_130 = arith.constant dense<0.000000e+00> : vector<8x8xf32>
    %251 = tpu.matmul %248, %249, %cst_130 {dimension_numbers = #tpu.dot_dimension_numbers<[1], [1], [0], [0], [0, 0, 1, 0], [], []>} : vector<8x8xf32>, vector<8x8xf32>, vector<8x8xf32> -> vector<8x8xf32>
    %cst_131 = arith.constant dense<0xFF800000> : vector<8xf32>
    %252 = vector.multi_reduction <maximumf>, %251, %cst_131 [1] : vector<8x8xf32> to vector<8xf32>
    %253 = vector.shape_cast %252 : vector<8xf32> to vector<8x1xf32>
    %254 = vector.broadcast %253 : vector<8x1xf32> to vector<8x8xf32>
    %255 = arith.subf %251, %254 : vector<8x8xf32>
    %256 = math.exp %255 : vector<8x8xf32>
    %cst_132 = arith.constant dense<0.000000e+00> : vector<8xf32>
    %257 = vector.multi_reduction <add>, %256, %cst_132 [1] : vector<8x8xf32> to vector<8xf32>
    %258 = vector.shape_cast %257 : vector<8xf32> to vector<8x1xf32>
    %259 = tpu.reciprocal %258 {approx = true} : vector<8x1xf32> -> vector<8x1xf32>
    %260 = vector.broadcast %259 : vector<8x1xf32> to vector<8x8xf32>
    %261 = arith.mulf %256, %260 : vector<8x8xf32>
    %c1_133 = arith.constant 1 : index
    %c0_134 = arith.constant 0 : index
    %c2_135 = arith.constant 2 : index
    %c0_136 = arith.constant 0 : index
    %c0_137 = arith.constant 0 : index
    %262 = vector.load %arg24[%c1_133, %c0_134, %c2_135, %c0_136, %c0_137] : memref<2x1x4x8x8xf32, #tpu.memory_space<vmem>>, vector<1x1x1x8x8xf32>
    %263 = vector.shape_cast %262 : vector<1x1x1x8x8xf32> to vector<8x8xf32>
    %264 = vector.shape_cast %261 : vector<8x8xf32> to vector<1x1x1x8x8xf32>
    tpu.vector_store %arg24[%c1_133, %c0_134, %c2_135, %c0_136, %c0_137], %264 {strides = array<i32>} : memref<2x1x4x8x8xf32, #tpu.memory_space<vmem>>, vector<1x1x1x8x8xf32>,
    %cst_138 = arith.constant dense<0.000000e+00> : vector<8x8xf32>
    %265 = tpu.matmul %261, %250, %cst_138 {dimension_numbers = #tpu.dot_dimension_numbers<[1], [0], [0], [1], [0, 0, 1, 1], [], []>} : vector<8x8xf32>, vector<8x8xf32>, vector<8x8xf32> -> vector<8x8xf32>
    %266 = vector.extract_strided_slice %209 {offsets = [0, 24], sizes = [8, 8], strides = [1, 1]} : vector<8x32xf32> to vector<8x8xf32>
    %267 = vector.extract_strided_slice %210 {offsets = [0, 24], sizes = [8, 8], strides = [1, 1]} : vector<8x32xf32> to vector<8x8xf32>
    %268 = vector.extract_strided_slice %211 {offsets = [0, 24], sizes = [8, 8], strides = [1, 1]} : vector<8x32xf32> to vector<8x8xf32>
    %cst_139 = arith.constant dense<0.000000e+00> : vector<8x8xf32>
    %269 = tpu.matmul %266, %267, %cst_139 {dimension_numbers = #tpu.dot_dimension_numbers<[1], [1], [0], [0], [0, 0, 1, 0], [], []>} : vector<8x8xf32>, vector<8x8xf32>, vector<8x8xf32> -> vector<8x8xf32>
    %cst_140 = arith.constant dense<0xFF800000> : vector<8xf32>
    %270 = vector.multi_reduction <maximumf>, %269, %cst_140 [1] : vector<8x8xf32> to vector<8xf32>
    %271 = vector.shape_cast %270 : vector<8xf32> to vector<8x1xf32>
    %272 = vector.broadcast %271 : vector<8x1xf32> to vector<8x8xf32>
    %273 = arith.subf %269, %272 : vector<8x8xf32>
    %274 = math.exp %273 : vector<8x8xf32>
    %cst_141 = arith.constant dense<0.000000e+00> : vector<8xf32>
    %275 = vector.multi_reduction <add>, %274, %cst_141 [1] : vector<8x8xf32> to vector<8xf32>
    %276 = vector.shape_cast %275 : vector<8xf32> to vector<8x1xf32>
    %277 = tpu.reciprocal %276 {approx = true} : vector<8x1xf32> -> vector<8x1xf32>
    %278 = vector.broadcast %277 : vector<8x1xf32> to vector<8x8xf32>
    %279 = arith.mulf %274, %278 : vector<8x8xf32>
    %c1_142 = arith.constant 1 : index
    %c0_143 = arith.constant 0 : index
    %c3_144 = arith.constant 3 : index
    %c0_145 = arith.constant 0 : index
    %c0_146 = arith.constant 0 : index
    %280 = vector.load %arg24[%c1_142, %c0_143, %c3_144, %c0_145, %c0_146] : memref<2x1x4x8x8xf32, #tpu.memory_space<vmem>>, vector<1x1x1x8x8xf32>
    %281 = vector.shape_cast %280 : vector<1x1x1x8x8xf32> to vector<8x8xf32>
    %282 = vector.shape_cast %279 : vector<8x8xf32> to vector<1x1x1x8x8xf32>
    tpu.vector_store %arg24[%c1_142, %c0_143, %c3_144, %c0_145, %c0_146], %282 {strides = array<i32>} : memref<2x1x4x8x8xf32, #tpu.memory_space<vmem>>, vector<1x1x1x8x8xf32>,
    %cst_147 = arith.constant dense<0.000000e+00> : vector<8x8xf32>
    %283 = tpu.matmul %279, %268, %cst_147 {dimension_numbers = #tpu.dot_dimension_numbers<[1], [0], [0], [1], [0, 0, 1, 1], [], []>} : vector<8x8xf32>, vector<8x8xf32>, vector<8x8xf32> -> vector<8x8xf32>
    %284 = tpu.concatenate %229, %247, %265, %283 in 1 : vector<8x8xf32>, vector<8x8xf32>, vector<8x8xf32>, vector<8x8xf32> -> vector<8x32xf32>
    %c1_148 = arith.constant 1 : index
    %c0_149 = arith.constant 0 : index
    %c0_150 = arith.constant 0 : index
    %285 = vector.load %arg6[%c1_148, %c0_149, %c0_150] : memref<2x32x32xbf16, #tpu.memory_space<vmem>>, vector<1x32x32xbf16>
    %286 = vector.shape_cast %285 : vector<1x32x32xbf16> to vector<32x32xbf16>
    %c1_151 = arith.constant 1 : index
    %c0_152 = arith.constant 0 : index
    %c0_153 = arith.constant 0 : index
    %287 = vector.load %arg7[%c1_151, %c0_152, %c0_153] : memref<2x1x32xf32, #tpu.memory_space<vmem>>, vector<1x1x32xf32>
    %288 = vector.shape_cast %287 : vector<1x1x32xf32> to vector<1x32xf32>
    %289 = arith.truncf %284 : vector<8x32xf32> to vector<8x32xbf16>
    %cst_154 = arith.constant dense<0.000000e+00> : vector<8x32xf32>
    %290 = tpu.matmul %289, %286, %cst_154 {dimension_numbers = #tpu.dot_dimension_numbers<[1], [0], [0], [1], [0, 0, 1, 1], [], []>} : vector<8x32xbf16>, vector<32x32xbf16>, vector<8x32xf32> -> vector<8x32xf32>
    %291 = vector.broadcast %288 : vector<1x32xf32> to vector<8x32xf32>
    %292 = arith.addf %290, %291 : vector<8x32xf32>
    %293 = arith.addf %292, %197 : vector<8x32xf32>
    %c1_155 = arith.constant 1 : index
    %c0_156 = arith.constant 0 : index
    %c0_157 = arith.constant 0 : index
    %294 = vector.load %arg8[%c1_155, %c0_156, %c0_157] : memref<2x1x32xf32, #tpu.memory_space<vmem>>, vector<1x1x32xf32>
    %295 = vector.shape_cast %294 : vector<1x1x32xf32> to vector<1x32xf32>
    %c1_158 = arith.constant 1 : index
    %c0_159 = arith.constant 0 : index
    %c0_160 = arith.constant 0 : index
    %296 = vector.load %arg9[%c1_158, %c0_159, %c0_160] : memref<2x1x32xf32, #tpu.memory_space<vmem>>, vector<1x1x32xf32>
    %297 = vector.shape_cast %296 : vector<1x1x32xf32> to vector<1x32xf32>
    %cst_161 = arith.constant dense<0.000000e+00> : vector<8xf32>
    %298 = vector.multi_reduction <add>, %293, %cst_161 [1] : vector<8x32xf32> to vector<8xf32>
    %299 = vector.shape_cast %298 : vector<8xf32> to vector<8x1xf32>
    %cst_162 = arith.constant 3.200000e+01 : f32
    %300 = vector.broadcast %cst_162 : f32 to vector<8x1xf32>
    %301 = arith.divf %299, %300 : vector<8x1xf32>
    %302 = vector.broadcast %301 : vector<8x1xf32> to vector<8x32xf32>
    %303 = arith.subf %293, %302 : vector<8x32xf32>
    %304 = arith.mulf %303, %303 : vector<8x32xf32>
    %cst_163 = arith.constant dense<0.000000e+00> : vector<8xf32>
    %305 = vector.multi_reduction <add>, %304, %cst_163 [1] : vector<8x32xf32> to vector<8xf32>
    %306 = vector.shape_cast %305 : vector<8xf32> to vector<8x1xf32>
    %cst_164 = arith.constant 3.200000e+01 : f32
    %307 = vector.broadcast %cst_164 : f32 to vector<8x1xf32>
    %308 = arith.divf %306, %307 : vector<8x1xf32>
    %cst_165 = arith.constant 9.99999974E-6 : f32
    %309 = vector.broadcast %cst_165 : f32 to vector<8x1xf32>
    %310 = arith.addf %308, %309 : vector<8x1xf32>
    %311 = math.rsqrt %310 : vector<8x1xf32>
    %312 = vector.broadcast %311 : vector<8x1xf32> to vector<8x32xf32>
    %313 = arith.mulf %303, %312 : vector<8x32xf32>
    %314 = vector.broadcast %295 : vector<1x32xf32> to vector<8x32xf32>
    %315 = arith.mulf %313, %314 : vector<8x32xf32>
    %316 = vector.broadcast %297 : vector<1x32xf32> to vector<8x32xf32>
    %317 = arith.addf %315, %316 : vector<8x32xf32>
    %c1_166 = arith.constant 1 : index
    %c0_167 = arith.constant 0 : index
    %c0_168 = arith.constant 0 : index
    %318 = vector.load %arg10[%c1_166, %c0_167, %c0_168] : memref<2x32x64xbf16, #tpu.memory_space<vmem>>, vector<1x32x64xbf16>
    %319 = vector.shape_cast %318 : vector<1x32x64xbf16> to vector<32x64xbf16>
    %c1_169 = arith.constant 1 : index
    %c0_170 = arith.constant 0 : index
    %c0_171 = arith.constant 0 : index
    %320 = vector.load %arg11[%c1_169, %c0_170, %c0_171] : memref<2x1x64xf32, #tpu.memory_space<vmem>>, vector<1x1x64xf32>
    %321 = vector.shape_cast %320 : vector<1x1x64xf32> to vector<1x64xf32>
    %322 = arith.truncf %317 : vector<8x32xf32> to vector<8x32xbf16>
    %cst_172 = arith.constant dense<0.000000e+00> : vector<8x64xf32>
    %323 = tpu.matmul %322, %319, %cst_172 {dimension_numbers = #tpu.dot_dimension_numbers<[1], [0], [0], [1], [0, 0, 1, 1], [], []>} : vector<8x32xbf16>, vector<32x64xbf16>, vector<8x64xf32> -> vector<8x64xf32>
    %324 = vector.broadcast %321 : vector<1x64xf32> to vector<8x64xf32>
    %325 = arith.addf %323, %324 : vector<8x64xf32>
    %cst_173 = arith.constant 5.000000e-01 : f32
    %326 = vector.broadcast %cst_173 : f32 to vector<8x64xf32>
    %327 = arith.mulf %326, %325 : vector<8x64xf32>
    %cst_174 = arith.constant 4.471500e-02 : f32
    %328 = vector.broadcast %cst_174 : f32 to vector<8x64xf32>
    %329 = arith.mulf %328, %325 : vector<8x64xf32>
    %330 = arith.mulf %329, %325 : vector<8x64xf32>
    %331 = arith.mulf %330, %325 : vector<8x64xf32>
    %332 = arith.addf %325, %331 : vector<8x64xf32>
    %cst_175 = arith.constant 0.797884583 : f32
    %333 = vector.broadcast %cst_175 : f32 to vector<8x64xf32>
    %334 = arith.mulf %333, %332 : vector<8x64xf32>
    %335 = math.tanh %334 : vector<8x64xf32>
    %cst_176 = arith.constant 1.000000e+00 : f32
    %336 = vector.broadcast %cst_176 : f32 to vector<8x64xf32>
    %337 = arith.addf %336, %335 : vector<8x64xf32>
    %338 = arith.mulf %327, %337 : vector<8x64xf32>
    %c1_177 = arith.constant 1 : index
    %c0_178 = arith.constant 0 : index
    %c0_179 = arith.constant 0 : index
    %339 = vector.load %arg12[%c1_177, %c0_178, %c0_179] : memref<2x64x32xbf16, #tpu.memory_space<vmem>>, vector<1x64x32xbf16>
    %340 = vector.shape_cast %339 : vector<1x64x32xbf16> to vector<64x32xbf16>
    %c1_180 = arith.constant 1 : index
    %c0_181 = arith.constant 0 : index
    %c0_182 = arith.constant 0 : index
    %341 = vector.load %arg13[%c1_180, %c0_181, %c0_182] : memref<2x1x32xf32, #tpu.memory_space<vmem>>, vector<1x1x32xf32>
    %342 = vector.shape_cast %341 : vector<1x1x32xf32> to vector<1x32xf32>
    %343 = arith.truncf %338 : vector<8x64xf32> to vector<8x64xbf16>
    %cst_183 = arith.constant dense<0.000000e+00> : vector<8x32xf32>
    %344 = tpu.matmul %343, %340, %cst_183 {dimension_numbers = #tpu.dot_dimension_numbers<[1], [0], [0], [1], [0, 0, 1, 1], [], []>} : vector<8x64xbf16>, vector<64x32xbf16>, vector<8x32xf32> -> vector<8x32xf32>
    %345 = vector.broadcast %342 : vector<1x32xf32> to vector<8x32xf32>
    %346 = arith.addf %344, %345 : vector<8x32xf32>
    %347 = arith.addf %346, %317 : vector<8x32xf32>
    %c1_184 = arith.constant 1 : index
    %c0_185 = arith.constant 0 : index
    %c0_186 = arith.constant 0 : index
    %348 = vector.load %arg14[%c1_184, %c0_185, %c0_186] : memref<2x1x32xf32, #tpu.memory_space<vmem>>, vector<1x1x32xf32>
    %349 = vector.shape_cast %348 : vector<1x1x32xf32> to vector<1x32xf32>
    %c1_187 = arith.constant 1 : index
    %c0_188 = arith.constant 0 : index
    %c0_189 = arith.constant 0 : index
    %350 = vector.load %arg15[%c1_187, %c0_188, %c0_189] : memref<2x1x32xf32, #tpu.memory_space<vmem>>, vector<1x1x32xf32>
    %351 = vector.shape_cast %350 : vector<1x1x32xf32> to vector<1x32xf32>
    %cst_190 = arith.constant dense<0.000000e+00> : vector<8xf32>
    %352 = vector.multi_reduction <add>, %347, %cst_190 [1] : vector<8x32xf32> to vector<8xf32>
    %353 = vector.shape_cast %352 : vector<8xf32> to vector<8x1xf32>
    %cst_191 = arith.constant 3.200000e+01 : f32
    %354 = vector.broadcast %cst_191 : f32 to vector<8x1xf32>
    %355 = arith.divf %353, %354 : vector<8x1xf32>
    %356 = vector.broadcast %355 : vector<8x1xf32> to vector<8x32xf32>
    %357 = arith.subf %347, %356 : vector<8x32xf32>
    %358 = arith.mulf %357, %357 : vector<8x32xf32>
    %cst_192 = arith.constant dense<0.000000e+00> : vector<8xf32>
    %359 = vector.multi_reduction <add>, %358, %cst_192 [1] : vector<8x32xf32> to vector<8xf32>
    %360 = vector.shape_cast %359 : vector<8xf32> to vector<8x1xf32>
    %cst_193 = arith.constant 3.200000e+01 : f32
    %361 = vector.broadcast %cst_193 : f32 to vector<8x1xf32>
    %362 = arith.divf %360, %361 : vector<8x1xf32>
    %cst_194 = arith.constant 9.99999974E-6 : f32
    %363 = vector.broadcast %cst_194 : f32 to vector<8x1xf32>
    %364 = arith.addf %362, %363 : vector<8x1xf32>
    %365 = math.rsqrt %364 : vector<8x1xf32>
    %366 = vector.broadcast %365 : vector<8x1xf32> to vector<8x32xf32>
    %367 = arith.mulf %357, %366 : vector<8x32xf32>
    %368 = vector.broadcast %349 : vector<1x32xf32> to vector<8x32xf32>
    %369 = arith.mulf %367, %368 : vector<8x32xf32>
    %370 = vector.broadcast %351 : vector<1x32xf32> to vector<8x32xf32>
    %371 = arith.addf %369, %370 : vector<8x32xf32>
    %c2_195 = arith.constant 2 : index
    %c0_196 = arith.constant 0 : index
    %c0_197 = arith.constant 0 : index
    %c0_198 = arith.constant 0 : index
    %372 = vector.load %arg23[%c2_195, %c0_196, %c0_197, %c0_198] : memref<3x1x8x32xf32, #tpu.memory_space<vmem>>, vector<1x1x8x32xf32>
    %373 = vector.shape_cast %372 : vector<1x1x8x32xf32> to vector<8x32xf32>
    %374 = vector.shape_cast %371 : vector<8x32xf32> to vector<1x1x8x32xf32>
    tpu.vector_store %arg23[%c2_195, %c0_196, %c0_197, %c0_198], %374 {strides = array<i32>} : memref<3x1x8x32xf32, #tpu.memory_space<vmem>>, vector<1x1x8x32xf32>,
    %c0_199 = arith.constant 0 : index
    %c0_200 = arith.constant 0 : index
    %375 = vector.load %arg16[%c0_199, %c0_200] : memref<32x32xbf16, #tpu.memory_space<vmem>>, vector<32x32xbf16>
    %c0_201 = arith.constant 0 : index
    %c0_202 = arith.constant 0 : index
    %376 = vector.load %arg17[%c0_201, %c0_202] : memref<1x32xf32, #tpu.memory_space<vmem>>, vector<1x32xf32>
    %377 = arith.truncf %371 : vector<8x32xf32> to vector<8x32xbf16>
    %cst_203 = arith.constant dense<0.000000e+00> : vector<8x32xf32>
    %378 = tpu.matmul %377, %375, %cst_203 {dimension_numbers = #tpu.dot_dimension_numbers<[1], [0], [0], [1], [0, 0, 1, 1], [], []>} : vector<8x32xbf16>, vector<32x32xbf16>, vector<8x32xf32> -> vector<8x32xf32>
    %379 = vector.broadcast %376 : vector<1x32xf32> to vector<8x32xf32>
    %380 = arith.addf %378, %379 : vector<8x32xf32>
    %cst_204 = arith.constant 5.000000e-01 : f32
    %381 = vector.broadcast %cst_204 : f32 to vector<8x32xf32>
    %382 = arith.mulf %381, %380 : vector<8x32xf32>
    %cst_205 = arith.constant 4.471500e-02 : f32
    %383 = vector.broadcast %cst_205 : f32 to vector<8x32xf32>
    %384 = arith.mulf %383, %380 : vector<8x32xf32>
    %385 = arith.mulf %384, %380 : vector<8x32xf32>
    %386 = arith.mulf %385, %380 : vector<8x32xf32>
    %387 = arith.addf %380, %386 : vector<8x32xf32>
    %cst_206 = arith.constant 0.797884583 : f32
    %388 = vector.broadcast %cst_206 : f32 to vector<8x32xf32>
    %389 = arith.mulf %388, %387 : vector<8x32xf32>
    %390 = math.tanh %389 : vector<8x32xf32>
    %cst_207 = arith.constant 1.000000e+00 : f32
    %391 = vector.broadcast %cst_207 : f32 to vector<8x32xf32>
    %392 = arith.addf %391, %390 : vector<8x32xf32>
    %393 = arith.mulf %382, %392 : vector<8x32xf32>
    %c0_208 = arith.constant 0 : index
    %c0_209 = arith.constant 0 : index
    %394 = vector.load %arg18[%c0_208, %c0_209] : memref<1x32xf32, #tpu.memory_space<vmem>>, vector<1x32xf32>
    %c0_210 = arith.constant 0 : index
    %c0_211 = arith.constant 0 : index
    %395 = vector.load %arg19[%c0_210, %c0_211] : memref<1x32xf32, #tpu.memory_space<vmem>>, vector<1x32xf32>
    %cst_212 = arith.constant dense<0.000000e+00> : vector<8xf32>
    %396 = vector.multi_reduction <add>, %393, %cst_212 [1] : vector<8x32xf32> to vector<8xf32>
    %397 = vector.shape_cast %396 : vector<8xf32> to vector<8x1xf32>
    %cst_213 = arith.constant 3.200000e+01 : f32
    %398 = vector.broadcast %cst_213 : f32 to vector<8x1xf32>
    %399 = arith.divf %397, %398 : vector<8x1xf32>
    %400 = vector.broadcast %399 : vector<8x1xf32> to vector<8x32xf32>
    %401 = arith.subf %393, %400 : vector<8x32xf32>
    %402 = arith.mulf %401, %401 : vector<8x32xf32>
    %cst_214 = arith.constant dense<0.000000e+00> : vector<8xf32>
    %403 = vector.multi_reduction <add>, %402, %cst_214 [1] : vector<8x32xf32> to vector<8xf32>
    %404 = vector.shape_cast %403 : vector<8xf32> to vector<8x1xf32>
    %cst_215 = arith.constant 3.200000e+01 : f32
    %405 = vector.broadcast %cst_215 : f32 to vector<8x1xf32>
    %406 = arith.divf %404, %405 : vector<8x1xf32>
    %cst_216 = arith.constant 9.99999974E-6 : f32
    %407 = vector.broadcast %cst_216 : f32 to vector<8x1xf32>
    %408 = arith.addf %406, %407 : vector<8x1xf32>
    %409 = math.rsqrt %408 : vector<8x1xf32>
    %410 = vector.broadcast %409 : vector<8x1xf32> to vector<8x32xf32>
    %411 = arith.mulf %401, %410 : vector<8x32xf32>
    %412 = vector.broadcast %394 : vector<1x32xf32> to vector<8x32xf32>
    %413 = arith.mulf %411, %412 : vector<8x32xf32>
    %414 = vector.broadcast %395 : vector<1x32xf32> to vector<8x32xf32>
    %415 = arith.addf %413, %414 : vector<8x32xf32>
    %c0_217 = arith.constant 0 : index
    %c0_218 = arith.constant 0 : index
    %416 = vector.load %arg20[%c0_217, %c0_218] : memref<32x128xbf16, #tpu.memory_space<vmem>>, vector<32x128xbf16>
    %c0_219 = arith.constant 0 : index
    %c0_220 = arith.constant 0 : index
    %417 = vector.load %arg21[%c0_219, %c0_220] : memref<1x128xf32, #tpu.memory_space<vmem>>, vector<1x128xf32>
    %418 = arith.truncf %415 : vector<8x32xf32> to vector<8x32xbf16>
    %cst_221 = arith.constant dense<0.000000e+00> : vector<8x128xf32>
    %419 = tpu.matmul %418, %416, %cst_221 {dimension_numbers = #tpu.dot_dimension_numbers<[1], [0], [0], [1], [0, 0, 1, 1], [], []>} : vector<8x32xbf16>, vector<32x128xbf16>, vector<8x128xf32> -> vector<8x128xf32>
    %420 = vector.broadcast %417 : vector<1x128xf32> to vector<8x128xf32>
    %421 = arith.addf %419, %420 : vector<8x128xf32>
    %c0_222 = arith.constant 0 : index
    %c0_223 = arith.constant 0 : index
    %c0_224 = arith.constant 0 : index
    %422 = vector.load %arg22[%c0_222, %c0_223, %c0_224] : memref<1x8x128xf32, #tpu.memory_space<vmem>>, vector<1x8x128xf32>
    %423 = vector.shape_cast %422 : vector<1x8x128xf32> to vector<8x128xf32>
    %424 = vector.shape_cast %421 : vector<8x128xf32> to vector<1x8x128xf32>
    tpu.vector_store %arg22[%c0_222, %c0_223, %c0_224], %424 {strides = array<i32>} : memref<1x8x128xf32, #tpu.memory_space<vmem>>, vector<1x8x128xf32>,
    return
  }
  func.func @transform_0(%arg0: i32) -> (i32, i32, i32) {
    %c0_i32 = arith.constant 0 : i32
    %c0_i32_0 = arith.constant 0 : i32
    %c0_i32_1 = arith.constant 0 : i32
    return %arg0, %c0_i32, %c0_i32_0 : i32, i32, i32
  }
  func.func @transform_1(%arg0: i32) -> (i32, i32) {
    %c0_i32 = arith.constant 0 : i32
    %c0_i32_0 = arith.constant 0 : i32
    %c0_i32_1 = arith.constant 0 : i32
    return %c0_i32, %c0_i32_0 : i32, i32
  }
  func.func @transform_2(%arg0: i32) -> (i32, i32) {
    %c0_i32 = arith.constant 0 : i32
    %c0_i32_0 = arith.constant 0 : i32
    %c0_i32_1 = arith.constant 0 : i32
    return %c0_i32, %c0_i32_0 : i32, i32
  }
  func.func @transform_3(%arg0: i32) -> (i32, i32, i32) {
    %c0_i32 = arith.constant 0 : i32
    %c0_i32_0 = arith.constant 0 : i32
    %c0_i32_1 = arith.constant 0 : i32
    %c0_i32_2 = arith.constant 0 : i32
    return %c0_i32, %c0_i32_0, %c0_i32_1 : i32, i32, i32
  }
  func.func @transform_4(%arg0: i32) -> (i32, i32, i32) {
    %c0_i32 = arith.constant 0 : i32
    %c0_i32_0 = arith.constant 0 : i32
    %c0_i32_1 = arith.constant 0 : i32
    %c0_i32_2 = arith.constant 0 : i32
    return %c0_i32, %c0_i32_0, %c0_i32_1 : i32, i32, i32
  }
  func.func @transform_5(%arg0: i32) -> (i32, i32, i32) {
    %c0_i32 = arith.constant 0 : i32
    %c0_i32_0 = arith.constant 0 : i32
    %c0_i32_1 = arith.constant 0 : i32
    %c0_i32_2 = arith.constant 0 : i32
    return %c0_i32, %c0_i32_0, %c0_i32_1 : i32, i32, i32
  }
  func.func @transform_6(%arg0: i32) -> (i32, i32, i32) {
    %c0_i32 = arith.constant 0 : i32
    %c0_i32_0 = arith.constant 0 : i32
    %c0_i32_1 = arith.constant 0 : i32
    %c0_i32_2 = arith.constant 0 : i32
    return %c0_i32, %c0_i32_0, %c0_i32_1 : i32, i32, i32
  }
  func.func @transform_7(%arg0: i32) -> (i32, i32, i32) {
    %c0_i32 = arith.constant 0 : i32
    %c0_i32_0 = arith.constant 0 : i32
    %c0_i32_1 = arith.constant 0 : i32
    %c0_i32_2 = arith.constant 0 : i32
    return %c0_i32, %c0_i32_0, %c0_i32_1 : i32, i32, i32
  }
  func.func @transform_8(%arg0: i32) -> (i32, i32, i32) {
    %c0_i32 = arith.constant 0 : i32
    %c0_i32_0 = arith.constant 0 : i32
    %c0_i32_1 = arith.constant 0 : i32
    %c0_i32_2 = arith.constant 0 : i32
    return %c0_i32, %c0_i32_0, %c0_i32_1 : i32, i32, i32
  }
  func.func @transform_9(%arg0: i32) -> (i32, i32, i32) {
    %c0_i32 = arith.constant 0 : i32
    %c0_i32_0 = arith.constant 0 : i32
    %c0_i32_1 = arith.constant 0 : i32
    %c0_i32_2 = arith.constant 0 : i32
    return %c0_i32, %c0_i32_0, %c0_i32_1 : i32, i32, i32
  }
  func.func @transform_10(%arg0: i32) -> (i32, i32, i32) {
    %c0_i32 = arith.constant 0 : i32
    %c0_i32_0 = arith.constant 0 : i32
    %c0_i32_1 = arith.constant 0 : i32
    %c0_i32_2 = arith.constant 0 : i32
    return %c0_i32, %c0_i32_0, %c0_i32_1 : i32, i32, i32
  }
  func.func @transform_11(%arg0: i32) -> (i32, i32, i32) {
    %c0_i32 = arith.constant 0 : i32
    %c0_i32_0 = arith.constant 0 : i32
    %c0_i32_1 = arith.constant 0 : i32
    %c0_i32_2 = arith.constant 0 : i32
    return %c0_i32, %c0_i32_0, %c0_i32_1 : i32, i32, i32
  }
  func.func @transform_12(%arg0: i32) -> (i32, i32, i32) {
    %c0_i32 = arith.constant 0 : i32
    %c0_i32_0 = arith.constant 0 : i32
    %c0_i32_1 = arith.constant 0 : i32
    %c0_i32_2 = arith.constant 0 : i32
    return %c0_i32, %c0_i32_0, %c0_i32_1 : i32, i32, i32
  }
  func.func @transform_13(%arg0: i32) -> (i32, i32, i32) {
    %c0_i32 = arith.constant 0 : i32
    %c0_i32_0 = arith.constant 0 : i32
    %c0_i32_1 = arith.constant 0 : i32
    %c0_i32_2 = arith.constant 0 : i32
    return %c0_i32, %c0_i32_0, %c0_i32_1 : i32, i32, i32
  }
  func.func @transform_14(%arg0: i32) -> (i32, i32, i32) {
    %c0_i32 = arith.constant 0 : i32
    %c0_i32_0 = arith.constant 0 : i32
    %c0_i32_1 = arith.constant 0 : i32
    %c0_i32_2 = arith.constant 0 : i32
    return %c0_i32, %c0_i32_0, %c0_i32_1 : i32, i32, i32
  }
  func.func @transform_15(%arg0: i32) -> (i32, i32) {
    %c0_i32 = arith.constant 0 : i32
    %c0_i32_0 = arith.constant 0 : i32
    %c0_i32_1 = arith.constant 0 : i32
    return %c0_i32, %c0_i32_0 : i32, i32
  }
  func.func @transform_16(%arg0: i32) -> (i32, i32) {
    %c0_i32 = arith.constant 0 : i32
    %c0_i32_0 = arith.constant 0 : i32
    %c0_i32_1 = arith.constant 0 : i32
    return %c0_i32, %c0_i32_0 : i32, i32
  }
  func.func @transform_17(%arg0: i32) -> (i32, i32) {
    %c0_i32 = arith.constant 0 : i32
    %c0_i32_0 = arith.constant 0 : i32
    %c0_i32_1 = arith.constant 0 : i32
    return %c0_i32, %c0_i32_0 : i32, i32
  }
  func.func @transform_18(%arg0: i32) -> (i32, i32) {
    %c0_i32 = arith.constant 0 : i32
    %c0_i32_0 = arith.constant 0 : i32
    %c0_i32_1 = arith.constant 0 : i32
    return %c0_i32, %c0_i32_0 : i32, i32
  }
  func.func @transform_19(%arg0: i32) -> (i32, i32) {
    %c0_i32 = arith.constant 0 : i32
    %c0_i32_0 = arith.constant 0 : i32
    %c0_i32_1 = arith.constant 0 : i32
    return %c0_i32, %c0_i32_0 : i32, i32
  }
  func.func @transform_20(%arg0: i32) -> (i32, i32) {
    %c0_i32 = arith.constant 0 : i32
    %c0_i32_0 = arith.constant 0 : i32
    %c0_i32_1 = arith.constant 0 : i32
    return %c0_i32, %c0_i32_0 : i32, i32
  }
  func.func @transform_21(%arg0: i32) -> (i32, i32, i32) {
    %c0_i32 = arith.constant 0 : i32
    %c0_i32_0 = arith.constant 0 : i32
    %c0_i32_1 = arith.constant 0 : i32
    return %arg0, %c0_i32, %c0_i32_0 : i32, i32, i32
  }
  func.func @transform_22(%arg0: i32) -> (i32, i32, i32, i32) {
    %c0_i32 = arith.constant 0 : i32
    %c0_i32_0 = arith.constant 0 : i32
    %c0_i32_1 = arith.constant 0 : i32
    %c0_i32_2 = arith.constant 0 : i32
    return %c0_i32, %arg0, %c0_i32_0, %c0_i32_1 : i32, i32, i32, i32
  }
  func.func @transform_23(%arg0: i32) -> (i32, i32, i32, i32, i32) {
    %c0_i32 = arith.constant 0 : i32
    %c0_i32_0 = arith.constant 0 : i32
    %c0_i32_1 = arith.constant 0 : i32
    %c0_i32_2 = arith.constant 0 : i32
    %c0_i32_3 = arith.constant 0 : i32
    return %c0_i32, %arg0, %c0_i32_0, %c0_i32_1, %c0_i32_2 : i32, i32, i32, i32, i32
  }
}

</mosaic_0001>

<llo_original>
// kernel: roberta_forward.1
$region0: #{roberta_forward.1}
  #allocation0 [shape = 'u32[]', space=smem, size = 0x4, offset = 0x4, fixed_abs, tag = 'smem constant byte address 0x4 - core index']
  #allocation1 [shape = 'u32[144,128]{1,0:T(1,128)}', space=vmem, size = 0x12000, scoped, tag = 'internal scratch']
  %s0 = inlined_call_operand.vmem [shape: f32[2,8,32], index: 0, kind: input, shape index: {}]
  %s1 = inlined_call_operand.vmem [shape: f32[1,32], index: 1, kind: input, shape index: {}]
  %s2 = inlined_call_operand.vmem [shape: f32[1,32], index: 2, kind: input, shape index: {}]
  %s3 = inlined_call_operand.vmem [shape: bf16[2,32,96], index: 3, kind: input, shape index: {}]
  %s4 = inlined_call_operand.vmem [shape: f32[2,1,96], index: 4, kind: input, shape index: {}]
  %s5 = inlined_call_operand.vmem [shape: bf16[2,32,32], index: 5, kind: input, shape index: {}]
  %s6 = inlined_call_operand.vmem [shape: f32[2,1,32], index: 6, kind: input, shape index: {}]
  %s7 = inlined_call_operand.vmem [shape: f32[2,1,32], index: 7, kind: input, shape index: {}]
  %s8 = inlined_call_operand.vmem [shape: f32[2,1,32], index: 8, kind: input, shape index: {}]
  %s9 = inlined_call_operand.vmem [shape: bf16[2,32,64], index: 9, kind: input, shape index: {}]
  %s10 = inlined_call_operand.vmem [shape: f32[2,1,64], index: 10, kind: input, shape index: {}]
  %s11 = inlined_call_operand.vmem [shape: bf16[2,64,32], index: 11, kind: input, shape index: {}]
  %s12 = inlined_call_operand.vmem [shape: f32[2,1,32], index: 12, kind: input, shape index: {}]
  %s13 = inlined_call_operand.vmem [shape: f32[2,1,32], index: 13, kind: input, shape index: {}]
  %s14 = inlined_call_operand.vmem [shape: f32[2,1,32], index: 14, kind: input, shape index: {}]
  %s15 = inlined_call_operand.vmem [shape: bf16[32,32], index: 15, kind: input, shape index: {}]
  %s16 = inlined_call_operand.vmem [shape: f32[1,32], index: 16, kind: input, shape index: {}]
  %s17 = inlined_call_operand.vmem [shape: f32[1,32], index: 17, kind: input, shape index: {}]
  %s18 = inlined_call_operand.vmem [shape: f32[1,32], index: 18, kind: input, shape index: {}]
  %s19 = inlined_call_operand.vmem [shape: bf16[32,128], index: 19, kind: input, shape index: {}]
  %s20 = inlined_call_operand.vmem [shape: f32[1,128], index: 20, kind: input, shape index: {}]
  %s21 = inlined_call_operand.hbm [shape: f32[2,8,128], index: 21, kind: output, shape index: {0}]
  %s22 = inlined_call_operand.vmem [shape: f32[3,2,8,32], index: 22, kind: output, shape index: {1}]
  %s23 = inlined_call_operand.vmem [shape: f32[2,2,4,8,8], index: 23, kind: output, shape index: {2}]
  %24 = xla_tuple %s21, %s22, %s23
  %s25 = sld [smem:[#allocation0]]
  $region201: #{roberta_forward.1} parent=0
    _
  %s27 = ssub.s32 1, %s25
  %s28 = scalar_select 0, %s27, %s25
  $region1: #{roberta_forward.1} parent=0
    #allocation2 [shape = 'u8[8192]{0}', space=vmem, size = 0x2000, scoped, tag = 'output window, operand 0']
    #allocation3 [shape = 's32[2]{0}', space=sflag, size = 0x8, scoped, tag = 'scoped memory for roberta_forward.1']
    #allocation4 [shape = 'u8[24576]{0}', space=vmem, size = 0x6000, scoped, tag = 'output window, operand 1']
    #allocation5 [shape = 'u8[65536]{0}', space=vmem, size = 0x10000, scoped, tag = 'output window, operand 2']
    %29 = vsyncpa [#allocation3], 0
    %s30 = scalar_lea.sflag [#allocation3], 1
    %31 = vsyncpa %s30, 0
    loop: start=0, step=1, limit=4
    $region2: #{roberta_forward.1} parent=1 // loop_pre_header
      _
    $region3: #{roberta_forward.1} parent=1 // loop_header
      %s33 = sphi 0, %s37
      %p34 = scmp.ge.s32.totalorder %s33, 4
      %s43 = sphi 0, %s45
      %s46 = sphi 0, %s43
      %s47 = sphi 0, %s46
      %s63 = sphi 0, %s47
      %s67 = sphi 0, %s67
      %s69 = sphi 0, %s67
      %s70 = sphi 0, %s69
      %s84 = sphi 0, %s70
      %s88 = sphi 0, %s88
      %s90 = sphi 0, %s88
      %s91 = sphi 0, %s90
      %s105 = sphi 0, %s91
      %s109 = sphi 0, %s109
      %s111 = sphi 0, %s109
      %s112 = sphi 0, %s111
      %s126 = sphi 0, %s112
      %s130 = sphi 0, %s130
      %s132 = sphi 0, %s130
      %s133 = sphi 0, %s132
      %s147 = sphi 0, %s133
      %s151 = sphi 0, %s151
      %s153 = sphi 0, %s151
      %s154 = sphi 0, %s153
      %s168 = sphi 0, %s154
      %s172 = sphi 0, %s172
      %s174 = sphi 0, %s172
      %s175 = sphi 0, %s174
      %s189 = sphi 0, %s175
      %s193 = sphi 0, %s193
      %s195 = sphi 0, %s193
      %s196 = sphi 0, %s195
      %s210 = sphi 0, %s196
      %s214 = sphi 0, %s214
      %s216 = sphi 0, %s214
      %s217 = sphi 0, %s216
      %s231 = sphi 0, %s217
      %s235 = sphi 0, %s235
      %s237 = sphi 0, %s235
      %s238 = sphi 0, %s237
      %s252 = sphi 0, %s238
      %s256 = sphi 0, %s256
      %s258 = sphi 0, %s256
      %s259 = sphi 0, %s258
      %s273 = sphi 0, %s259
      %s277 = sphi 0, %s277
      %s279 = sphi 0, %s277
      %s280 = sphi 0, %s279
      %s294 = sphi 0, %s280
      %s298 = sphi 0, %s298
      %s300 = sphi 0, %s298
      %s301 = sphi 0, %s300
      %s315 = sphi 0, %s301
      %s319 = sphi 0, %s319
      %s321 = sphi 0, %s319
      %s322 = sphi 0, %s321
      %s336 = sphi 0, %s322
      %s340 = sphi 0, %s340
      %s342 = sphi 0, %s340
      %s343 = sphi 0, %s342
      %s357 = sphi 0, %s343
      %s361 = sphi 0, %s361
      %s363 = sphi 0, %s361
      %s364 = sphi 0, %s363
      %s378 = sphi 0, %s364
      %s382 = sphi 0, %s382
      %s384 = sphi 0, %s382
      %s385 = sphi 0, %s384
      %s399 = sphi 0, %s385
      %s403 = sphi 0, %s403
      %s405 = sphi 0, %s403
      %s406 = sphi 0, %s405
      %s420 = sphi 0, %s406
      %s424 = sphi 0, %s424
      %s426 = sphi 0, %s424
      %s427 = sphi 0, %s426
      %s441 = sphi 0, %s427
      %s445 = sphi 0, %s445
      %s447 = sphi 0, %s445
      %s448 = sphi 0, %s447
      %s462 = sphi 0, %s448
      %s466 = sphi 0, %s466
      %s468 = sphi 0, %s466
      %s469 = sphi 0, %s468
      %s483 = sphi 0, %s469
      %s489 = sphi 0, %s491
      %s492 = sphi 0, %s489
      %s493 = sphi 0, %s492
      %s509 = sphi 0, %s493
      %s515 = sphi 0, %s517
      %s518 = sphi 0, %s515
      %s519 = sphi 0, %s518
      %s535 = sphi 0, %s519
      %s541 = sphi 0, %s543
      %s544 = sphi 0, %s541
      %s545 = sphi 0, %s544
      %s561 = sphi 0, %s545
    $region4: #{roberta_forward.1} parent=1 // loop_header_branch
      %36 = sbr.rel (%p34) target = $region8
    $region5: #{roberta_forward.1} parent=1 // loop_body
      %s38 = ssub.s32 %s33, 1
      %s39 = ssub.s32 %s33, 2
      %s40 = sadd.s32 %s33, 1
      %s41 = ssub.s32 %s33, %s40
      %p42 = scmp.eq.s32.totalorder %s41, 0
      %s44 = sadd.s32 %s43, 1
      %s45 = scalar_select %p42, %s43, %s44
      %p48 = pneg %p42
      %p49 = scmp.eq.s32.totalorder %s33, 1
      %p50 = por %p48, %p49
      %p51 = scmp.ne.s32.totalorder %s43, %s46
      %p52 = scmp.eq.s32.totalorder %s33, 0
      %p53 = por %p51, %p52
      %p54 = scmp.ne.s32.totalorder %s43, %s46
      %p55 = scmp.eq.s32.totalorder %s38, 1
      %p56 = por %p54, %p55
      %p57 = scmp.ne.s32.totalorder %s46, %s47
      %p58 = scmp.eq.s32.totalorder %s38, 0
      %p59 = por %p57, %p58
      %p60 = scmp.ne.s32.totalorder %s46, %s47
      %p61 = scmp.eq.s32.totalorder %s39, 1
      %p62 = por %p60, %p61
      %p64 = scmp.ne.s32.totalorder %s47, %s63
      %p65 = scmp.eq.s32.totalorder %s39, 0
      %p66 = por %p64, %p65
      %s68 = sadd.s32 %s67, 1
      %p71 = scmp.eq.s32.totalorder %s33, 1
      %p72 = scmp.ne.s32.totalorder %s67, %s69
      %p73 = scmp.eq.s32.totalorder %s33, 0
      %p74 = por %p72, %p73
      %p75 = scmp.ne.s32.totalorder %s67, %s69
      %p76 = scmp.eq.s32.totalorder %s38, 1
      %p77 = por %p75, %p76
      %p78 = scmp.ne.s32.totalorder %s69, %s70
      %p79 = scmp.eq.s32.totalorder %s38, 0
      %p80 = por %p78, %p79
      %p81 = scmp.ne.s32.totalorder %s69, %s70
      %p82 = scmp.eq.s32.totalorder %s39, 1
      %p83 = por %p81, %p82
      %p85 = scmp.ne.s32.totalorder %s70, %s84
      %p86 = scmp.eq.s32.totalorder %s39, 0
      %p87 = por %p85, %p86
      %s89 = sadd.s32 %s88, 1
      %p92 = scmp.eq.s32.totalorder %s33, 1
      %p93 = scmp.ne.s32.totalorder %s88, %s90
      %p94 = scmp.eq.s32.totalorder %s33, 0
      %p95 = por %p93, %p94
      %p96 = scmp.ne.s32.totalorder %s88, %s90
      %p97 = scmp.eq.s32.totalorder %s38, 1
      %p98 = por %p96, %p97
      %p99 = scmp.ne.s32.totalorder %s90, %s91
      %p100 = scmp.eq.s32.totalorder %s38, 0
      %p101 = por %p99, %p100
      %p102 = scmp.ne.s32.totalorder %s90, %s91
      %p103 = scmp.eq.s32.totalorder %s39, 1
      %p104 = por %p102, %p103
      %p106 = scmp.ne.s32.totalorder %s91, %s105
      %p107 = scmp.eq.s32.totalorder %s39, 0
      %p108 = por %p106, %p107
      %s110 = sadd.s32 %s109, 1
      %p113 = scmp.eq.s32.totalorder %s33, 1
      %p114 = scmp.ne.s32.totalorder %s109, %s111
      %p115 = scmp.eq.s32.totalorder %s33, 0
      %p116 = por %p114, %p115
      %p117 = scmp.ne.s32.totalorder %s109, %s111
      %p118 = scmp.eq.s32.totalorder %s38, 1
      %p119 = por %p117, %p118
      %p120 = scmp.ne.s32.totalorder %s111, %s112
      %p121 = scmp.eq.s32.totalorder %s38, 0
      %p122 = por %p120, %p121
      %p123 = scmp.ne.s32.totalorder %s111, %s112
      %p124 = scmp.eq.s32.totalorder %s39, 1
      %p125 = por %p123, %p124
      %p127 = scmp.ne.s32.totalorder %s112, %s126
      %p128 = scmp.eq.s32.totalorder %s39, 0
      %p129 = por %p127, %p128
      %s131 = sadd.s32 %s130, 1
      %p134 = scmp.eq.s32.totalorder %s33, 1
      %p135 = scmp.ne.s32.totalorder %s130, %s132
      %p136 = scmp.eq.s32.totalorder %s33, 0
      %p137 = por %p135, %p136
      %p138 = scmp.ne.s32.totalorder %s130, %s132
      %p139 = scmp.eq.s32.totalorder %s38, 1
      %p140 = por %p138, %p139
      %p141 = scmp.ne.s32.totalorder %s132, %s133
      %p142 = scmp.eq.s32.totalorder %s38, 0
      %p143 = por %p141, %p142
      %p144 = scmp.ne.s32.totalorder %s132, %s133
      %p145 = scmp.eq.s32.totalorder %s39, 1
      %p146 = por %p144, %p145
      %p148 = scmp.ne.s32.totalorder %s133, %s147
      %p149 = scmp.eq.s32.totalorder %s39, 0
      %p150 = por %p148, %p149
      %s152 = sadd.s32 %s151, 1
      %p155 = scmp.eq.s32.totalorder %s33, 1
      %p156 = scmp.ne.s32.totalorder %s151, %s153
      %p157 = scmp.eq.s32.totalorder %s33, 0
      %p158 = por %p156, %p157
      %p159 = scmp.ne.s32.totalorder %s151, %s153
      %p160 = scmp.eq.s32.totalorder %s38, 1
      %p161 = por %p159, %p160
      %p162 = scmp.ne.s32.totalorder %s153, %s154
      %p163 = scmp.eq.s32.totalorder %s38, 0
      %p164 = por %p162, %p163
      %p165 = scmp.ne.s32.totalorder %s153, %s154
      %p166 = scmp.eq.s32.totalorder %s39, 1
      %p167 = por %p165, %p166
      %p169 = scmp.ne.s32.totalorder %s154, %s168
      %p170 = scmp.eq.s32.totalorder %s39, 0
      %p171 = por %p169, %p170
      %s173 = sadd.s32 %s172, 1
      %p176 = scmp.eq.s32.totalorder %s33, 1
      %p177 = scmp.ne.s32.totalorder %s172, %s174
      %p178 = scmp.eq.s32.totalorder %s33, 0
      %p179 = por %p177, %p178
      %p180 = scmp.ne.s32.totalorder %s172, %s174
      %p181 = scmp.eq.s32.totalorder %s38, 1
      %p182 = por %p180, %p181
      %p183 = scmp.ne.s32.totalorder %s174, %s175
      %p184 = scmp.eq.s32.totalorder %s38, 0
      %p185 = por %p183, %p184
      %p186 = scmp.ne.s32.totalorder %s174, %s175
      %p187 = scmp.eq.s32.totalorder %s39, 1
      %p188 = por %p186, %p187
      %p190 = scmp.ne.s32.totalorder %s175, %s189
      %p191 = scmp.eq.s32.totalorder %s39, 0
      %p192 = por %p190, %p191
      %s194 = sadd.s32 %s193, 1
      %p197 = scmp.eq.s32.totalorder %s33, 1
      %p198 = scmp.ne.s32.totalorder %s193, %s195
      %p199 = scmp.eq.s32.totalorder %s33, 0
      %p200 = por %p198, %p199
      %p201 = scmp.ne.s32.totalorder %s193, %s195
      %p202 = scmp.eq.s32.totalorder %s38, 1
      %p203 = por %p201, %p202
      %p204 = scmp.ne.s32.totalorder %s195, %s196
      %p205 = scmp.eq.s32.totalorder %s38, 0
      %p206 = por %p204, %p205
      %p207 = scmp.ne.s32.totalorder %s195, %s196
      %p208 = scmp.eq.s32.totalorder %s39, 1
      %p209 = por %p207, %p208
      %p211 = scmp.ne.s32.totalorder %s196, %s210
      %p212 = scmp.eq.s32.totalorder %s39, 0
      %p213 = por %p211, %p212
      %s215 = sadd.s32 %s214, 1
      %p218 = scmp.eq.s32.totalorder %s33, 1
      %p219 = scmp.ne.s32.totalorder %s214, %s216
      %p220 = scmp.eq.s32.totalorder %s33, 0
      %p221 = por %p219, %p220
      %p222 = scmp.ne.s32.totalorder %s214, %s216
      %p223 = scmp.eq.s32.totalorder %s38, 1
      %p224 = por %p222, %p223
      %p225 = scmp.ne.s32.totalorder %s216, %s217
      %p226 = scmp.eq.s32.totalorder %s38, 0
      %p227 = por %p225, %p226
      %p228 = scmp.ne.s32.totalorder %s216, %s217
      %p229 = scmp.eq.s32.totalorder %s39, 1
      %p230 = por %p228, %p229
      %p232 = scmp.ne.s32.totalorder %s217, %s231
      %p233 = scmp.eq.s32.totalorder %s39, 0
      %p234 = por %p232, %p233
      %s236 = sadd.s32 %s235, 1
      %p239 = scmp.eq.s32.totalorder %s33, 1
      %p240 = scmp.ne.s32.totalorder %s235, %s237
      %p241 = scmp.eq.s32.totalorder %s33, 0
      %p242 = por %p240, %p241
      %p243 = scmp.ne.s32.totalorder %s235, %s237
      %p244 = scmp.eq.s32.totalorder %s38, 1
      %p245 = por %p243, %p244
      %p246 = scmp.ne.s32.totalorder %s237, %s238
      %p247 = scmp.eq.s32.totalorder %s38, 0
      %p248 = por %p246, %p247
      %p249 = scmp.ne.s32.totalorder %s237, %s238
      %p250 = scmp.eq.s32.totalorder %s39, 1
      %p251 = por %p249, %p250
      %p253 = scmp.ne.s32.totalorder %s238, %s252
      %p254 = scmp.eq.s32.totalorder %s39, 0
      %p255 = por %p253, %p254
      %s257 = sadd.s32 %s256, 1
      %p260 = scmp.eq.s32.totalorder %s33, 1
      %p261 = scmp.ne.s32.totalorder %s256, %s258
      %p262 = scmp.eq.s32.totalorder %s33, 0
      %p263 = por %p261, %p262
      %p264 = scmp.ne.s32.totalorder %s256, %s258
      %p265 = scmp.eq.s32.totalorder %s38, 1
      %p266 = por %p264, %p265
      %p267 = scmp.ne.s32.totalorder %s258, %s259
      %p268 = scmp.eq.s32.totalorder %s38, 0
      %p269 = por %p267, %p268
      %p270 = scmp.ne.s32.totalorder %s258, %s259
      %p271 = scmp.eq.s32.totalorder %s39, 1
      %p272 = por %p270, %p271
      %p274 = scmp.ne.s32.totalorder %s259, %s273
      %p275 = scmp.eq.s32.totalorder %s39, 0
      %p276 = por %p274, %p275
      %s278 = sadd.s32 %s277, 1
      %p281 = scmp.eq.s32.totalorder %s33, 1
      %p282 = scmp.ne.s32.totalorder %s277, %s279
      %p283 = scmp.eq.s32.totalorder %s33, 0
      %p284 = por %p282, %p283
      %p285 = scmp.ne.s32.totalorder %s277, %s279
      %p286 = scmp.eq.s32.totalorder %s38, 1
      %p287 = por %p285, %p286
      %p288 = scmp.ne.s32.totalorder %s279, %s280
      %p289 = scmp.eq.s32.totalorder %s38, 0
      %p290 = por %p288, %p289
      %p291 = scmp.ne.s32.totalorder %s279, %s280
      %p292 = scmp.eq.s32.totalorder %s39, 1
      %p293 = por %p291, %p292
      %p295 = scmp.ne.s32.totalorder %s280, %s294
      %p296 = scmp.eq.s32.totalorder %s39, 0
      %p297 = por %p295, %p296
      %s299 = sadd.s32 %s298, 1
      %p302 = scmp.eq.s32.totalorder %s33, 1
      %p303 = scmp.ne.s32.totalorder %s298, %s300
      %p304 = scmp.eq.s32.totalorder %s33, 0
      %p305 = por %p303, %p304
      %p306 = scmp.ne.s32.totalorder %s298, %s300
      %p307 = scmp.eq.s32.totalorder %s38, 1
      %p308 = por %p306, %p307
      %p309 = scmp.ne.s32.totalorder %s300, %s301
      %p310 = scmp.eq.s32.totalorder %s38, 0
      %p311 = por %p309, %p310
      %p312 = scmp.ne.s32.totalorder %s300, %s301
      %p313 = scmp.eq.s32.totalorder %s39, 1
      %p314 = por %p312, %p313
      %p316 = scmp.ne.s32.totalorder %s301, %s315
      %p317 = scmp.eq.s32.totalorder %s39, 0
      %p318 = por %p316, %p317
      %s320 = sadd.s32 %s319, 1
      %p323 = scmp.eq.s32.totalorder %s33, 1
      %p324 = scmp.ne.s32.totalorder %s319, %s321
      %p325 = scmp.eq.s32.totalorder %s33, 0
      %p326 = por %p324, %p325
      %p327 = scmp.ne.s32.totalorder %s319, %s321
      %p328 = scmp.eq.s32.totalorder %s38, 1
      %p329 = por %p327, %p328
      %p330 = scmp.ne.s32.totalorder %s321, %s322
      %p331 = scmp.eq.s32.totalorder %s38, 0
      %p332 = por %p330, %p331
      %p333 = scmp.ne.s32.totalorder %s321, %s322
      %p334 = scmp.eq.s32.totalorder %s39, 1
      %p335 = por %p333, %p334
      %p337 = scmp.ne.s32.totalorder %s322, %s336
      %p338 = scmp.eq.s32.totalorder %s39, 0
      %p339 = por %p337, %p338
      %s341 = sadd.s32 %s340, 1
      %p344 = scmp.eq.s32.totalorder %s33, 1
      %p345 = scmp.ne.s32.totalorder %s340, %s342
      %p346 = scmp.eq.s32.totalorder %s33, 0
      %p347 = por %p345, %p346
      %p348 = scmp.ne.s32.totalorder %s340, %s342
      %p349 = scmp.eq.s32.totalorder %s38, 1
      %p350 = por %p348, %p349
      %p351 = scmp.ne.s32.totalorder %s342, %s343
      %p352 = scmp.eq.s32.totalorder %s38, 0
      %p353 = por %p351, %p352
      %p354 = scmp.ne.s32.totalorder %s342, %s343
      %p355 = scmp.eq.s32.totalorder %s39, 1
      %p356 = por %p354, %p355
      %p358 = scmp.ne.s32.totalorder %s343, %s357
      %p359 = scmp.eq.s32.totalorder %s39, 0
      %p360 = por %p358, %p359
      %s362 = sadd.s32 %s361, 1
      %p365 = scmp.eq.s32.totalorder %s33, 1
      %p366 = scmp.ne.s32.totalorder %s361, %s363
      %p367 = scmp.eq.s32.totalorder %s33, 0
      %p368 = por %p366, %p367
      %p369 = scmp.ne.s32.totalorder %s361, %s363
      %p370 = scmp.eq.s32.totalorder %s38, 1
      %p371 = por %p369, %p370
      %p372 = scmp.ne.s32.totalorder %s363, %s364
      %p373 = scmp.eq.s32.totalorder %s38, 0
      %p374 = por %p372, %p373
      %p375 = scmp.ne.s32.totalorder %s363, %s364
      %p376 = scmp.eq.s32.totalorder %s39, 1
      %p377 = por %p375, %p376
      %p379 = scmp.ne.s32.totalorder %s364, %s378
      %p380 = scmp.eq.s32.totalorder %s39, 0
      %p381 = por %p379, %p380
      %s383 = sadd.s32 %s382, 1
      %p386 = scmp.eq.s32.totalorder %s33, 1
      %p387 = scmp.ne.s32.totalorder %s382, %s384
      %p388 = scmp.eq.s32.totalorder %s33, 0
      %p389 = por %p387, %p388
      %p390 = scmp.ne.s32.totalorder %s382, %s384
      %p391 = scmp.eq.s32.totalorder %s38, 1
      %p392 = por %p390, %p391
      %p393 = scmp.ne.s32.totalorder %s384, %s385
      %p394 = scmp.eq.s32.totalorder %s38, 0
      %p395 = por %p393, %p394
      %p396 = scmp.ne.s32.totalorder %s384, %s385
      %p397 = scmp.eq.s32.totalorder %s39, 1
      %p398 = por %p396, %p397
      %p400 = scmp.ne.s32.totalorder %s385, %s399
      %p401 = scmp.eq.s32.totalorder %s39, 0
      %p402 = por %p400, %p401
      %s404 = sadd.s32 %s403, 1
      %p407 = scmp.eq.s32.totalorder %s33, 1
      %p408 = scmp.ne.s32.totalorder %s403, %s405
      %p409 = scmp.eq.s32.totalorder %s33, 0
      %p410 = por %p408, %p409
      %p411 = scmp.ne.s32.totalorder %s403, %s405
      %p412 = scmp.eq.s32.totalorder %s38, 1
      %p413 = por %p411, %p412
      %p414 = scmp.ne.s32.totalorder %s405, %s406
      %p415 = scmp.eq.s32.totalorder %s38, 0
      %p416 = por %p414, %p415
      %p417 = scmp.ne.s32.totalorder %s405, %s406
      %p418 = scmp.eq.s32.totalorder %s39, 1
      %p419 = por %p417, %p418
      %p421 = scmp.ne.s32.totalorder %s406, %s420
      %p422 = scmp.eq.s32.totalorder %s39, 0
      %p423 = por %p421, %p422
      %s425 = sadd.s32 %s424, 1
      %p428 = scmp.eq.s32.totalorder %s33, 1
      %p429 = scmp.ne.s32.totalorder %s424, %s426
      %p430 = scmp.eq.s32.totalorder %s33, 0
      %p431 = por %p429, %p430
      %p432 = scmp.ne.s32.totalorder %s424, %s426
      %p433 = scmp.eq.s32.totalorder %s38, 1
      %p434 = por %p432, %p433
      %p435 = scmp.ne.s32.totalorder %s426, %s427
      %p436 = scmp.eq.s32.totalorder %s38, 0
      %p437 = por %p435, %p436
      %p438 = scmp.ne.s32.totalorder %s426, %s427
      %p439 = scmp.eq.s32.totalorder %s39, 1
      %p440 = por %p438, %p439
      %p442 = scmp.ne.s32.totalorder %s427, %s441
      %p443 = scmp.eq.s32.totalorder %s39, 0
      %p444 = por %p442, %p443
      %s446 = sadd.s32 %s445, 1
      %p449 = scmp.eq.s32.totalorder %s33, 1
      %p450 = scmp.ne.s32.totalorder %s445, %s447
      %p451 = scmp.eq.s32.totalorder %s33, 0
      %p452 = por %p450, %p451
      %p453 = scmp.ne.s32.totalorder %s445, %s447
      %p454 = scmp.eq.s32.totalorder %s38, 1
      %p455 = por %p453, %p454
      %p456 = scmp.ne.s32.totalorder %s447, %s448
      %p457 = scmp.eq.s32.totalorder %s38, 0
      %p458 = por %p456, %p457
      %p459 = scmp.ne.s32.totalorder %s447, %s448
      %p460 = scmp.eq.s32.totalorder %s39, 1
      %p461 = por %p459, %p460
      %p463 = scmp.ne.s32.totalorder %s448, %s462
      %p464 = scmp.eq.s32.totalorder %s39, 0
      %p465 = por %p463, %p464
      %s467 = sadd.s32 %s466, 1
      %p470 = scmp.eq.s32.totalorder %s33, 1
      %p471 = scmp.ne.s32.totalorder %s466, %s468
      %p472 = scmp.eq.s32.totalorder %s33, 0
      %p473 = por %p471, %p472
      %p474 = scmp.ne.s32.totalorder %s466, %s468
      %p475 = scmp.eq.s32.totalorder %s38, 1
      %p476 = por %p474, %p475
      %p477 = scmp.ne.s32.totalorder %s468, %s469
      %p478 = scmp.eq.s32.totalorder %s38, 0
      %p479 = por %p477, %p478
      %p480 = scmp.ne.s32.totalorder %s468, %s469
      %p481 = scmp.eq.s32.totalorder %s39, 1
      %p482 = por %p480, %p481
      %p484 = scmp.ne.s32.totalorder %s469, %s483
      %p485 = scmp.eq.s32.totalorder %s39, 0
      %p486 = por %p484, %p485
      %s487 = ssub.s32 %s33, %s40
      %p488 = scmp.eq.s32.totalorder %s487, 0
      %s490 = sadd.s32 %s489, 1
      %s491 = scalar_select %p488, %s489, %s490
      %p494 = pneg %p488
      %p495 = scmp.eq.s32.totalorder %s33, 1
      %p496 = por %p494, %p495
      %p497 = scmp.ne.s32.totalorder %s489, %s492
      %p498 = scmp.eq.s32.totalorder %s33, 0
      %p499 = por %p497, %p498
      %p500 = scmp.ne.s32.totalorder %s489, %s492
      %p501 = scmp.eq.s32.totalorder %s38, 1
      %p502 = por %p500, %p501
      %p503 = scmp.ne.s32.totalorder %s492, %s493
      %p504 = scmp.eq.s32.totalorder %s38, 0
      %p505 = por %p503, %p504
      %p506 = scmp.ne.s32.totalorder %s492, %s493
      %p507 = scmp.eq.s32.totalorder %s39, 1
      %p508 = por %p506, %p507
      %p510 = scmp.ne.s32.totalorder %s493, %s509
      %p511 = scmp.eq.s32.totalorder %s39, 0
      %p512 = por %p510, %p511
      %s513 = ssub.s32 %s33, %s40
      %p514 = scmp.eq.s32.totalorder %s513, 0
      %s516 = sadd.s32 %s515, 1
      %s517 = scalar_select %p514, %s515, %s516
      %p520 = pneg %p514
      %p521 = scmp.eq.s32.totalorder %s33, 1
      %p522 = por %p520, %p521
      %p523 = scmp.ne.s32.totalorder %s515, %s518
      %p524 = scmp.eq.s32.totalorder %s33, 0
      %p525 = por %p523, %p524
      %p526 = scmp.ne.s32.totalorder %s515, %s518
      %p527 = scmp.eq.s32.totalorder %s38, 1
      %p528 = por %p526, %p527
      %p529 = scmp.ne.s32.totalorder %s518, %s519
      %p530 = scmp.eq.s32.totalorder %s38, 0
      %p531 = por %p529, %p530
      %p532 = scmp.ne.s32.totalorder %s518, %s519
      %p533 = scmp.eq.s32.totalorder %s39, 1
      %p534 = por %p532, %p533
      %p536 = scmp.ne.s32.totalorder %s519, %s535
      %p537 = scmp.eq.s32.totalorder %s39, 0
      %p538 = por %p536, %p537
      %s539 = ssub.s32 %s33, %s40
      %p540 = scmp.eq.s32.totalorder %s539, 0
      %s542 = sadd.s32 %s541, 1
      %s543 = scalar_select %p540, %s541, %s542
      %p546 = pneg %p540
      %p547 = scmp.eq.s32.totalorder %s33, 1
      %p548 = por %p546, %p547
      %p549 = scmp.ne.s32.totalorder %s541, %s544
      %p550 = scmp.eq.s32.totalorder %s33, 0
      %p551 = por %p549, %p550
      %p552 = scmp.ne.s32.totalorder %s541, %s544
      %p553 = scmp.eq.s32.totalorder %s38, 1
      %p554 = por %p552, %p553
      %p555 = scmp.ne.s32.totalorder %s544, %s545
      %p556 = scmp.eq.s32.totalorder %s38, 0
      %p557 = por %p555, %p556
      %p558 = scmp.ne.s32.totalorder %s544, %s545
      %p559 = scmp.eq.s32.totalorder %s39, 1
      %p560 = por %p558, %p559
      %p562 = scmp.ne.s32.totalorder %s545, %s561
      %p563 = scmp.eq.s32.totalorder %s39, 0
      %p564 = por %p562, %p563
      %p565 = scmp.le.s32.totalorder 1, %s33
      %p566 = scmp.lt.s32.totalorder %s33, 3
      %p567 = pnand %p565, %p566
      %p568 = pneg %p567
      // Predicated region
      $region9: #{roberta_forward.1} parent=5 // pred_check
        _
      $region10: #{roberta_forward.1} parent=5 // pred_check_branch
        %570 = sbr.rel (%p567) target = $region12
      $region11: #{roberta_forward.1} parent=5 // pred_region
        %s571 = ssub.s32 %s33, 1
        // Predicated region
        $region13: #{roberta_forward.1} parent=11 // pred_check
          %p572 = pneg %p80
        $region14: #{roberta_forward.1} parent=11 // pred_check_branch
          %574 = sbr.rel (%p572) target = $region16
        $region15: #{roberta_forward.1} parent=11 // pred_region
          _
        $region16: #{roberta_forward.1} parent=11 // pred_fallthru
          _
        // Predicated region
        $region17: #{roberta_forward.1} parent=11 // pred_check
          %p575 = pneg %p101
        $region18: #{roberta_forward.1} parent=11 // pred_check_branch
          %577 = sbr.rel (%p575) target = $region20
        $region19: #{roberta_forward.1} parent=11 // pred_region
          _
        $region20: #{roberta_forward.1} parent=11 // pred_fallthru
          _
        // Predicated region
        $region21: #{roberta_forward.1} parent=11 // pred_check
          %p578 = pneg %p122
        $region22: #{roberta_forward.1} parent=11 // pred_check_branch
          %580 = sbr.rel (%p578) target = $region24
        $region23: #{roberta_forward.1} parent=11 // pred_region
          _
        $region24: #{roberta_forward.1} parent=11 // pred_fallthru
          _
        // Predicated region
        $region25: #{roberta_forward.1} parent=11 // pred_check
          %p581 = pneg %p143
        $region26: #{roberta_forward.1} parent=11 // pred_check_branch
          %583 = sbr.rel (%p581) target = $region28
        $region27: #{roberta_forward.1} parent=11 // pred_region
          _
        $region28: #{roberta_forward.1} parent=11 // pred_fallthru
          _
        // Predicated region
        $region29: #{roberta_forward.1} parent=11 // pred_check
          %p584 = pneg %p164
        $region30: #{roberta_forward.1} parent=11 // pred_check_branch
          %586 = sbr.rel (%p584) target = $region32
        $region31: #{roberta_forward.1} parent=11 // pred_region
          _
        $region32: #{roberta_forward.1} parent=11 // pred_fallthru
          _
        // Predicated region
        $region33: #{roberta_forward.1} parent=11 // pred_check
          %p587 = pneg %p185
        $region34: #{roberta_forward.1} parent=11 // pred_check_branch
          %589 = sbr.rel (%p587) target = $region36
        $region35: #{roberta_forward.1} parent=11 // pred_region
          _
        $region36: #{roberta_forward.1} parent=11 // pred_fallthru
          _
        // Predicated region
        $region37: #{roberta_forward.1} parent=11 // pred_check
          %p590 = pneg %p206
        $region38: #{roberta_forward.1} parent=11 // pred_check_branch
          %592 = sbr.rel (%p590) target = $region40
        $region39: #{roberta_forward.1} parent=11 // pred_region
          _
        $region40: #{roberta_forward.1} parent=11 // pred_fallthru
          _
        // Predicated region
        $region41: #{roberta_forward.1} parent=11 // pred_check
          %p593 = pneg %p227
        $region42: #{roberta_forward.1} parent=11 // pred_check_branch
          %595 = sbr.rel (%p593) target = $region44
        $region43: #{roberta_forward.1} parent=11 // pred_region
          _
        $region44: #{roberta_forward.1} parent=11 // pred_fallthru
          _
        // Predicated region
        $region45: #{roberta_forward.1} parent=11 // pred_check
          %p596 = pneg %p248
        $region46: #{roberta_forward.1} parent=11 // pred_check_branch
          %598 = sbr.rel (%p596) target = $region48
        $region47: #{roberta_forward.1} parent=11 // pred_region
          _
        $region48: #{roberta_forward.1} parent=11 // pred_fallthru
          _
        // Predicated region
        $region49: #{roberta_forward.1} parent=11 // pred_check
          %p599 = pneg %p269
        $region50: #{roberta_forward.1} parent=11 // pred_check_branch
          %601 = sbr.rel (%p599) target = $region52
        $region51: #{roberta_forward.1} parent=11 // pred_region
          _
        $region52: #{roberta_forward.1} parent=11 // pred_fallthru
          _
        // Predicated region
        $region53: #{roberta_forward.1} parent=11 // pred_check
          %p602 = pneg %p290
        $region54: #{roberta_forward.1} parent=11 // pred_check_branch
          %604 = sbr.rel (%p602) target = $region56
        $region55: #{roberta_forward.1} parent=11 // pred_region
          _
        $region56: #{roberta_forward.1} parent=11 // pred_fallthru
          _
        // Predicated region
        $region57: #{roberta_forward.1} parent=11 // pred_check
          %p605 = pneg %p311
        $region58: #{roberta_forward.1} parent=11 // pred_check_branch
          %607 = sbr.rel (%p605) target = $region60
        $region59: #{roberta_forward.1} parent=11 // pred_region
          _
        $region60: #{roberta_forward.1} parent=11 // pred_fallthru
          _
        // Predicated region
        $region61: #{roberta_forward.1} parent=11 // pred_check
          %p608 = pneg %p332
        $region62: #{roberta_forward.1} parent=11 // pred_check_branch
          %610 = sbr.rel (%p608) target = $region64
        $region63: #{roberta_forward.1} parent=11 // pred_region
          _
        $region64: #{roberta_forward.1} parent=11 // pred_fallthru
          _
        // Predicated region
        $region65: #{roberta_forward.1} parent=11 // pred_check
          %p611 = pneg %p353
        $region66: #{roberta_forward.1} parent=11 // pred_check_branch
          %613 = sbr.rel (%p611) target = $region68
        $region67: #{roberta_forward.1} parent=11 // pred_region
          _
        $region68: #{roberta_forward.1} parent=11 // pred_fallthru
          _
        // Predicated region
        $region69: #{roberta_forward.1} parent=11 // pred_check
          %p614 = pneg %p374
        $region70: #{roberta_forward.1} parent=11 // pred_check_branch
          %616 = sbr.rel (%p614) target = $region72
        $region71: #{roberta_forward.1} parent=11 // pred_region
          _
        $region72: #{roberta_forward.1} parent=11 // pred_fallthru
          _
        // Predicated region
        $region73: #{roberta_forward.1} parent=11 // pred_check
          %p617 = pneg %p395
        $region74: #{roberta_forward.1} parent=11 // pred_check_branch
          %619 = sbr.rel (%p617) target = $region76
        $region75: #{roberta_forward.1} parent=11 // pred_region
          _
        $region76: #{roberta_forward.1} parent=11 // pred_fallthru
          _
        // Predicated region
        $region77: #{roberta_forward.1} parent=11 // pred_check
          %p620 = pneg %p416
        $region78: #{roberta_forward.1} parent=11 // pred_check_branch
          %622 = sbr.rel (%p620) target = $region80
        $region79: #{roberta_forward.1} parent=11 // pred_region
          _
        $region80: #{roberta_forward.1} parent=11 // pred_fallthru
          _
        // Predicated region
        $region81: #{roberta_forward.1} parent=11 // pred_check
          %p623 = pneg %p437
        $region82: #{roberta_forward.1} parent=11 // pred_check_branch
          %625 = sbr.rel (%p623) target = $region84
        $region83: #{roberta_forward.1} parent=11 // pred_region
          _
        $region84: #{roberta_forward.1} parent=11 // pred_fallthru
          _
        // Predicated region
        $region85: #{roberta_forward.1} parent=11 // pred_check
          %p626 = pneg %p458
        $region86: #{roberta_forward.1} parent=11 // pred_check_branch
          %628 = sbr.rel (%p626) target = $region88
        $region87: #{roberta_forward.1} parent=11 // pred_region
          _
        $region88: #{roberta_forward.1} parent=11 // pred_fallthru
          _
        // Predicated region
        $region89: #{roberta_forward.1} parent=11 // pred_check
          %p629 = pneg %p479
        $region90: #{roberta_forward.1} parent=11 // pred_check_branch
          %631 = sbr.rel (%p629) target = $region92
        $region91: #{roberta_forward.1} parent=11 // pred_region
          _
        $region92: #{roberta_forward.1} parent=11 // pred_fallthru
          _
      $region12: #{roberta_forward.1} parent=5 // pred_fallthru
        _
      %p632 = scmp.lt.s32.totalorder %s33, 2
      // Predicated region
      $region93: #{roberta_forward.1} parent=5 // pred_check
        %p633 = pneg %p632
      $region94: #{roberta_forward.1} parent=5 // pred_check_branch
        %635 = sbr.rel (%p633) target = $region96
      $region95: #{roberta_forward.1} parent=5 // pred_region
        // Predicated region
        $region97: #{roberta_forward.1} parent=95 // pred_check
          %p636 = pneg %p53
        $region98: #{roberta_forward.1} parent=95 // pred_check_branch
          %638 = sbr.rel (%p636) target = $region100
        $region99: #{roberta_forward.1} parent=95 // pred_region
          %p639 = scmp.lt.s32.totalorder %s33, 1
          %s640 = scalar_select %p639, %s33, 1
          %s641 = smul.addr %s640, 8
          %s642 = scalar_lea.vmem %s0, %s641
        $region100: #{roberta_forward.1} parent=95 // pred_fallthru
          _
      $region96: #{roberta_forward.1} parent=5 // pred_fallthru
        _
      %p643 = scmp.le.s32.totalorder 1, %s33
      %p644 = scmp.lt.s32.totalorder %s33, 3
      %p645 = pnand %p643, %p644
      %p646 = pneg %p645
      // Predicated region
      $region101: #{roberta_forward.1} parent=5 // pred_check
        _
      $region102: #{roberta_forward.1} parent=5 // pred_check_branch
        %648 = sbr.rel (%p645) target = $region104
      $region103: #{roberta_forward.1} parent=5 // pred_region
        %s649 = ssub.s32 %s33, 1
        %p650 = scmp.lt.s32.totalorder %s38, 1
        %s651 = scalar_select %p650, %s38, 1
        %s652 = smul.addr %s651, 8
        %s653 = scalar_lea.vmem %s0, %s652
        %p654 = pneg %p59
        %p655 = pneg %p56
        %p656 = pneg %p80
        %p657 = pneg %p77
        %p658 = pneg %p101
        %p659 = pneg %p98
        %p660 = pneg %p122
        %p661 = pneg %p119
        %p662 = pneg %p143
        %p663 = pneg %p140
        %p664 = pneg %p164
        %p665 = pneg %p161
        %p666 = pneg %p185
        %p667 = pneg %p182
        %p668 = pneg %p206
        %p669 = pneg %p203
        %p670 = pneg %p227
        %p671 = pneg %p224
        %p672 = pneg %p248
        %p673 = pneg %p245
        %p674 = pneg %p269
        %p675 = pneg %p266
        %p676 = pneg %p290
        %p677 = pneg %p287
        %p678 = pneg %p311
        %p679 = pneg %p308
        %p680 = pneg %p332
        %p681 = pneg %p329
        %p682 = pneg %p353
        %p683 = pneg %p350
        %p684 = pneg %p374
        %p685 = pneg %p371
        %p686 = pneg %p395
        %p687 = pneg %p392
        %p688 = pneg %p416
        %p689 = pneg %p413
        %p690 = pneg %p437
        %p691 = pneg %p434
        %p692 = pneg %p458
        %p693 = pneg %p455
        %p694 = pneg %p479
        %p695 = pneg %p476
        %p696 = pneg %p505
        %p697 = pneg %p502
        %s698 = sand.u32 %s492, 1
        %s699 = scalar_lea.sflag [#allocation3], %s698
        %s700 = sand.u32 %s492, 1
        %s701 = smul.addr %s700, 8
        %s702 = scalar_lea.vmem [#allocation2], %s701
        %p703 = pneg %p531
        %p704 = pneg %p528
        %s705 = sand.u32 %s518, 1
        %s706 = sand.u32 %s518, 1
        %s707 = smul.addr %s706, 24
        %s708 = scalar_lea.vmem [#allocation4], %s707
        %p709 = pneg %p557
        %p710 = pneg %p554
        %s711 = sand.u32 %s544, 1
        %s712 = sand.u32 %s544, 1
        %s713 = smul.addr %s712, 64
        %s714 = scalar_lea.vmem [#allocation5], %s713
        %p715 = scmp.lt.s32.totalorder %s38, 1
        %s716 = scalar_select %p715, %s38, 1
        %s717 = smul.addr %s716, 8
        %s718 = scalar_lea.vmem %s0, %s717
        %v720 = vld [vmem:[%s718] sm:$0xff]
        %v721 = vld [vmem:[%s1] sm:$0x1]
        %v722 = vld [vmem:[%s2] sm:$0x1]
        %vm723 = vcmask 261120
        %v724 = vsel %vm723, %v720, 0.0
        %725 = vadd.xlane.f32.xlu0 %v724
        %v726 = vpop.xlane.xlu0 %725
        %v727 = vrcp.pop 32.0
        %v728 = vmul.f32 %v726, %v727
        %v729 = vsub.f32 %v720, %v728
        %v730 = vmul.f32 %v729, %v729
        %v731 = vsel %vm723, %v730, 0.0
        %732 = vadd.xlane.f32.xlu0 %v731
        %v733 = vpop.xlane.xlu0 %732
        %v734 = vmul.f32 %v733, %v727
        %v735 = vadd.f32 %v734, 1e-05
        %v736 = vrsqrt.pop %v735
        %v737 = vmul.f32 %v729, %v736
        %v739 = vlaneseq
        %v740 = vshrl.u32 %v739, 7
        %v741 = vsub.s32 0, %v740
        %v742 = vrot.slane %v721, %v741
        %v744 = vmul.f32 %v737, %v742
        %v746 = vlaneseq
        %v747 = vshrl.u32 %v746, 7
        %v748 = vsub.s32 0, %v747
        %v749 = vrot.slane %v722, %v748
        %v751 = vadd.f32 %v744, %v749
        %752 = vst.msk [vmem:[%s708] sm:$0xff] %vm723, %v751
        %v753 = vld [vmem:[%s3] sm:$0xf]
        %v754 = vld [vmem:[%s3 + $0x4] sm:$0xf]
        %v755 = vld [vmem:[%s3 + $0x8] sm:$0xf]
        %v756 = vld [vmem:[%s3 + $0xc] sm:$0xf]
        %v757 = vld [vmem:[%s4] sm:$0x1]
        %v758 = vpack.c.bf16 %v751, %v751
        %v760 = vlaneseq
        %v761 = vshrl.u32 %v760, 7
        %v762 = vsub.s32 0, %v761
        %v763 = vrot.slane %v757, %v762
        %v769 = vunpack.c.l.b16 %v753
        %v770 = vunpack.c.l.b16 %v754
        %v771 = vunpack.c.l.b16 %v755
        %v772 = vunpack.c.l.b16 %v756
        %v773 = vpack.c.b16 %v770, %v769
        %v774 = vpack.c.b16 %v772, %v771
        %v778 = vsel %vm723, %v758, 0
        %780 = vmatprep.subr.bf16.mxu0 0
        %781 = vmatpush1.bf16.msra.mxu0 %v773
        %782 = vmatprep.subr.bf16.mxu0 0
        %783 = vmatpush1.bf16.msra.mxu0 %v774
        %784 = vmatprep.subr.bf16.mxu0 0
        %785 = vmatpush1.bf16.msra.mxu0 0
        %786 = vmatprep.subr.bf16.mxu0 0
        %787 = vmatpush1.bf16.msra.mxu0 0
        %788 = vmatprep.subr.bf16.mxu0 0
        %789 = vmatpush1.bf16.msra.mxu0 0
        %790 = vmatprep.subr.bf16.mxu0 0
        %791 = vmatpush1.bf16.msra.mxu0 0
        %792 = vmatprep.subr.bf16.mxu0 0
        %793 = vmatpush1.bf16.msra.mxu0 0
        %794 = vmatprep.subr.bf16.mxu0 0
        %795 = vmatpush1.bf16.msra.mxu0 0
        %796 = vmatprep.subr.bf16.mxu0 0
        %797 = vmatpush1.bf16.msra.mxu0 0
        %798 = vmatprep.subr.bf16.mxu0 0
        %799 = vmatpush1.bf16.msra.mxu0 0
        %800 = vmatprep.subr.bf16.mxu0 0
        %801 = vmatpush1.bf16.msra.mxu0 0
        %802 = vmatprep.subr.bf16.mxu0 0
        %803 = vmatpush1.bf16.msra.mxu0 0
        %804 = vmatprep.subr.bf16.mxu0 0
        %805 = vmatpush1.bf16.msra.mxu0 0
        %806 = vmatprep.subr.bf16.mxu0 0
        %807 = vmatpush1.bf16.msra.mxu0 0
        %808 = vmatprep.subr.bf16.mxu0 0
        %809 = vmatpush1.bf16.msra.mxu0 0
        %810 = vmatprep.subr.bf16.mxu0 0
        %811 = vmatpush1.bf16.msra.mxu0 0
        %812 = vmatprep.mubr.bf16.mxu0 0
        %813 = vmatmul.mubr.bf16.gmra.mrb[0].mxu0 %v778
        %v814 = vpop.f32.mrb[0].mxu0
        %v815 = vadd.f32 %v763, %v814
        %v816 = vpop.f32.mrb[0].mxu0
        %v817 = vpop.f32.mrb[0].mxu0
        %v818 = vpop.f32.mrb[0].mxu0
        %819 = vdwg.mxu0
        %821 = vrot.lane.b32.xlu0 %v815, 96
        %v822 = vpop.permute.xlu0 %821
        %vm823 = vcmask 64512
        %v824 = vsel %vm823, %v815, 0
        %v826 = vsel %vm823, %v822, 0
        %828 = vmatprep.subr.mxu0 0.0
        %829 = vmatpush1.xpose.msra.mxu0 %v826
        %830 = vmatprep.subr.mxu0 0.0
        %831 = vmatpush1.xpose.msra.mxu0 0.0
        %832 = vmatprep.subr.mxu0 0.0
        %833 = vmatpush1.xpose.msra.mxu0 0.0
        %834 = vmatprep.subr.mxu0 0.0
        %835 = vmatpush1.xpose.msra.mxu0 0.0
        %836 = vmatprep.subr.mxu0 0.0
        %837 = vmatpush1.xpose.msra.mxu0 0.0
        %838 = vmatprep.subr.mxu0 0.0
        %839 = vmatpush1.xpose.msra.mxu0 0.0
        %840 = vmatprep.subr.mxu0 0.0
        %841 = vmatpush1.xpose.msra.mxu0 0.0
        %842 = vmatprep.subr.mxu0 0.0
        %843 = vmatpush1.xpose.msra.mxu0 0.0
        %844 = vmatprep.subr.mxu0 0.0
        %845 = vmatpush1.xpose.msra.mxu0 0.0
        %846 = vmatprep.subr.mxu0 0.0
        %847 = vmatpush1.xpose.msra.mxu0 0.0
        %848 = vmatprep.subr.mxu0 0.0
        %849 = vmatpush1.xpose.msra.mxu0 0.0
        %850 = vmatprep.subr.mxu0 0.0
        %851 = vmatpush1.xpose.msra.mxu0 0.0
        %852 = vmatprep.subr.mxu0 0.0
        %853 = vmatpush1.xpose.msra.mxu0 0.0
        %854 = vmatprep.subr.mxu0 0.0
        %855 = vmatpush1.xpose.msra.mxu0 0.0
        %856 = vmatprep.subr.mxu0 0.0
        %857 = vmatpush1.xpose.msra.mxu0 0.0
        %858 = vmatprep.subr.mxu0 0.0
        %859 = vmatpush1.xpose.msra.mxu0 0.0
        %860 = vmatprep.subr.mxu0 0.0
        %861 = vmatpush1.xpose.msra.mxu0 0.0
        %862 = vmatprep.subr.mxu0 0.0
        %863 = vmatpush1.xpose.msra.mxu0 0.0
        %864 = vmatprep.subr.mxu0 0.0
        %865 = vmatpush1.xpose.msra.mxu0 0.0
        %866 = vmatprep.subr.mxu0 0.0
        %867 = vmatpush1.xpose.msra.mxu0 0.0
        %868 = vmatprep.subr.mxu0 0.0
        %869 = vmatpush1.xpose.msra.mxu0 0.0
        %870 = vmatprep.subr.mxu0 0.0
        %871 = vmatpush1.xpose.msra.mxu0 0.0
        %872 = vmatprep.subr.mxu0 0.0
        %873 = vmatpush1.xpose.msra.mxu0 0.0
        %874 = vmatprep.subr.mxu0 0.0
        %875 = vmatpush1.xpose.msra.mxu0 0.0
        %876 = vmatprep.subr.mxu0 0.0
        %877 = vmatpush1.xpose.msra.mxu0 0.0
        %878 = vmatprep.subr.mxu0 0.0
        %879 = vmatpush1.xpose.msra.mxu0 0.0
        %880 = vmatprep.subr.mxu0 0.0
        %881 = vmatpush1.xpose.msra.mxu0 0.0
        %882 = vmatprep.subr.mxu0 0.0
        %883 = vmatpush1.xpose.msra.mxu0 0.0
        %884 = vmatprep.subr.mxu0 0.0
        %885 = vmatpush1.xpose.msra.mxu0 0.0
        %886 = vmatprep.subr.mxu0 0.0
        %887 = vmatpush1.xpose.msra.mxu0 0.0
        %888 = vmatprep.subr.mxu0 0.0
        %889 = vmatpush1.xpose.msra.mxu0 0.0
        %890 = vmatprep.subr.mxu0 0.0
        %891 = vmatpush1.xpose.msra.mxu0 0.0
        %892 = vmatprep.mubr.f32.mxu0 0.0
        %893 = vmatmul.mubr.f32.gmra.mrb[0].mxu0 %v824
        %v894 = vpop.f32.mrb[0].mxu0
        %v895 = vadd.f32 0.0, %v894
        %v896 = vpop.f32.mrb[0].mxu0
        %897 = vdwg.mxu0
        %v898 = vsel %vm823, %v895, -inf
        %899 = vmax.xlane.f32.xlu0 %v898
        %v900 = vpop.xlane.xlu0 %899
        %v901 = vsub.f32 %v895, %v900
        %v902 = vmul.f32 %v901, 1.442695
        %v903 = vpow.pop %v902
        %v904 = vsel %vm823, %v903, 0.0
        %905 = vadd.xlane.f32.xlu0 %v904
        %v906 = vpop.xlane.xlu0 %905
        %v907 = vrcp.pop %v906
        %v908 = vmul.f32 %v903, %v907
        %909 = vst.msk [vmem:[%s714] sm:$0xff] %vm823, %v908
        %910 = vrot.lane.b32.xlu0 %v815, 64
        %v911 = vpop.permute.xlu0 %910
        %v914 = vsel %vm823, %v908, 0
        %916 = vmatprep.subr.mxu0 0.0
        %917 = vmatpush1.msra.mxu0 %v911
        %918 = vmatprep.subr.mxu0 0.0
        %919 = vmatpush1.msra.mxu0 0.0
        %920 = vmatprep.subr.mxu0 0.0
        %921 = vmatpush1.msra.mxu0 0.0
        %922 = vmatprep.subr.mxu0 0.0
        %923 = vmatpush1.msra.mxu0 0.0
        %924 = vmatprep.subr.mxu0 0.0
        %925 = vmatpush1.msra.mxu0 0.0
        %926 = vmatprep.subr.mxu0 0.0
        %927 = vmatpush1.msra.mxu0 0.0
        %928 = vmatprep.subr.mxu0 0.0
        %929 = vmatpush1.msra.mxu0 0.0
        %930 = vmatprep.subr.mxu0 0.0
        %931 = vmatpush1.msra.mxu0 0.0
        %932 = vmatprep.subr.mxu0 0.0
        %933 = vmatpush1.msra.mxu0 0.0
        %934 = vmatprep.subr.mxu0 0.0
        %935 = vmatpush1.msra.mxu0 0.0
        %936 = vmatprep.subr.mxu0 0.0
        %937 = vmatpush1.msra.mxu0 0.0
        %938 = vmatprep.subr.mxu0 0.0
        %939 = vmatpush1.msra.mxu0 0.0
        %940 = vmatprep.subr.mxu0 0.0
        %941 = vmatpush1.msra.mxu0 0.0
        %942 = vmatprep.subr.mxu0 0.0
        %943 = vmatpush1.msra.mxu0 0.0
        %944 = vmatprep.subr.mxu0 0.0
        %945 = vmatpush1.msra.mxu0 0.0
        %946 = vmatprep.subr.mxu0 0.0
        %947 = vmatpush1.msra.mxu0 0.0
        %948 = vmatprep.subr.mxu0 0.0
        %949 = vmatpush1.msra.mxu0 0.0
        %950 = vmatprep.subr.mxu0 0.0
        %951 = vmatpush1.msra.mxu0 0.0
        %952 = vmatprep.subr.mxu0 0.0
        %953 = vmatpush1.msra.mxu0 0.0
        %954 = vmatprep.subr.mxu0 0.0
        %955 = vmatpush1.msra.mxu0 0.0
        %956 = vmatprep.subr.mxu0 0.0
        %957 = vmatpush1.msra.mxu0 0.0
        %958 = vmatprep.subr.mxu0 0.0
        %959 = vmatpush1.msra.mxu0 0.0
        %960 = vmatprep.subr.mxu0 0.0
        %961 = vmatpush1.msra.mxu0 0.0
        %962 = vmatprep.subr.mxu0 0.0
        %963 = vmatpush1.msra.mxu0 0.0
        %964 = vmatprep.subr.mxu0 0.0
        %965 = vmatpush1.msra.mxu0 0.0
        %966 = vmatprep.subr.mxu0 0.0
        %967 = vmatpush1.msra.mxu0 0.0
        %968 = vmatprep.subr.mxu0 0.0
        %969 = vmatpush1.msra.mxu0 0.0
        %970 = vmatprep.subr.mxu0 0.0
        %971 = vmatpush1.msra.mxu0 0.0
        %972 = vmatprep.subr.mxu0 0.0
        %973 = vmatpush1.msra.mxu0 0.0
        %974 = vmatprep.subr.mxu0 0.0
        %975 = vmatpush1.msra.mxu0 0.0
        %976 = vmatprep.subr.mxu0 0.0
        %977 = vmatpush1.msra.mxu0 0.0
        %978 = vmatprep.subr.mxu0 0.0
        %979 = vmatpush1.msra.mxu0 0.0
        %980 = vmatprep.mubr.f32.mxu0 0.0
        %981 = vmatmul.mubr.f32.gmra.mrb[0].mxu0 %v914
        %v982 = vpop.f32.mrb[0].mxu0
        %v983 = vadd.f32 0.0, %v982
        %v984 = vpop.f32.mrb[0].mxu0
        %985 = vdwg.mxu0
        %986 = vrot.lane.b32.xlu0 %v815, 120
        %v987 = vpop.permute.xlu0 %986
        %988 = vrot.lane.b32.xlu0 %v815, 88
        %v989 = vpop.permute.xlu0 %988
        %v990 = vsel %vm823, %v987, 0
        %v992 = vsel %vm823, %v989, 0
        %994 = vmatprep.subr.mxu0 0.0
        %995 = vmatpush1.xpose.msra.mxu0 %v992
        %996 = vmatprep.subr.mxu0 0.0
        %997 = vmatpush1.xpose.msra.mxu0 0.0
        %998 = vmatprep.subr.mxu0 0.0
        %999 = vmatpush1.xpose.msra.mxu0 0.0
        %1000 = vmatprep.subr.mxu0 0.0
        %1001 = vmatpush1.xpose.msra.mxu0 0.0
        %1002 = vmatprep.subr.mxu0 0.0
        %1003 = vmatpush1.xpose.msra.mxu0 0.0
        %1004 = vmatprep.subr.mxu0 0.0
        %1005 = vmatpush1.xpose.msra.mxu0 0.0
        %1006 = vmatprep.subr.mxu0 0.0
        %1007 = vmatpush1.xpose.msra.mxu0 0.0
        %1008 = vmatprep.subr.mxu0 0.0
        %1009 = vmatpush1.xpose.msra.mxu0 0.0
        %1010 = vmatprep.subr.mxu0 0.0
        %1011 = vmatpush1.xpose.msra.mxu0 0.0
        %1012 = vmatprep.subr.mxu0 0.0
        %1013 = vmatpush1.xpose.msra.mxu0 0.0
        %1014 = vmatprep.subr.mxu0 0.0
        %1015 = vmatpush1.xpose.msra.mxu0 0.0
        %1016 = vmatprep.subr.mxu0 0.0
        %1017 = vmatpush1.xpose.msra.mxu0 0.0
        %1018 = vmatprep.subr.mxu0 0.0
        %1019 = vmatpush1.xpose.msra.mxu0 0.0
        %1020 = vmatprep.subr.mxu0 0.0
        %1021 = vmatpush1.xpose.msra.mxu0 0.0
        %1022 = vmatprep.subr.mxu0 0.0
        %1023 = vmatpush1.xpose.msra.mxu0 0.0
        %1024 = vmatprep.subr.mxu0 0.0
        %1025 = vmatpush1.xpose.msra.mxu0 0.0
        %1026 = vmatprep.subr.mxu0 0.0
        %1027 = vmatpush1.xpose.msra.mxu0 0.0
        %1028 = vmatprep.subr.mxu0 0.0
        %1029 = vmatpush1.xpose.msra.mxu0 0.0
        %1030 = vmatprep.subr.mxu0 0.0
        %1031 = vmatpush1.xpose.msra.mxu0 0.0
        %1032 = vmatprep.subr.mxu0 0.0
        %1033 = vmatpush1.xpose.msra.mxu0 0.0
        %1034 = vmatprep.subr.mxu0 0.0
        %1035 = vmatpush1.xpose.msra.mxu0 0.0
        %1036 = vmatprep.subr.mxu0 0.0
        %1037 = vmatpush1.xpose.msra.mxu0 0.0
        %1038 = vmatprep.subr.mxu0 0.0
        %1039 = vmatpush1.xpose.msra.mxu0 0.0
        %1040 = vmatprep.subr.mxu0 0.0
        %1041 = vmatpush1.xpose.msra.mxu0 0.0
        %1042 = vmatprep.subr.mxu0 0.0
        %1043 = vmatpush1.xpose.msra.mxu0 0.0
        %1044 = vmatprep.subr.mxu0 0.0
        %1045 = vmatpush1.xpose.msra.mxu0 0.0
        %1046 = vmatprep.subr.mxu0 0.0
        %1047 = vmatpush1.xpose.msra.mxu0 0.0
        %1048 = vmatprep.subr.mxu0 0.0
        %1049 = vmatpush1.xpose.msra.mxu0 0.0
        %1050 = vmatprep.subr.mxu0 0.0
        %1051 = vmatpush1.xpose.msra.mxu0 0.0
        %1052 = vmatprep.subr.mxu0 0.0
        %1053 = vmatpush1.xpose.msra.mxu0 0.0
        %1054 = vmatprep.subr.mxu0 0.0
        %1055 = vmatpush1.xpose.msra.mxu0 0.0
        %1056 = vmatprep.subr.mxu0 0.0
        %1057 = vmatpush1.xpose.msra.mxu0 0.0
        %1058 = vmatprep.mubr.f32.mxu0 0.0
        %1059 = vmatmul.mubr.f32.gmra.mrb[0].mxu0 %v990
        %v1060 = vpop.f32.mrb[0].mxu0
        %v1061 = vadd.f32 0.0, %v1060
        %v1062 = vpop.f32.mrb[0].mxu0
        %1063 = vdwg.mxu0
        %v1064 = vsel %vm823, %v1061, -inf
        %1065 = vmax.xlane.f32.xlu0 %v1064
        %v1066 = vpop.xlane.xlu0 %1065
        %v1067 = vsub.f32 %v1061, %v1066
        %v1068 = vmul.f32 %v1067, 1.442695
        %v1069 = vpow.pop %v1068
        %v1070 = vsel %vm823, %v1069, 0.0
        %1071 = vadd.xlane.f32.xlu0 %v1070
        %v1072 = vpop.xlane.xlu0 %1071
        %v1073 = vrcp.pop %v1072
        %v1074 = vmul.f32 %v1069, %v1073
        %s1075 = scalar_lea.vmem %s714, 8 [#allocation5]
        %1076 = vst.msk [vmem:[%s1075] sm:$0xff] %vm823, %v1074
        %1077 = vrot.lane.b32.xlu0 %v815, 56
        %v1078 = vpop.permute.xlu0 %1077
        %v1081 = vsel %vm823, %v1074, 0
        %1083 = vmatprep.subr.mxu0 0.0
        %1084 = vmatpush1.msra.mxu0 %v1078
        %1085 = vmatprep.subr.mxu0 0.0
        %1086 = vmatpush1.msra.mxu0 0.0
        %1087 = vmatprep.subr.mxu0 0.0
        %1088 = vmatpush1.msra.mxu0 0.0
        %1089 = vmatprep.subr.mxu0 0.0
        %1090 = vmatpush1.msra.mxu0 0.0
        %1091 = vmatprep.subr.mxu0 0.0
        %1092 = vmatpush1.msra.mxu0 0.0
        %1093 = vmatprep.subr.mxu0 0.0
        %1094 = vmatpush1.msra.mxu0 0.0
        %1095 = vmatprep.subr.mxu0 0.0
        %1096 = vmatpush1.msra.mxu0 0.0
        %1097 = vmatprep.subr.mxu0 0.0
        %1098 = vmatpush1.msra.mxu0 0.0
        %1099 = vmatprep.subr.mxu0 0.0
        %1100 = vmatpush1.msra.mxu0 0.0
        %1101 = vmatprep.subr.mxu0 0.0
        %1102 = vmatpush1.msra.mxu0 0.0
        %1103 = vmatprep.subr.mxu0 0.0
        %1104 = vmatpush1.msra.mxu0 0.0
        %1105 = vmatprep.subr.mxu0 0.0
        %1106 = vmatpush1.msra.mxu0 0.0
        %1107 = vmatprep.subr.mxu0 0.0
        %1108 = vmatpush1.msra.mxu0 0.0
        %1109 = vmatprep.subr.mxu0 0.0
        %1110 = vmatpush1.msra.mxu0 0.0
        %1111 = vmatprep.subr.mxu0 0.0
        %1112 = vmatpush1.msra.mxu0 0.0
        %1113 = vmatprep.subr.mxu0 0.0
        %1114 = vmatpush1.msra.mxu0 0.0
        %1115 = vmatprep.subr.mxu0 0.0
        %1116 = vmatpush1.msra.mxu0 0.0
        %1117 = vmatprep.subr.mxu0 0.0
        %1118 = vmatpush1.msra.mxu0 0.0
        %1119 = vmatprep.subr.mxu0 0.0
        %1120 = vmatpush1.msra.mxu0 0.0
        %1121 = vmatprep.subr.mxu0 0.0
        %1122 = vmatpush1.msra.mxu0 0.0
        %1123 = vmatprep.subr.mxu0 0.0
        %1124 = vmatpush1.msra.mxu0 0.0
        %1125 = vmatprep.subr.mxu0 0.0
        %1126 = vmatpush1.msra.mxu0 0.0
        %1127 = vmatprep.subr.mxu0 0.0
        %1128 = vmatpush1.msra.mxu0 0.0
        %1129 = vmatprep.subr.mxu0 0.0
        %1130 = vmatpush1.msra.mxu0 0.0
        %1131 = vmatprep.subr.mxu0 0.0
        %1132 = vmatpush1.msra.mxu0 0.0
        %1133 = vmatprep.subr.mxu0 0.0
        %1134 = vmatpush1.msra.mxu0 0.0
        %1135 = vmatprep.subr.mxu0 0.0
        %1136 = vmatpush1.msra.mxu0 0.0
        %1137 = vmatprep.subr.mxu0 0.0
        %1138 = vmatpush1.msra.mxu0 0.0
        %1139 = vmatprep.subr.mxu0 0.0
        %1140 = vmatpush1.msra.mxu0 0.0
        %1141 = vmatprep.subr.mxu0 0.0
        %1142 = vmatpush1.msra.mxu0 0.0
        %1143 = vmatprep.subr.mxu0 0.0
        %1144 = vmatpush1.msra.mxu0 0.0
        %1145 = vmatprep.subr.mxu0 0.0
        %1146 = vmatpush1.msra.mxu0 0.0
        %1147 = vmatprep.mubr.f32.mxu0 0.0
        %1148 = vmatmul.mubr.f32.gmra.mrb[0].mxu0 %v1081
        %v1149 = vpop.f32.mrb[0].mxu0
        %v1150 = vadd.f32 0.0, %v1149
        %v1151 = vpop.f32.mrb[0].mxu0
        %1152 = vdwg.mxu0
        %1153 = vrot.lane.b32.xlu0 %v815, 112
        %v1154 = vpop.permute.xlu0 %1153
        %1155 = vrot.lane.b32.xlu0 %v815, 80
        %v1156 = vpop.permute.xlu0 %1155
        %v1157 = vsel %vm823, %v1154, 0
        %v1159 = vsel %vm823, %v1156, 0
        %1161 = vmatprep.subr.mxu0 0.0
        %1162 = vmatpush1.xpose.msra.mxu0 %v1159
        %1163 = vmatprep.subr.mxu0 0.0
        %1164 = vmatpush1.xpose.msra.mxu0 0.0
        %1165 = vmatprep.subr.mxu0 0.0
        %1166 = vmatpush1.xpose.msra.mxu0 0.0
        %1167 = vmatprep.subr.mxu0 0.0
        %1168 = vmatpush1.xpose.msra.mxu0 0.0
        %1169 = vmatprep.subr.mxu0 0.0
        %1170 = vmatpush1.xpose.msra.mxu0 0.0
        %1171 = vmatprep.subr.mxu0 0.0
        %1172 = vmatpush1.xpose.msra.mxu0 0.0
        %1173 = vmatprep.subr.mxu0 0.0
        %1174 = vmatpush1.xpose.msra.mxu0 0.0
        %1175 = vmatprep.subr.mxu0 0.0
        %1176 = vmatpush1.xpose.msra.mxu0 0.0
        %1177 = vmatprep.subr.mxu0 0.0
        %1178 = vmatpush1.xpose.msra.mxu0 0.0
        %1179 = vmatprep.subr.mxu0 0.0
        %1180 = vmatpush1.xpose.msra.mxu0 0.0
        %1181 = vmatprep.subr.mxu0 0.0
        %1182 = vmatpush1.xpose.msra.mxu0 0.0
        %1183 = vmatprep.subr.mxu0 0.0
        %1184 = vmatpush1.xpose.msra.mxu0 0.0
        %1185 = vmatprep.subr.mxu0 0.0
        %1186 = vmatpush1.xpose.msra.mxu0 0.0
        %1187 = vmatprep.subr.mxu0 0.0
        %1188 = vmatpush1.xpose.msra.mxu0 0.0
        %1189 = vmatprep.subr.mxu0 0.0
        %1190 = vmatpush1.xpose.msra.mxu0 0.0
        %1191 = vmatprep.subr.mxu0 0.0
        %1192 = vmatpush1.xpose.msra.mxu0 0.0
        %1193 = vmatprep.subr.mxu0 0.0
        %1194 = vmatpush1.xpose.msra.mxu0 0.0
        %1195 = vmatprep.subr.mxu0 0.0
        %1196 = vmatpush1.xpose.msra.mxu0 0.0
        %1197 = vmatprep.subr.mxu0 0.0
        %1198 = vmatpush1.xpose.msra.mxu0 0.0
        %1199 = vmatprep.subr.mxu0 0.0
        %1200 = vmatpush1.xpose.msra.mxu0 0.0
        %1201 = vmatprep.subr.mxu0 0.0
        %1202 = vmatpush1.xpose.msra.mxu0 0.0
        %1203 = vmatprep.subr.mxu0 0.0
        %1204 = vmatpush1.xpose.msra.mxu0 0.0
        %1205 = vmatprep.subr.mxu0 0.0
        %1206 = vmatpush1.xpose.msra.mxu0 0.0
        %1207 = vmatprep.subr.mxu0 0.0
        %1208 = vmatpush1.xpose.msra.mxu0 0.0
        %1209 = vmatprep.subr.mxu0 0.0
        %1210 = vmatpush1.xpose.msra.mxu0 0.0
        %1211 = vmatprep.subr.mxu0 0.0
        %1212 = vmatpush1.xpose.msra.mxu0 0.0
        %1213 = vmatprep.subr.mxu0 0.0
        %1214 = vmatpush1.xpose.msra.mxu0 0.0
        %1215 = vmatprep.subr.mxu0 0.0
        %1216 = vmatpush1.xpose.msra.mxu0 0.0
        %1217 = vmatprep.subr.mxu0 0.0
        %1218 = vmatpush1.xpose.msra.mxu0 0.0
        %1219 = vmatprep.subr.mxu0 0.0
        %1220 = vmatpush1.xpose.msra.mxu0 0.0
        %1221 = vmatprep.subr.mxu0 0.0
        %1222 = vmatpush1.xpose.msra.mxu0 0.0
        %1223 = vmatprep.subr.mxu0 0.0
        %1224 = vmatpush1.xpose.msra.mxu0 0.0
        %1225 = vmatprep.mubr.f32.mxu0 0.0
        %1226 = vmatmul.mubr.f32.gmra.mrb[0].mxu0 %v1157
        %v1227 = vpop.f32.mrb[0].mxu0
        %v1228 = vadd.f32 0.0, %v1227
        %v1229 = vpop.f32.mrb[0].mxu0
        %1230 = vdwg.mxu0
        %v1231 = vsel %vm823, %v1228, -inf
        %1232 = vmax.xlane.f32.xlu0 %v1231
        %v1233 = vpop.xlane.xlu0 %1232
        %v1234 = vsub.f32 %v1228, %v1233
        %v1235 = vmul.f32 %v1234, 1.442695
        %v1236 = vpow.pop %v1235
        %v1237 = vsel %vm823, %v1236, 0.0
        %1238 = vadd.xlane.f32.xlu0 %v1237
        %v1239 = vpop.xlane.xlu0 %1238
        %v1240 = vrcp.pop %v1239
        %v1241 = vmul.f32 %v1236, %v1240
        %s1242 = scalar_lea.vmem %s714, 16 [#allocation5]
        %1243 = vst.msk [vmem:[%s1242] sm:$0xff] %vm823, %v1241
        %1244 = vrot.lane.b32.xlu0 %v815, 48
        %v1245 = vpop.permute.xlu0 %1244
        %v1248 = vsel %vm823, %v1241, 0
        %1250 = vmatprep.subr.mxu0 0.0
        %1251 = vmatpush1.msra.mxu0 %v1245
        %1252 = vmatprep.subr.mxu0 0.0
        %1253 = vmatpush1.msra.mxu0 0.0
        %1254 = vmatprep.subr.mxu0 0.0
        %1255 = vmatpush1.msra.mxu0 0.0
        %1256 = vmatprep.subr.mxu0 0.0
        %1257 = vmatpush1.msra.mxu0 0.0
        %1258 = vmatprep.subr.mxu0 0.0
        %1259 = vmatpush1.msra.mxu0 0.0
        %1260 = vmatprep.subr.mxu0 0.0
        %1261 = vmatpush1.msra.mxu0 0.0
        %1262 = vmatprep.subr.mxu0 0.0
        %1263 = vmatpush1.msra.mxu0 0.0
        %1264 = vmatprep.subr.mxu0 0.0
        %1265 = vmatpush1.msra.mxu0 0.0
        %1266 = vmatprep.subr.mxu0 0.0
        %1267 = vmatpush1.msra.mxu0 0.0
        %1268 = vmatprep.subr.mxu0 0.0
        %1269 = vmatpush1.msra.mxu0 0.0
        %1270 = vmatprep.subr.mxu0 0.0
        %1271 = vmatpush1.msra.mxu0 0.0
        %1272 = vmatprep.subr.mxu0 0.0
        %1273 = vmatpush1.msra.mxu0 0.0
        %1274 = vmatprep.subr.mxu0 0.0
        %1275 = vmatpush1.msra.mxu0 0.0
        %1276 = vmatprep.subr.mxu0 0.0
        %1277 = vmatpush1.msra.mxu0 0.0
        %1278 = vmatprep.subr.mxu0 0.0
        %1279 = vmatpush1.msra.mxu0 0.0
        %1280 = vmatprep.subr.mxu0 0.0
        %1281 = vmatpush1.msra.mxu0 0.0
        %1282 = vmatprep.subr.mxu0 0.0
        %1283 = vmatpush1.msra.mxu0 0.0
        %1284 = vmatprep.subr.mxu0 0.0
        %1285 = vmatpush1.msra.mxu0 0.0
        %1286 = vmatprep.subr.mxu0 0.0
        %1287 = vmatpush1.msra.mxu0 0.0
        %1288 = vmatprep.subr.mxu0 0.0
        %1289 = vmatpush1.msra.mxu0 0.0
        %1290 = vmatprep.subr.mxu0 0.0
        %1291 = vmatpush1.msra.mxu0 0.0
        %1292 = vmatprep.subr.mxu0 0.0
        %1293 = vmatpush1.msra.mxu0 0.0
        %1294 = vmatprep.subr.mxu0 0.0
        %1295 = vmatpush1.msra.mxu0 0.0
        %1296 = vmatprep.subr.mxu0 0.0
        %1297 = vmatpush1.msra.mxu0 0.0
        %1298 = vmatprep.subr.mxu0 0.0
        %1299 = vmatpush1.msra.mxu0 0.0
        %1300 = vmatprep.subr.mxu0 0.0
        %1301 = vmatpush1.msra.mxu0 0.0
        %1302 = vmatprep.subr.mxu0 0.0
        %1303 = vmatpush1.msra.mxu0 0.0
        %1304 = vmatprep.subr.mxu0 0.0
        %1305 = vmatpush1.msra.mxu0 0.0
        %1306 = vmatprep.subr.mxu0 0.0
        %1307 = vmatpush1.msra.mxu0 0.0
        %1308 = vmatprep.subr.mxu0 0.0
        %1309 = vmatpush1.msra.mxu0 0.0
        %1310 = vmatprep.subr.mxu0 0.0
        %1311 = vmatpush1.msra.mxu0 0.0
        %1312 = vmatprep.subr.mxu0 0.0
        %1313 = vmatpush1.msra.mxu0 0.0
        %1314 = vmatprep.mubr.f32.mxu0 0.0
        %1315 = vmatmul.mubr.f32.gmra.mrb[0].mxu0 %v1248
        %v1316 = vpop.f32.mrb[0].mxu0
        %v1317 = vadd.f32 0.0, %v1316
        %v1318 = vpop.f32.mrb[0].mxu0
        %1319 = vdwg.mxu0
        %1320 = vrot.lane.b32.xlu0 %v815, 104
        %v1321 = vpop.permute.xlu0 %1320
        %1322 = vrot.lane.b32.xlu0 %v815, 72
        %v1323 = vpop.permute.xlu0 %1322
        %v1324 = vsel %vm823, %v1321, 0
        %v1326 = vsel %vm823, %v1323, 0
        %1328 = vmatprep.subr.mxu0 0.0
        %1329 = vmatpush1.xpose.msra.mxu0 %v1326
        %1330 = vmatprep.subr.mxu0 0.0
        %1331 = vmatpush1.xpose.msra.mxu0 0.0
        %1332 = vmatprep.subr.mxu0 0.0
        %1333 = vmatpush1.xpose.msra.mxu0 0.0
        %1334 = vmatprep.subr.mxu0 0.0
        %1335 = vmatpush1.xpose.msra.mxu0 0.0
        %1336 = vmatprep.subr.mxu0 0.0
        %1337 = vmatpush1.xpose.msra.mxu0 0.0
        %1338 = vmatprep.subr.mxu0 0.0
        %1339 = vmatpush1.xpose.msra.mxu0 0.0
        %1340 = vmatprep.subr.mxu0 0.0
        %1341 = vmatpush1.xpose.msra.mxu0 0.0
        %1342 = vmatprep.subr.mxu0 0.0
        %1343 = vmatpush1.xpose.msra.mxu0 0.0
        %1344 = vmatprep.subr.mxu0 0.0
        %1345 = vmatpush1.xpose.msra.mxu0 0.0
        %1346 = vmatprep.subr.mxu0 0.0
        %1347 = vmatpush1.xpose.msra.mxu0 0.0
        %1348 = vmatprep.subr.mxu0 0.0
        %1349 = vmatpush1.xpose.msra.mxu0 0.0
        %1350 = vmatprep.subr.mxu0 0.0
        %1351 = vmatpush1.xpose.msra.mxu0 0.0
        %1352 = vmatprep.subr.mxu0 0.0
        %1353 = vmatpush1.xpose.msra.mxu0 0.0
        %1354 = vmatprep.subr.mxu0 0.0
        %1355 = vmatpush1.xpose.msra.mxu0 0.0
        %1356 = vmatprep.subr.mxu0 0.0
        %1357 = vmatpush1.xpose.msra.mxu0 0.0
        %1358 = vmatprep.subr.mxu0 0.0
        %1359 = vmatpush1.xpose.msra.mxu0 0.0
        %1360 = vmatprep.subr.mxu0 0.0
        %1361 = vmatpush1.xpose.msra.mxu0 0.0
        %1362 = vmatprep.subr.mxu0 0.0
        %1363 = vmatpush1.xpose.msra.mxu0 0.0
        %1364 = vmatprep.subr.mxu0 0.0
        %1365 = vmatpush1.xpose.msra.mxu0 0.0
        %1366 = vmatprep.subr.mxu0 0.0
        %1367 = vmatpush1.xpose.msra.mxu0 0.0
        %1368 = vmatprep.subr.mxu0 0.0
        %1369 = vmatpush1.xpose.msra.mxu0 0.0
        %1370 = vmatprep.subr.mxu0 0.0
        %1371 = vmatpush1.xpose.msra.mxu0 0.0
        %1372 = vmatprep.subr.mxu0 0.0
        %1373 = vmatpush1.xpose.msra.mxu0 0.0
        %1374 = vmatprep.subr.mxu0 0.0
        %1375 = vmatpush1.xpose.msra.mxu0 0.0
        %1376 = vmatprep.subr.mxu0 0.0
        %1377 = vmatpush1.xpose.msra.mxu0 0.0
        %1378 = vmatprep.subr.mxu0 0.0
        %1379 = vmatpush1.xpose.msra.mxu0 0.0
        %1380 = vmatprep.subr.mxu0 0.0
        %1381 = vmatpush1.xpose.msra.mxu0 0.0
        %1382 = vmatprep.subr.mxu0 0.0
        %1383 = vmatpush1.xpose.msra.mxu0 0.0
        %1384 = vmatprep.subr.mxu0 0.0
        %1385 = vmatpush1.xpose.msra.mxu0 0.0
        %1386 = vmatprep.subr.mxu0 0.0
        %1387 = vmatpush1.xpose.msra.mxu0 0.0
        %1388 = vmatprep.subr.mxu0 0.0
        %1389 = vmatpush1.xpose.msra.mxu0 0.0
        %1390 = vmatprep.subr.mxu0 0.0
        %1391 = vmatpush1.xpose.msra.mxu0 0.0
        %1392 = vmatprep.mubr.f32.mxu0 0.0
        %1393 = vmatmul.mubr.f32.gmra.mrb[0].mxu0 %v1324
        %v1394 = vpop.f32.mrb[0].mxu0
        %v1395 = vadd.f32 0.0, %v1394
        %v1396 = vpop.f32.mrb[0].mxu0
        %1397 = vdwg.mxu0
        %v1398 = vsel %vm823, %v1395, -inf
        %1399 = vmax.xlane.f32.xlu0 %v1398
        %v1400 = vpop.xlane.xlu0 %1399
        %v1401 = vsub.f32 %v1395, %v1400
        %v1402 = vmul.f32 %v1401, 1.442695
        %v1403 = vpow.pop %v1402
        %v1404 = vsel %vm823, %v1403, 0.0
        %1405 = vadd.xlane.f32.xlu0 %v1404
        %v1406 = vpop.xlane.xlu0 %1405
        %v1407 = vrcp.pop %v1406
        %v1408 = vmul.f32 %v1403, %v1407
        %s1409 = scalar_lea.vmem %s714, 24 [#allocation5]
        %1410 = vst.msk [vmem:[%s1409] sm:$0xff] %vm823, %v1408
        %1411 = vrot.lane.b32.xlu0 %v815, 40
        %v1412 = vpop.permute.xlu0 %1411
        %v1415 = vsel %vm823, %v1408, 0
        %1417 = vmatprep.subr.mxu0 0.0
        %1418 = vmatpush1.msra.mxu0 %v1412
        %1419 = vmatprep.subr.mxu0 0.0
        %1420 = vmatpush1.msra.mxu0 0.0
        %1421 = vmatprep.subr.mxu0 0.0
        %1422 = vmatpush1.msra.mxu0 0.0
        %1423 = vmatprep.subr.mxu0 0.0
        %1424 = vmatpush1.msra.mxu0 0.0
        %1425 = vmatprep.subr.mxu0 0.0
        %1426 = vmatpush1.msra.mxu0 0.0
        %1427 = vmatprep.subr.mxu0 0.0
        %1428 = vmatpush1.msra.mxu0 0.0
        %1429 = vmatprep.subr.mxu0 0.0
        %1430 = vmatpush1.msra.mxu0 0.0
        %1431 = vmatprep.subr.mxu0 0.0
        %1432 = vmatpush1.msra.mxu0 0.0
        %1433 = vmatprep.subr.mxu0 0.0
        %1434 = vmatpush1.msra.mxu0 0.0
        %1435 = vmatprep.subr.mxu0 0.0
        %1436 = vmatpush1.msra.mxu0 0.0
        %1437 = vmatprep.subr.mxu0 0.0
        %1438 = vmatpush1.msra.mxu0 0.0
        %1439 = vmatprep.subr.mxu0 0.0
        %1440 = vmatpush1.msra.mxu0 0.0
        %1441 = vmatprep.subr.mxu0 0.0
        %1442 = vmatpush1.msra.mxu0 0.0
        %1443 = vmatprep.subr.mxu0 0.0
        %1444 = vmatpush1.msra.mxu0 0.0
        %1445 = vmatprep.subr.mxu0 0.0
        %1446 = vmatpush1.msra.mxu0 0.0
        %1447 = vmatprep.subr.mxu0 0.0
        %1448 = vmatpush1.msra.mxu0 0.0
        %1449 = vmatprep.subr.mxu0 0.0
        %1450 = vmatpush1.msra.mxu0 0.0
        %1451 = vmatprep.subr.mxu0 0.0
        %1452 = vmatpush1.msra.mxu0 0.0
        %1453 = vmatprep.subr.mxu0 0.0
        %1454 = vmatpush1.msra.mxu0 0.0
        %1455 = vmatprep.subr.mxu0 0.0
        %1456 = vmatpush1.msra.mxu0 0.0
        %1457 = vmatprep.subr.mxu0 0.0
        %1458 = vmatpush1.msra.mxu0 0.0
        %1459 = vmatprep.subr.mxu0 0.0
        %1460 = vmatpush1.msra.mxu0 0.0
        %1461 = vmatprep.subr.mxu0 0.0
        %1462 = vmatpush1.msra.mxu0 0.0
        %1463 = vmatprep.subr.mxu0 0.0
        %1464 = vmatpush1.msra.mxu0 0.0
        %1465 = vmatprep.subr.mxu0 0.0
        %1466 = vmatpush1.msra.mxu0 0.0
        %1467 = vmatprep.subr.mxu0 0.0
        %1468 = vmatpush1.msra.mxu0 0.0
        %1469 = vmatprep.subr.mxu0 0.0
        %1470 = vmatpush1.msra.mxu0 0.0
        %1471 = vmatprep.subr.mxu0 0.0
        %1472 = vmatpush1.msra.mxu0 0.0
        %1473 = vmatprep.subr.mxu0 0.0
        %1474 = vmatpush1.msra.mxu0 0.0
        %1475 = vmatprep.subr.mxu0 0.0
        %1476 = vmatpush1.msra.mxu0 0.0
        %1477 = vmatprep.subr.mxu0 0.0
        %1478 = vmatpush1.msra.mxu0 0.0
        %1479 = vmatprep.subr.mxu0 0.0
        %1480 = vmatpush1.msra.mxu0 0.0
        %1481 = vmatprep.mubr.f32.mxu0 0.0
        %1482 = vmatmul.mubr.f32.gmra.mrb[0].mxu0 %v1415
        %v1483 = vpop.f32.mrb[0].mxu0
        %v1484 = vadd.f32 0.0, %v1483
        %v1485 = vpop.f32.mrb[0].mxu0
        %1486 = vdwg.mxu0
        %1488 = vrot.lane.b32.xlu0 %v1150, 8
        %v1489 = vpop.permute.xlu0 %1488
        %1492 = vrot.lane.b32.xlu0 %v1317, 16
        %v1493 = vpop.permute.xlu0 %1492
        %1496 = vrot.lane.b32.xlu0 %v1484, 24
        %v1497 = vpop.permute.xlu0 %1496
        %v1499 = vsel %vm823, %v983, %v1489
        %vm1500 = vcmask 130048
        %v1501 = vsel %vm1500, %v1499, %v1493
        %vm1502 = vcmask 195584
        %v1503 = vsel %vm1502, %v1501, %v1497
        %v1504 = vld [vmem:[%s5] sm:$0xf]
        %v1505 = vld [vmem:[%s5 + $0x4] sm:$0xf]
        %v1506 = vld [vmem:[%s5 + $0x8] sm:$0xf]
        %v1507 = vld [vmem:[%s5 + $0xc] sm:$0xf]
        %v1508 = vld [vmem:[%s6] sm:$0x1]
        %v1509 = vpack.c.bf16 %v1503, %v1503
        %v1511 = vlaneseq
        %v1512 = vshrl.u32 %v1511, 7
        %v1513 = vsub.s32 0, %v1512
        %v1514 = vrot.slane %v1508, %v1513
        %v1520 = vunpack.c.l.b16 %v1504
        %v1521 = vunpack.c.l.b16 %v1505
        %v1522 = vunpack.c.l.b16 %v1506
        %v1523 = vunpack.c.l.b16 %v1507
        %v1524 = vpack.c.b16 %v1521, %v1520
        %v1525 = vpack.c.b16 %v1523, %v1522
        %v1529 = vsel %vm723, %v1509, 0
        %1531 = vmatprep.subr.bf16.mxu0 0
        %1532 = vmatpush1.bf16.msra.mxu0 %v1524
        %1533 = vmatprep.subr.bf16.mxu0 0
        %1534 = vmatpush1.bf16.msra.mxu0 %v1525
        %1535 = vmatprep.subr.bf16.mxu0 0
        %1536 = vmatpush1.bf16.msra.mxu0 0
        %1537 = vmatprep.subr.bf16.mxu0 0
        %1538 = vmatpush1.bf16.msra.mxu0 0
        %1539 = vmatprep.subr.bf16.mxu0 0
        %1540 = vmatpush1.bf16.msra.mxu0 0
        %1541 = vmatprep.subr.bf16.mxu0 0
        %1542 = vmatpush1.bf16.msra.mxu0 0
        %1543 = vmatprep.subr.bf16.mxu0 0
        %1544 = vmatpush1.bf16.msra.mxu0 0
        %1545 = vmatprep.subr.bf16.mxu0 0
        %1546 = vmatpush1.bf16.msra.mxu0 0
        %1547 = vmatprep.subr.bf16.mxu0 0
        %1548 = vmatpush1.bf16.msra.mxu0 0
        %1549 = vmatprep.subr.bf16.mxu0 0
        %1550 = vmatpush1.bf16.msra.mxu0 0
        %1551 = vmatprep.subr.bf16.mxu0 0
        %1552 = vmatpush1.bf16.msra.mxu0 0
        %1553 = vmatprep.subr.bf16.mxu0 0
        %1554 = vmatpush1.bf16.msra.mxu0 0
        %1555 = vmatprep.subr.bf16.mxu0 0
        %1556 = vmatpush1.bf16.msra.mxu0 0
        %1557 = vmatprep.subr.bf16.mxu0 0
        %1558 = vmatpush1.bf16.msra.mxu0 0
        %1559 = vmatprep.subr.bf16.mxu0 0
        %1560 = vmatpush1.bf16.msra.mxu0 0
        %1561 = vmatprep.subr.bf16.mxu0 0
        %1562 = vmatpush1.bf16.msra.mxu0 0
        %1563 = vmatprep.mubr.bf16.mxu0 0
        %1564 = vmatmul.mubr.bf16.gmra.mrb[0].mxu0 %v1529
        %v1565 = vpop.f32.mrb[0].mxu0
        %v1566 = vadd.f32 %v1514, %v1565
        %v1567 = vpop.f32.mrb[0].mxu0
        %v1568 = vpop.f32.mrb[0].mxu0
        %v1569 = vpop.f32.mrb[0].mxu0
        %1570 = vdwg.mxu0
        %v1571 = vadd.f32 %v1566, %v751
        %v1572 = vld [vmem:[%s7] sm:$0x1]
        %v1573 = vld [vmem:[%s8] sm:$0x1]
        %v1574 = vsel %vm723, %v1571, 0.0
        %1575 = vadd.xlane.f32.xlu0 %v1574
        %v1576 = vpop.xlane.xlu0 %1575
        %v1577 = vmul.f32 %v1576, %v727
        %v1578 = vsub.f32 %v1571, %v1577
        %v1579 = vmul.f32 %v1578, %v1578
        %v1580 = vsel %vm723, %v1579, 0.0
        %1581 = vadd.xlane.f32.xlu0 %v1580
        %v1582 = vpop.xlane.xlu0 %1581
        %v1583 = vmul.f32 %v1582, %v727
        %v1584 = vadd.f32 %v1583, 1e-05
        %v1585 = vrsqrt.pop %v1584
        %v1586 = vmul.f32 %v1578, %v1585
        %v1588 = vlaneseq
        %v1589 = vshrl.u32 %v1588, 7
        %v1590 = vsub.s32 0, %v1589
        %v1591 = vrot.slane %v1572, %v1590
        %v1593 = vmul.f32 %v1586, %v1591
        %v1595 = vlaneseq
        %v1596 = vshrl.u32 %v1595, 7
        %v1597 = vsub.s32 0, %v1596
        %v1598 = vrot.slane %v1573, %v1597
        %v1600 = vadd.f32 %v1593, %v1598
        %v1601 = vld [vmem:[%s9] sm:$0xf]
        %v1602 = vld [vmem:[%s9 + $0x4] sm:$0xf]
        %v1603 = vld [vmem:[%s9 + $0x8] sm:$0xf]
        %v1604 = vld [vmem:[%s9 + $0xc] sm:$0xf]
        %v1605 = vld [vmem:[%s10] sm:$0x1]
        %v1606 = vpack.c.bf16 %v1600, %v1600
        %v1608 = vlaneseq
        %v1609 = vshrl.u32 %v1608, 7
        %v1610 = vsub.s32 0, %v1609
        %v1611 = vrot.slane %v1605, %v1610
        %v1617 = vunpack.c.l.b16 %v1601
        %v1618 = vunpack.c.l.b16 %v1602
        %v1619 = vunpack.c.l.b16 %v1603
        %v1620 = vunpack.c.l.b16 %v1604
        %v1621 = vpack.c.b16 %v1618, %v1617
        %v1622 = vpack.c.b16 %v1620, %v1619
        %v1626 = vsel %vm723, %v1606, 0
        %1628 = vmatprep.subr.bf16.mxu0 0
        %1629 = vmatpush1.bf16.msra.mxu0 %v1621
        %1630 = vmatprep.subr.bf16.mxu0 0
        %1631 = vmatpush1.bf16.msra.mxu0 %v1622
        %1632 = vmatprep.subr.bf16.mxu0 0
        %1633 = vmatpush1.bf16.msra.mxu0 0
        %1634 = vmatprep.subr.bf16.mxu0 0
        %1635 = vmatpush1.bf16.msra.mxu0 0
        %1636 = vmatprep.subr.bf16.mxu0 0
        %1637 = vmatpush1.bf16.msra.mxu0 0
        %1638 = vmatprep.subr.bf16.mxu0 0
        %1639 = vmatpush1.bf16.msra.mxu0 0
        %1640 = vmatprep.subr.bf16.mxu0 0
        %1641 = vmatpush1.bf16.msra.mxu0 0
        %1642 = vmatprep.subr.bf16.mxu0 0
        %1643 = vmatpush1.bf16.msra.mxu0 0
        %1644 = vmatprep.subr.bf16.mxu0 0
        %1645 = vmatpush1.bf16.msra.mxu0 0
        %1646 = vmatprep.subr.bf16.mxu0 0
        %1647 = vmatpush1.bf16.msra.mxu0 0
        %1648 = vmatprep.subr.bf16.mxu0 0
        %1649 = vmatpush1.bf16.msra.mxu0 0
        %1650 = vmatprep.subr.bf16.mxu0 0
        %1651 = vmatpush1.bf16.msra.mxu0 0
        %1652 = vmatprep.subr.bf16.mxu0 0
        %1653 = vmatpush1.bf16.msra.mxu0 0
        %1654 = vmatprep.subr.bf16.mxu0 0
        %1655 = vmatpush1.bf16.msra.mxu0 0
        %1656 = vmatprep.subr.bf16.mxu0 0
        %1657 = vmatpush1.bf16.msra.mxu0 0
        %1658 = vmatprep.subr.bf16.mxu0 0
        %1659 = vmatpush1.bf16.msra.mxu0 0
        %1660 = vmatprep.mubr.bf16.mxu0 0
        %1661 = vmatmul.mubr.bf16.gmra.mrb[0].mxu0 %v1626
        %v1662 = vpop.f32.mrb[0].mxu0
        %v1663 = vadd.f32 %v1611, %v1662
        %v1664 = vpop.f32.mrb[0].mxu0
        %v1665 = vpop.f32.mrb[0].mxu0
        %v1666 = vpop.f32.mrb[0].mxu0
        %1667 = vdwg.mxu0
        %v1668 = vmul.f32 %v1663, 0.5
        %v1669 = vmul.f32 %v1663, 0.044715
        %v1670 = vmul.f32 %v1669, %v1663
        %v1671 = vmul.f32 %v1670, %v1663
        %v1672 = vadd.f32 %v1663, %v1671
        %v1673 = vmul.f32 %v1672, 0.7978846
        %v1674 = vtanh.pop %v1673
        %v1675 = vadd.f32 %v1674, 1.0
        %v1676 = vmul.f32 %v1668, %v1675
        %v1677 = vld [vmem:[%s11] sm:$0xf]
        %v1678 = vld [vmem:[%s11 + $0x4] sm:$0xf]
        %v1679 = vld [vmem:[%s11 + $0x8] sm:$0xf]
        %v1680 = vld [vmem:[%s11 + $0xc] sm:$0xf]
        %v1681 = vld [vmem:[%s11 + $0x10] sm:$0xf]
        %v1682 = vld [vmem:[%s11 + $0x14] sm:$0xf]
        %v1683 = vld [vmem:[%s11 + $0x18] sm:$0xf]
        %v1684 = vld [vmem:[%s11 + $0x1c] sm:$0xf]
        %v1685 = vld [vmem:[%s12] sm:$0x1]
        %v1686 = vpack.c.bf16 %v1676, %v1676
        %v1688 = vlaneseq
        %v1689 = vshrl.u32 %v1688, 7
        %v1690 = vsub.s32 0, %v1689
        %v1691 = vrot.slane %v1685, %v1690
        %v1701 = vunpack.c.l.b16 %v1677
        %v1702 = vunpack.c.l.b16 %v1678
        %v1703 = vunpack.c.l.b16 %v1679
        %v1704 = vunpack.c.l.b16 %v1680
        %v1705 = vunpack.c.l.b16 %v1681
        %v1706 = vunpack.c.l.b16 %v1682
        %v1707 = vunpack.c.l.b16 %v1683
        %v1708 = vunpack.c.l.b16 %v1684
        %v1709 = vpack.c.b16 %v1702, %v1701
        %v1710 = vpack.c.b16 %v1704, %v1703
        %v1711 = vpack.c.b16 %v1706, %v1705
        %v1712 = vpack.c.b16 %v1708, %v1707
        %vm1717 = vcmask 523264
        %v1719 = vsel %vm1717, %v1686, 0
        %1721 = vmatprep.subr.bf16.mxu0 0
        %1722 = vmatpush1.bf16.msra.mxu0 %v1709
        %1723 = vmatprep.subr.bf16.mxu0 0
        %1724 = vmatpush1.bf16.msra.mxu0 %v1710
        %1725 = vmatprep.subr.bf16.mxu0 0
        %1726 = vmatpush1.bf16.msra.mxu0 %v1711
        %1727 = vmatprep.subr.bf16.mxu0 0
        %1728 = vmatpush1.bf16.msra.mxu0 %v1712
        %1729 = vmatprep.subr.bf16.mxu0 0
        %1730 = vmatpush1.bf16.msra.mxu0 0
        %1731 = vmatprep.subr.bf16.mxu0 0
        %1732 = vmatpush1.bf16.msra.mxu0 0
        %1733 = vmatprep.subr.bf16.mxu0 0
        %1734 = vmatpush1.bf16.msra.mxu0 0
        %1735 = vmatprep.subr.bf16.mxu0 0
        %1736 = vmatpush1.bf16.msra.mxu0 0
        %1737 = vmatprep.subr.bf16.mxu0 0
        %1738 = vmatpush1.bf16.msra.mxu0 0
        %1739 = vmatprep.subr.bf16.mxu0 0
        %1740 = vmatpush1.bf16.msra.mxu0 0
        %1741 = vmatprep.subr.bf16.mxu0 0
        %1742 = vmatpush1.bf16.msra.mxu0 0
        %1743 = vmatprep.subr.bf16.mxu0 0
        %1744 = vmatpush1.bf16.msra.mxu0 0
        %1745 = vmatprep.subr.bf16.mxu0 0
        %1746 = vmatpush1.bf16.msra.mxu0 0
        %1747 = vmatprep.subr.bf16.mxu0 0
        %1748 = vmatpush1.bf16.msra.mxu0 0
        %1749 = vmatprep.subr.bf16.mxu0 0
        %1750 = vmatpush1.bf16.msra.mxu0 0
        %1751 = vmatprep.subr.bf16.mxu0 0
        %1752 = vmatpush1.bf16.msra.mxu0 0
        %1753 = vmatprep.mubr.bf16.mxu0 0
        %1754 = vmatmul.mubr.bf16.gmra.mrb[0].mxu0 %v1719
        %v1755 = vpop.f32.mrb[0].mxu0
        %v1756 = vadd.f32 %v1691, %v1755
        %v1757 = vpop.f32.mrb[0].mxu0
        %v1758 = vpop.f32.mrb[0].mxu0
        %v1759 = vpop.f32.mrb[0].mxu0
        %1760 = vdwg.mxu0
        %v1761 = vadd.f32 %v1756, %v1600
        %v1762 = vld [vmem:[%s13] sm:$0x1]
        %v1763 = vld [vmem:[%s14] sm:$0x1]
        %v1764 = vsel %vm723, %v1761, 0.0
        %1765 = vadd.xlane.f32.xlu0 %v1764
        %v1766 = vpop.xlane.xlu0 %1765
        %v1767 = vmul.f32 %v1766, %v727
        %v1768 = vsub.f32 %v1761, %v1767
        %v1769 = vmul.f32 %v1768, %v1768
        %v1770 = vsel %vm723, %v1769, 0.0
        %1771 = vadd.xlane.f32.xlu0 %v1770
        %v1772 = vpop.xlane.xlu0 %1771
        %v1773 = vmul.f32 %v1772, %v727
        %v1774 = vadd.f32 %v1773, 1e-05
        %v1775 = vrsqrt.pop %v1774
        %v1776 = vmul.f32 %v1768, %v1775
        %v1778 = vlaneseq
        %v1779 = vshrl.u32 %v1778, 7
        %v1780 = vsub.s32 0, %v1779
        %v1781 = vrot.slane %v1762, %v1780
        %v1783 = vmul.f32 %v1776, %v1781
        %v1785 = vlaneseq
        %v1786 = vshrl.u32 %v1785, 7
        %v1787 = vsub.s32 0, %v1786
        %v1788 = vrot.slane %v1763, %v1787
        %v1790 = vadd.f32 %v1783, %v1788
        %s1791 = scalar_lea.vmem %s708, 8 [#allocation4]
        %1792 = vst.msk [vmem:[%s1791] sm:$0xff] %vm723, %v1790
        %s1793 = scalar_lea.vmem %s3, 16
        %v1794 = vld [vmem:[%s1793] sm:$0xf]
        %v1795 = vld [vmem:[%s1793 + $0x4] sm:$0xf]
        %v1796 = vld [vmem:[%s1793 + $0x8] sm:$0xf]
        %v1797 = vld [vmem:[%s1793 + $0xc] sm:$0xf]
        %s1798 = scalar_lea.vmem %s4, 1
        %v1799 = vld [vmem:[%s1798] sm:$0x1]
        %v1800 = vpack.c.bf16 %v1790, %v1790
        %v1802 = vlaneseq
        %v1803 = vshrl.u32 %v1802, 7
        %v1804 = vsub.s32 0, %v1803
        %v1805 = vrot.slane %v1799, %v1804
        %v1811 = vunpack.c.l.b16 %v1794
        %v1812 = vunpack.c.l.b16 %v1795
        %v1813 = vunpack.c.l.b16 %v1796
        %v1814 = vunpack.c.l.b16 %v1797
        %v1815 = vpack.c.b16 %v1812, %v1811
        %v1816 = vpack.c.b16 %v1814, %v1813
        %v1820 = vsel %vm723, %v1800, 0
        %1822 = vmatprep.subr.bf16.mxu0 0
        %1823 = vmatpush1.bf16.msra.mxu0 %v1815
        %1824 = vmatprep.subr.bf16.mxu0 0
        %1825 = vmatpush1.bf16.msra.mxu0 %v1816
        %1826 = vmatprep.subr.bf16.mxu0 0
        %1827 = vmatpush1.bf16.msra.mxu0 0
        %1828 = vmatprep.subr.bf16.mxu0 0
        %1829 = vmatpush1.bf16.msra.mxu0 0
        %1830 = vmatprep.subr.bf16.mxu0 0
        %1831 = vmatpush1.bf16.msra.mxu0 0
        %1832 = vmatprep.subr.bf16.mxu0 0
        %1833 = vmatpush1.bf16.msra.mxu0 0
        %1834 = vmatprep.subr.bf16.mxu0 0
        %1835 = vmatpush1.bf16.msra.mxu0 0
        %1836 = vmatprep.subr.bf16.mxu0 0
        %1837 = vmatpush1.bf16.msra.mxu0 0
        %1838 = vmatprep.subr.bf16.mxu0 0
        %1839 = vmatpush1.bf16.msra.mxu0 0
        %1840 = vmatprep.subr.bf16.mxu0 0
        %1841 = vmatpush1.bf16.msra.mxu0 0
        %1842 = vmatprep.subr.bf16.mxu0 0
        %1843 = vmatpush1.bf16.msra.mxu0 0
        %1844 = vmatprep.subr.bf16.mxu0 0
        %1845 = vmatpush1.bf16.msra.mxu0 0
        %1846 = vmatprep.subr.bf16.mxu0 0
        %1847 = vmatpush1.bf16.msra.mxu0 0
        %1848 = vmatprep.subr.bf16.mxu0 0
        %1849 = vmatpush1.bf16.msra.mxu0 0
        %1850 = vmatprep.subr.bf16.mxu0 0
        %1851 = vmatpush1.bf16.msra.mxu0 0
        %1852 = vmatprep.subr.bf16.mxu0 0
        %1853 = vmatpush1.bf16.msra.mxu0 0
        %1854 = vmatprep.mubr.bf16.mxu0 0
        %1855 = vmatmul.mubr.bf16.gmra.mrb[0].mxu0 %v1820
        %v1856 = vpop.f32.mrb[0].mxu0
        %v1857 = vadd.f32 %v1805, %v1856
        %v1858 = vpop.f32.mrb[0].mxu0
        %v1859 = vpop.f32.mrb[0].mxu0
        %v1860 = vpop.f32.mrb[0].mxu0
        %1861 = vdwg.mxu0
        %1863 = vrot.lane.b32.xlu0 %v1857, 96
        %v1864 = vpop.permute.xlu0 %1863
        %v1865 = vsel %vm823, %v1857, 0
        %v1867 = vsel %vm823, %v1864, 0
        %1869 = vmatprep.subr.mxu0 0.0
        %1870 = vmatpush1.xpose.msra.mxu0 %v1867
        %1871 = vmatprep.subr.mxu0 0.0
        %1872 = vmatpush1.xpose.msra.mxu0 0.0
        %1873 = vmatprep.subr.mxu0 0.0
        %1874 = vmatpush1.xpose.msra.mxu0 0.0
        %1875 = vmatprep.subr.mxu0 0.0
        %1876 = vmatpush1.xpose.msra.mxu0 0.0
        %1877 = vmatprep.subr.mxu0 0.0
        %1878 = vmatpush1.xpose.msra.mxu0 0.0
        %1879 = vmatprep.subr.mxu0 0.0
        %1880 = vmatpush1.xpose.msra.mxu0 0.0
        %1881 = vmatprep.subr.mxu0 0.0
        %1882 = vmatpush1.xpose.msra.mxu0 0.0
        %1883 = vmatprep.subr.mxu0 0.0
        %1884 = vmatpush1.xpose.msra.mxu0 0.0
        %1885 = vmatprep.subr.mxu0 0.0
        %1886 = vmatpush1.xpose.msra.mxu0 0.0
        %1887 = vmatprep.subr.mxu0 0.0
        %1888 = vmatpush1.xpose.msra.mxu0 0.0
        %1889 = vmatprep.subr.mxu0 0.0
        %1890 = vmatpush1.xpose.msra.mxu0 0.0
        %1891 = vmatprep.subr.mxu0 0.0
        %1892 = vmatpush1.xpose.msra.mxu0 0.0
        %1893 = vmatprep.subr.mxu0 0.0
        %1894 = vmatpush1.xpose.msra.mxu0 0.0
        %1895 = vmatprep.subr.mxu0 0.0
        %1896 = vmatpush1.xpose.msra.mxu0 0.0
        %1897 = vmatprep.subr.mxu0 0.0
        %1898 = vmatpush1.xpose.msra.mxu0 0.0
        %1899 = vmatprep.subr.mxu0 0.0
        %1900 = vmatpush1.xpose.msra.mxu0 0.0
        %1901 = vmatprep.subr.mxu0 0.0
        %1902 = vmatpush1.xpose.msra.mxu0 0.0
        %1903 = vmatprep.subr.mxu0 0.0
        %1904 = vmatpush1.xpose.msra.mxu0 0.0
        %1905 = vmatprep.subr.mxu0 0.0
        %1906 = vmatpush1.xpose.msra.mxu0 0.0
        %1907 = vmatprep.subr.mxu0 0.0
        %1908 = vmatpush1.xpose.msra.mxu0 0.0
        %1909 = vmatprep.subr.mxu0 0.0
        %1910 = vmatpush1.xpose.msra.mxu0 0.0
        %1911 = vmatprep.subr.mxu0 0.0
        %1912 = vmatpush1.xpose.msra.mxu0 0.0
        %1913 = vmatprep.subr.mxu0 0.0
        %1914 = vmatpush1.xpose.msra.mxu0 0.0
        %1915 = vmatprep.subr.mxu0 0.0
        %1916 = vmatpush1.xpose.msra.mxu0 0.0
        %1917 = vmatprep.subr.mxu0 0.0
        %1918 = vmatpush1.xpose.msra.mxu0 0.0
        %1919 = vmatprep.subr.mxu0 0.0
        %1920 = vmatpush1.xpose.msra.mxu0 0.0
        %1921 = vmatprep.subr.mxu0 0.0
        %1922 = vmatpush1.xpose.msra.mxu0 0.0
        %1923 = vmatprep.subr.mxu0 0.0
        %1924 = vmatpush1.xpose.msra.mxu0 0.0
        %1925 = vmatprep.subr.mxu0 0.0
        %1926 = vmatpush1.xpose.msra.mxu0 0.0
        %1927 = vmatprep.subr.mxu0 0.0
        %1928 = vmatpush1.xpose.msra.mxu0 0.0
        %1929 = vmatprep.subr.mxu0 0.0
        %1930 = vmatpush1.xpose.msra.mxu0 0.0
        %1931 = vmatprep.subr.mxu0 0.0
        %1932 = vmatpush1.xpose.msra.mxu0 0.0
        %1933 = vmatprep.mubr.f32.mxu0 0.0
        %1934 = vmatmul.mubr.f32.gmra.mrb[0].mxu0 %v1865
        %v1935 = vpop.f32.mrb[0].mxu0
        %v1936 = vadd.f32 0.0, %v1935
        %v1937 = vpop.f32.mrb[0].mxu0
        %1938 = vdwg.mxu0
        %v1939 = vsel %vm823, %v1936, -inf
        %1940 = vmax.xlane.f32.xlu0 %v1939
        %v1941 = vpop.xlane.xlu0 %1940
        %v1942 = vsub.f32 %v1936, %v1941
        %v1943 = vmul.f32 %v1942, 1.442695
        %v1944 = vpow.pop %v1943
        %v1945 = vsel %vm823, %v1944, 0.0
        %1946 = vadd.xlane.f32.xlu0 %v1945
        %v1947 = vpop.xlane.xlu0 %1946
        %v1948 = vrcp.pop %v1947
        %v1949 = vmul.f32 %v1944, %v1948
        %s1950 = scalar_lea.vmem %s714, 32 [#allocation5]
        %1951 = vst.msk [vmem:[%s1950] sm:$0xff] %vm823, %v1949
        %1952 = vrot.lane.b32.xlu0 %v1857, 64
        %v1953 = vpop.permute.xlu0 %1952
        %v1956 = vsel %vm823, %v1949, 0
        %1958 = vmatprep.subr.mxu0 0.0
        %1959 = vmatpush1.msra.mxu0 %v1953
        %1960 = vmatprep.subr.mxu0 0.0
        %1961 = vmatpush1.msra.mxu0 0.0
        %1962 = vmatprep.subr.mxu0 0.0
        %1963 = vmatpush1.msra.mxu0 0.0
        %1964 = vmatprep.subr.mxu0 0.0
        %1965 = vmatpush1.msra.mxu0 0.0
        %1966 = vmatprep.subr.mxu0 0.0
        %1967 = vmatpush1.msra.mxu0 0.0
        %1968 = vmatprep.subr.mxu0 0.0
        %1969 = vmatpush1.msra.mxu0 0.0
        %1970 = vmatprep.subr.mxu0 0.0
        %1971 = vmatpush1.msra.mxu0 0.0
        %1972 = vmatprep.subr.mxu0 0.0
        %1973 = vmatpush1.msra.mxu0 0.0
        %1974 = vmatprep.subr.mxu0 0.0
        %1975 = vmatpush1.msra.mxu0 0.0
        %1976 = vmatprep.subr.mxu0 0.0
        %1977 = vmatpush1.msra.mxu0 0.0
        %1978 = vmatprep.subr.mxu0 0.0
        %1979 = vmatpush1.msra.mxu0 0.0
        %1980 = vmatprep.subr.mxu0 0.0
        %1981 = vmatpush1.msra.mxu0 0.0
        %1982 = vmatprep.subr.mxu0 0.0
        %1983 = vmatpush1.msra.mxu0 0.0
        %1984 = vmatprep.subr.mxu0 0.0
        %1985 = vmatpush1.msra.mxu0 0.0
        %1986 = vmatprep.subr.mxu0 0.0
        %1987 = vmatpush1.msra.mxu0 0.0
        %1988 = vmatprep.subr.mxu0 0.0
        %1989 = vmatpush1.msra.mxu0 0.0
        %1990 = vmatprep.subr.mxu0 0.0
        %1991 = vmatpush1.msra.mxu0 0.0
        %1992 = vmatprep.subr.mxu0 0.0
        %1993 = vmatpush1.msra.mxu0 0.0
        %1994 = vmatprep.subr.mxu0 0.0
        %1995 = vmatpush1.msra.mxu0 0.0
        %1996 = vmatprep.subr.mxu0 0.0
        %1997 = vmatpush1.msra.mxu0 0.0
        %1998 = vmatprep.subr.mxu0 0.0
        %1999 = vmatpush1.msra.mxu0 0.0
        %2000 = vmatprep.subr.mxu0 0.0
        %2001 = vmatpush1.msra.mxu0 0.0
        %2002 = vmatprep.subr.mxu0 0.0
        %2003 = vmatpush1.msra.mxu0 0.0
        %2004 = vmatprep.subr.mxu0 0.0
        %2005 = vmatpush1.msra.mxu0 0.0
        %2006 = vmatprep.subr.mxu0 0.0
        %2007 = vmatpush1.msra.mxu0 0.0
        %2008 = vmatprep.subr.mxu0 0.0
        %2009 = vmatpush1.msra.mxu0 0.0
        %2010 = vmatprep.subr.mxu0 0.0
        %2011 = vmatpush1.msra.mxu0 0.0
        %2012 = vmatprep.subr.mxu0 0.0
        %2013 = vmatpush1.msra.mxu0 0.0
        %2014 = vmatprep.subr.mxu0 0.0
        %2015 = vmatpush1.msra.mxu0 0.0
        %2016 = vmatprep.subr.mxu0 0.0
        %2017 = vmatpush1.msra.mxu0 0.0
        %2018 = vmatprep.subr.mxu0 0.0
        %2019 = vmatpush1.msra.mxu0 0.0
        %2020 = vmatprep.subr.mxu0 0.0
        %2021 = vmatpush1.msra.mxu0 0.0
        %2022 = vmatprep.mubr.f32.mxu0 0.0
        %2023 = vmatmul.mubr.f32.gmra.mrb[0].mxu0 %v1956
        %v2024 = vpop.f32.mrb[0].mxu0
        %v2025 = vadd.f32 0.0, %v2024
        %v2026 = vpop.f32.mrb[0].mxu0
        %2027 = vdwg.mxu0
        %2028 = vrot.lane.b32.xlu0 %v1857, 120
        %v2029 = vpop.permute.xlu0 %2028
        %2030 = vrot.lane.b32.xlu0 %v1857, 88
        %v2031 = vpop.permute.xlu0 %2030
        %v2032 = vsel %vm823, %v2029, 0
        %v2034 = vsel %vm823, %v2031, 0
        %2036 = vmatprep.subr.mxu0 0.0
        %2037 = vmatpush1.xpose.msra.mxu0 %v2034
        %2038 = vmatprep.subr.mxu0 0.0
        %2039 = vmatpush1.xpose.msra.mxu0 0.0
        %2040 = vmatprep.subr.mxu0 0.0
        %2041 = vmatpush1.xpose.msra.mxu0 0.0
        %2042 = vmatprep.subr.mxu0 0.0
        %2043 = vmatpush1.xpose.msra.mxu0 0.0
        %2044 = vmatprep.subr.mxu0 0.0
        %2045 = vmatpush1.xpose.msra.mxu0 0.0
        %2046 = vmatprep.subr.mxu0 0.0
        %2047 = vmatpush1.xpose.msra.mxu0 0.0
        %2048 = vmatprep.subr.mxu0 0.0
        %2049 = vmatpush1.xpose.msra.mxu0 0.0
        %2050 = vmatprep.subr.mxu0 0.0
        %2051 = vmatpush1.xpose.msra.mxu0 0.0
        %2052 = vmatprep.subr.mxu0 0.0
        %2053 = vmatpush1.xpose.msra.mxu0 0.0
        %2054 = vmatprep.subr.mxu0 0.0
        %2055 = vmatpush1.xpose.msra.mxu0 0.0
        %2056 = vmatprep.subr.mxu0 0.0
        %2057 = vmatpush1.xpose.msra.mxu0 0.0
        %2058 = vmatprep.subr.mxu0 0.0
        %2059 = vmatpush1.xpose.msra.mxu0 0.0
        %2060 = vmatprep.subr.mxu0 0.0
        %2061 = vmatpush1.xpose.msra.mxu0 0.0
        %2062 = vmatprep.subr.mxu0 0.0
        %2063 = vmatpush1.xpose.msra.mxu0 0.0
        %2064 = vmatprep.subr.mxu0 0.0
        %2065 = vmatpush1.xpose.msra.mxu0 0.0
        %2066 = vmatprep.subr.mxu0 0.0
        %2067 = vmatpush1.xpose.msra.mxu0 0.0
        %2068 = vmatprep.subr.mxu0 0.0
        %2069 = vmatpush1.xpose.msra.mxu0 0.0
        %2070 = vmatprep.subr.mxu0 0.0
        %2071 = vmatpush1.xpose.msra.mxu0 0.0
        %2072 = vmatprep.subr.mxu0 0.0
        %2073 = vmatpush1.xpose.msra.mxu0 0.0
        %2074 = vmatprep.subr.mxu0 0.0
        %2075 = vmatpush1.xpose.msra.mxu0 0.0
        %2076 = vmatprep.subr.mxu0 0.0
        %2077 = vmatpush1.xpose.msra.mxu0 0.0
        %2078 = vmatprep.subr.mxu0 0.0
        %2079 = vmatpush1.xpose.msra.mxu0 0.0
        %2080 = vmatprep.subr.mxu0 0.0
        %2081 = vmatpush1.xpose.msra.mxu0 0.0
        %2082 = vmatprep.subr.mxu0 0.0
        %2083 = vmatpush1.xpose.msra.mxu0 0.0
        %2084 = vmatprep.subr.mxu0 0.0
        %2085 = vmatpush1.xpose.msra.mxu0 0.0
        %2086 = vmatprep.subr.mxu0 0.0
        %2087 = vmatpush1.xpose.msra.mxu0 0.0
        %2088 = vmatprep.subr.mxu0 0.0
        %2089 = vmatpush1.xpose.msra.mxu0 0.0
        %2090 = vmatprep.subr.mxu0 0.0
        %2091 = vmatpush1.xpose.msra.mxu0 0.0
        %2092 = vmatprep.subr.mxu0 0.0
        %2093 = vmatpush1.xpose.msra.mxu0 0.0
        %2094 = vmatprep.subr.mxu0 0.0
        %2095 = vmatpush1.xpose.msra.mxu0 0.0
        %2096 = vmatprep.subr.mxu0 0.0
        %2097 = vmatpush1.xpose.msra.mxu0 0.0
        %2098 = vmatprep.subr.mxu0 0.0
        %2099 = vmatpush1.xpose.msra.mxu0 0.0
        %2100 = vmatprep.mubr.f32.mxu0 0.0
        %2101 = vmatmul.mubr.f32.gmra.mrb[0].mxu0 %v2032
        %v2102 = vpop.f32.mrb[0].mxu0
        %v2103 = vadd.f32 0.0, %v2102
        %v2104 = vpop.f32.mrb[0].mxu0
        %2105 = vdwg.mxu0
        %v2106 = vsel %vm823, %v2103, -inf
        %2107 = vmax.xlane.f32.xlu0 %v2106
        %v2108 = vpop.xlane.xlu0 %2107
        %v2109 = vsub.f32 %v2103, %v2108
        %v2110 = vmul.f32 %v2109, 1.442695
        %v2111 = vpow.pop %v2110
        %v2112 = vsel %vm823, %v2111, 0.0
        %2113 = vadd.xlane.f32.xlu0 %v2112
        %v2114 = vpop.xlane.xlu0 %2113
        %v2115 = vrcp.pop %v2114
        %v2116 = vmul.f32 %v2111, %v2115
        %s2117 = scalar_lea.vmem %s714, 40 [#allocation5]
        %2118 = vst.msk [vmem:[%s2117] sm:$0xff] %vm823, %v2116
        %2119 = vrot.lane.b32.xlu0 %v1857, 56
        %v2120 = vpop.permute.xlu0 %2119
        %v2123 = vsel %vm823, %v2116, 0
        %2125 = vmatprep.subr.mxu0 0.0
        %2126 = vmatpush1.msra.mxu0 %v2120
        %2127 = vmatprep.subr.mxu0 0.0
        %2128 = vmatpush1.msra.mxu0 0.0
        %2129 = vmatprep.subr.mxu0 0.0
        %2130 = vmatpush1.msra.mxu0 0.0
        %2131 = vmatprep.subr.mxu0 0.0
        %2132 = vmatpush1.msra.mxu0 0.0
        %2133 = vmatprep.subr.mxu0 0.0
        %2134 = vmatpush1.msra.mxu0 0.0
        %2135 = vmatprep.subr.mxu0 0.0
        %2136 = vmatpush1.msra.mxu0 0.0
        %2137 = vmatprep.subr.mxu0 0.0
        %2138 = vmatpush1.msra.mxu0 0.0
        %2139 = vmatprep.subr.mxu0 0.0
        %2140 = vmatpush1.msra.mxu0 0.0
        %2141 = vmatprep.subr.mxu0 0.0
        %2142 = vmatpush1.msra.mxu0 0.0
        %2143 = vmatprep.subr.mxu0 0.0
        %2144 = vmatpush1.msra.mxu0 0.0
        %2145 = vmatprep.subr.mxu0 0.0
        %2146 = vmatpush1.msra.mxu0 0.0
        %2147 = vmatprep.subr.mxu0 0.0
        %2148 = vmatpush1.msra.mxu0 0.0
        %2149 = vmatprep.subr.mxu0 0.0
        %2150 = vmatpush1.msra.mxu0 0.0
        %2151 = vmatprep.subr.mxu0 0.0
        %2152 = vmatpush1.msra.mxu0 0.0
        %2153 = vmatprep.subr.mxu0 0.0
        %2154 = vmatpush1.msra.mxu0 0.0
        %2155 = vmatprep.subr.mxu0 0.0
        %2156 = vmatpush1.msra.mxu0 0.0
        %2157 = vmatprep.subr.mxu0 0.0
        %2158 = vmatpush1.msra.mxu0 0.0
        %2159 = vmatprep.subr.mxu0 0.0
        %2160 = vmatpush1.msra.mxu0 0.0
        %2161 = vmatprep.subr.mxu0 0.0
        %2162 = vmatpush1.msra.mxu0 0.0
        %2163 = vmatprep.subr.mxu0 0.0
        %2164 = vmatpush1.msra.mxu0 0.0
        %2165 = vmatprep.subr.mxu0 0.0
        %2166 = vmatpush1.msra.mxu0 0.0
        %2167 = vmatprep.subr.mxu0 0.0
        %2168 = vmatpush1.msra.mxu0 0.0
        %2169 = vmatprep.subr.mxu0 0.0
        %2170 = vmatpush1.msra.mxu0 0.0
        %2171 = vmatprep.subr.mxu0 0.0
        %2172 = vmatpush1.msra.mxu0 0.0
        %2173 = vmatprep.subr.mxu0 0.0
        %2174 = vmatpush1.msra.mxu0 0.0
        %2175 = vmatprep.subr.mxu0 0.0
        %2176 = vmatpush1.msra.mxu0 0.0
        %2177 = vmatprep.subr.mxu0 0.0
        %2178 = vmatpush1.msra.mxu0 0.0
        %2179 = vmatprep.subr.mxu0 0.0
        %2180 = vmatpush1.msra.mxu0 0.0
        %2181 = vmatprep.subr.mxu0 0.0
        %2182 = vmatpush1.msra.mxu0 0.0
        %2183 = vmatprep.subr.mxu0 0.0
        %2184 = vmatpush1.msra.mxu0 0.0
        %2185 = vmatprep.subr.mxu0 0.0
        %2186 = vmatpush1.msra.mxu0 0.0
        %2187 = vmatprep.subr.mxu0 0.0
        %2188 = vmatpush1.msra.mxu0 0.0
        %2189 = vmatprep.mubr.f32.mxu0 0.0
        %2190 = vmatmul.mubr.f32.gmra.mrb[0].mxu0 %v2123
        %v2191 = vpop.f32.mrb[0].mxu0
        %v2192 = vadd.f32 0.0, %v2191
        %v2193 = vpop.f32.mrb[0].mxu0
        %2194 = vdwg.mxu0
        %2195 = vrot.lane.b32.xlu0 %v1857, 112
        %v2196 = vpop.permute.xlu0 %2195
        %2197 = vrot.lane.b32.xlu0 %v1857, 80
        %v2198 = vpop.permute.xlu0 %2197
        %v2199 = vsel %vm823, %v2196, 0
        %v2201 = vsel %vm823, %v2198, 0
        %2203 = vmatprep.subr.mxu0 0.0
        %2204 = vmatpush1.xpose.msra.mxu0 %v2201
        %2205 = vmatprep.subr.mxu0 0.0
        %2206 = vmatpush1.xpose.msra.mxu0 0.0
        %2207 = vmatprep.subr.mxu0 0.0
        %2208 = vmatpush1.xpose.msra.mxu0 0.0
        %2209 = vmatprep.subr.mxu0 0.0
        %2210 = vmatpush1.xpose.msra.mxu0 0.0
        %2211 = vmatprep.subr.mxu0 0.0
        %2212 = vmatpush1.xpose.msra.mxu0 0.0
        %2213 = vmatprep.subr.mxu0 0.0
        %2214 = vmatpush1.xpose.msra.mxu0 0.0
        %2215 = vmatprep.subr.mxu0 0.0
        %2216 = vmatpush1.xpose.msra.mxu0 0.0
        %2217 = vmatprep.subr.mxu0 0.0
        %2218 = vmatpush1.xpose.msra.mxu0 0.0
        %2219 = vmatprep.subr.mxu0 0.0
        %2220 = vmatpush1.xpose.msra.mxu0 0.0
        %2221 = vmatprep.subr.mxu0 0.0
        %2222 = vmatpush1.xpose.msra.mxu0 0.0
        %2223 = vmatprep.subr.mxu0 0.0
        %2224 = vmatpush1.xpose.msra.mxu0 0.0
        %2225 = vmatprep.subr.mxu0 0.0
        %2226 = vmatpush1.xpose.msra.mxu0 0.0
        %2227 = vmatprep.subr.mxu0 0.0
        %2228 = vmatpush1.xpose.msra.mxu0 0.0
        %2229 = vmatprep.subr.mxu0 0.0
        %2230 = vmatpush1.xpose.msra.mxu0 0.0
        %2231 = vmatprep.subr.mxu0 0.0
        %2232 = vmatpush1.xpose.msra.mxu0 0.0
        %2233 = vmatprep.subr.mxu0 0.0
        %2234 = vmatpush1.xpose.msra.mxu0 0.0
        %2235 = vmatprep.subr.mxu0 0.0
        %2236 = vmatpush1.xpose.msra.mxu0 0.0
        %2237 = vmatprep.subr.mxu0 0.0
        %2238 = vmatpush1.xpose.msra.mxu0 0.0
        %2239 = vmatprep.subr.mxu0 0.0
        %2240 = vmatpush1.xpose.msra.mxu0 0.0
        %2241 = vmatprep.subr.mxu0 0.0
        %2242 = vmatpush1.xpose.msra.mxu0 0.0
        %2243 = vmatprep.subr.mxu0 0.0
        %2244 = vmatpush1.xpose.msra.mxu0 0.0
        %2245 = vmatprep.subr.mxu0 0.0
        %2246 = vmatpush1.xpose.msra.mxu0 0.0
        %2247 = vmatprep.subr.mxu0 0.0
        %2248 = vmatpush1.xpose.msra.mxu0 0.0
        %2249 = vmatprep.subr.mxu0 0.0
        %2250 = vmatpush1.xpose.msra.mxu0 0.0
        %2251 = vmatprep.subr.mxu0 0.0
        %2252 = vmatpush1.xpose.msra.mxu0 0.0
        %2253 = vmatprep.subr.mxu0 0.0
        %2254 = vmatpush1.xpose.msra.mxu0 0.0
        %2255 = vmatprep.subr.mxu0 0.0
        %2256 = vmatpush1.xpose.msra.mxu0 0.0
        %2257 = vmatprep.subr.mxu0 0.0
        %2258 = vmatpush1.xpose.msra.mxu0 0.0
        %2259 = vmatprep.subr.mxu0 0.0
        %2260 = vmatpush1.xpose.msra.mxu0 0.0
        %2261 = vmatprep.subr.mxu0 0.0
        %2262 = vmatpush1.xpose.msra.mxu0 0.0
        %2263 = vmatprep.subr.mxu0 0.0
        %2264 = vmatpush1.xpose.msra.mxu0 0.0
        %2265 = vmatprep.subr.mxu0 0.0
        %2266 = vmatpush1.xpose.msra.mxu0 0.0
        %2267 = vmatprep.mubr.f32.mxu0 0.0
        %2268 = vmatmul.mubr.f32.gmra.mrb[0].mxu0 %v2199
        %v2269 = vpop.f32.mrb[0].mxu0
        %v2270 = vadd.f32 0.0, %v2269
        %v2271 = vpop.f32.mrb[0].mxu0
        %2272 = vdwg.mxu0
        %v2273 = vsel %vm823, %v2270, -inf
        %2274 = vmax.xlane.f32.xlu0 %v2273
        %v2275 = vpop.xlane.xlu0 %2274
        %v2276 = vsub.f32 %v2270, %v2275
        %v2277 = vmul.f32 %v2276, 1.442695
        %v2278 = vpow.pop %v2277
        %v2279 = vsel %vm823, %v2278, 0.0
        %2280 = vadd.xlane.f32.xlu0 %v2279
        %v2281 = vpop.xlane.xlu0 %2280
        %v2282 = vrcp.pop %v2281
        %v2283 = vmul.f32 %v2278, %v2282
        %s2284 = scalar_lea.vmem %s714, 48 [#allocation5]
        %2285 = vst.msk [vmem:[%s2284] sm:$0xff] %vm823, %v2283
        %2286 = vrot.lane.b32.xlu0 %v1857, 48
        %v2287 = vpop.permute.xlu0 %2286
        %v2290 = vsel %vm823, %v2283, 0
        %2292 = vmatprep.subr.mxu0 0.0
        %2293 = vmatpush1.msra.mxu0 %v2287
        %2294 = vmatprep.subr.mxu0 0.0
        %2295 = vmatpush1.msra.mxu0 0.0
        %2296 = vmatprep.subr.mxu0 0.0
        %2297 = vmatpush1.msra.mxu0 0.0
        %2298 = vmatprep.subr.mxu0 0.0
        %2299 = vmatpush1.msra.mxu0 0.0
        %2300 = vmatprep.subr.mxu0 0.0
        %2301 = vmatpush1.msra.mxu0 0.0
        %2302 = vmatprep.subr.mxu0 0.0
        %2303 = vmatpush1.msra.mxu0 0.0
        %2304 = vmatprep.subr.mxu0 0.0
        %2305 = vmatpush1.msra.mxu0 0.0
        %2306 = vmatprep.subr.mxu0 0.0
        %2307 = vmatpush1.msra.mxu0 0.0
        %2308 = vmatprep.subr.mxu0 0.0
        %2309 = vmatpush1.msra.mxu0 0.0
        %2310 = vmatprep.subr.mxu0 0.0
        %2311 = vmatpush1.msra.mxu0 0.0
        %2312 = vmatprep.subr.mxu0 0.0
        %2313 = vmatpush1.msra.mxu0 0.0
        %2314 = vmatprep.subr.mxu0 0.0
        %2315 = vmatpush1.msra.mxu0 0.0
        %2316 = vmatprep.subr.mxu0 0.0
        %2317 = vmatpush1.msra.mxu0 0.0
        %2318 = vmatprep.subr.mxu0 0.0
        %2319 = vmatpush1.msra.mxu0 0.0
        %2320 = vmatprep.subr.mxu0 0.0
        %2321 = vmatpush1.msra.mxu0 0.0
        %2322 = vmatprep.subr.mxu0 0.0
        %2323 = vmatpush1.msra.mxu0 0.0
        %2324 = vmatprep.subr.mxu0 0.0
        %2325 = vmatpush1.msra.mxu0 0.0
        %2326 = vmatprep.subr.mxu0 0.0
        %2327 = vmatpush1.msra.mxu0 0.0
        %2328 = vmatprep.subr.mxu0 0.0
        %2329 = vmatpush1.msra.mxu0 0.0
        %2330 = vmatprep.subr.mxu0 0.0
        %2331 = vmatpush1.msra.mxu0 0.0
        %2332 = vmatprep.subr.mxu0 0.0
        %2333 = vmatpush1.msra.mxu0 0.0
        %2334 = vmatprep.subr.mxu0 0.0
        %2335 = vmatpush1.msra.mxu0 0.0
        %2336 = vmatprep.subr.mxu0 0.0
        %2337 = vmatpush1.msra.mxu0 0.0
        %2338 = vmatprep.subr.mxu0 0.0
        %2339 = vmatpush1.msra.mxu0 0.0
        %2340 = vmatprep.subr.mxu0 0.0
        %2341 = vmatpush1.msra.mxu0 0.0
        %2342 = vmatprep.subr.mxu0 0.0
        %2343 = vmatpush1.msra.mxu0 0.0
        %2344 = vmatprep.subr.mxu0 0.0
        %2345 = vmatpush1.msra.mxu0 0.0
        %2346 = vmatprep.subr.mxu0 0.0
        %2347 = vmatpush1.msra.mxu0 0.0
        %2348 = vmatprep.subr.mxu0 0.0
        %2349 = vmatpush1.msra.mxu0 0.0
        %2350 = vmatprep.subr.mxu0 0.0
        %2351 = vmatpush1.msra.mxu0 0.0
        %2352 = vmatprep.subr.mxu0 0.0
        %2353 = vmatpush1.msra.mxu0 0.0
        %2354 = vmatprep.subr.mxu0 0.0
        %2355 = vmatpush1.msra.mxu0 0.0
        %2356 = vmatprep.mubr.f32.mxu0 0.0
        %2357 = vmatmul.mubr.f32.gmra.mrb[0].mxu0 %v2290
        %v2358 = vpop.f32.mrb[0].mxu0
        %v2359 = vadd.f32 0.0, %v2358
        %v2360 = vpop.f32.mrb[0].mxu0
        %2361 = vdwg.mxu0
        %2362 = vrot.lane.b32.xlu0 %v1857, 104
        %v2363 = vpop.permute.xlu0 %2362
        %2364 = vrot.lane.b32.xlu0 %v1857, 72
        %v2365 = vpop.permute.xlu0 %2364
        %v2366 = vsel %vm823, %v2363, 0
        %v2368 = vsel %vm823, %v2365, 0
        %2370 = vmatprep.subr.mxu0 0.0
        %2371 = vmatpush1.xpose.msra.mxu0 %v2368
        %2372 = vmatprep.subr.mxu0 0.0
        %2373 = vmatpush1.xpose.msra.mxu0 0.0
        %2374 = vmatprep.subr.mxu0 0.0
        %2375 = vmatpush1.xpose.msra.mxu0 0.0
        %2376 = vmatprep.subr.mxu0 0.0
        %2377 = vmatpush1.xpose.msra.mxu0 0.0
        %2378 = vmatprep.subr.mxu0 0.0
        %2379 = vmatpush1.xpose.msra.mxu0 0.0
        %2380 = vmatprep.subr.mxu0 0.0
        %2381 = vmatpush1.xpose.msra.mxu0 0.0
        %2382 = vmatprep.subr.mxu0 0.0
        %2383 = vmatpush1.xpose.msra.mxu0 0.0
        %2384 = vmatprep.subr.mxu0 0.0
        %2385 = vmatpush1.xpose.msra.mxu0 0.0
        %2386 = vmatprep.subr.mxu0 0.0
        %2387 = vmatpush1.xpose.msra.mxu0 0.0
        %2388 = vmatprep.subr.mxu0 0.0
        %2389 = vmatpush1.xpose.msra.mxu0 0.0
        %2390 = vmatprep.subr.mxu0 0.0
        %2391 = vmatpush1.xpose.msra.mxu0 0.0
        %2392 = vmatprep.subr.mxu0 0.0
        %2393 = vmatpush1.xpose.msra.mxu0 0.0
        %2394 = vmatprep.subr.mxu0 0.0
        %2395 = vmatpush1.xpose.msra.mxu0 0.0
        %2396 = vmatprep.subr.mxu0 0.0
        %2397 = vmatpush1.xpose.msra.mxu0 0.0
        %2398 = vmatprep.subr.mxu0 0.0
        %2399 = vmatpush1.xpose.msra.mxu0 0.0
        %2400 = vmatprep.subr.mxu0 0.0
        %2401 = vmatpush1.xpose.msra.mxu0 0.0
        %2402 = vmatprep.subr.mxu0 0.0
        %2403 = vmatpush1.xpose.msra.mxu0 0.0
        %2404 = vmatprep.subr.mxu0 0.0
        %2405 = vmatpush1.xpose.msra.mxu0 0.0
        %2406 = vmatprep.subr.mxu0 0.0
        %2407 = vmatpush1.xpose.msra.mxu0 0.0
        %2408 = vmatprep.subr.mxu0 0.0
        %2409 = vmatpush1.xpose.msra.mxu0 0.0
        %2410 = vmatprep.subr.mxu0 0.0
        %2411 = vmatpush1.xpose.msra.mxu0 0.0
        %2412 = vmatprep.subr.mxu0 0.0
        %2413 = vmatpush1.xpose.msra.mxu0 0.0
        %2414 = vmatprep.subr.mxu0 0.0
        %2415 = vmatpush1.xpose.msra.mxu0 0.0
        %2416 = vmatprep.subr.mxu0 0.0
        %2417 = vmatpush1.xpose.msra.mxu0 0.0
        %2418 = vmatprep.subr.mxu0 0.0
        %2419 = vmatpush1.xpose.msra.mxu0 0.0
        %2420 = vmatprep.subr.mxu0 0.0
        %2421 = vmatpush1.xpose.msra.mxu0 0.0
        %2422 = vmatprep.subr.mxu0 0.0
        %2423 = vmatpush1.xpose.msra.mxu0 0.0
        %2424 = vmatprep.subr.mxu0 0.0
        %2425 = vmatpush1.xpose.msra.mxu0 0.0
        %2426 = vmatprep.subr.mxu0 0.0
        %2427 = vmatpush1.xpose.msra.mxu0 0.0
        %2428 = vmatprep.subr.mxu0 0.0
        %2429 = vmatpush1.xpose.msra.mxu0 0.0
        %2430 = vmatprep.subr.mxu0 0.0
        %2431 = vmatpush1.xpose.msra.mxu0 0.0
        %2432 = vmatprep.subr.mxu0 0.0
        %2433 = vmatpush1.xpose.msra.mxu0 0.0
        %2434 = vmatprep.mubr.f32.mxu0 0.0
        %2435 = vmatmul.mubr.f32.gmra.mrb[0].mxu0 %v2366
        %v2436 = vpop.f32.mrb[0].mxu0
        %v2437 = vadd.f32 0.0, %v2436
        %v2438 = vpop.f32.mrb[0].mxu0
        %2439 = vdwg.mxu0
        %v2440 = vsel %vm823, %v2437, -inf
        %2441 = vmax.xlane.f32.xlu0 %v2440
        %v2442 = vpop.xlane.xlu0 %2441
        %v2443 = vsub.f32 %v2437, %v2442
        %v2444 = vmul.f32 %v2443, 1.442695
        %v2445 = vpow.pop %v2444
        %v2446 = vsel %vm823, %v2445, 0.0
        %2447 = vadd.xlane.f32.xlu0 %v2446
        %v2448 = vpop.xlane.xlu0 %2447
        %v2449 = vrcp.pop %v2448
        %v2450 = vmul.f32 %v2445, %v2449
        %s2451 = scalar_lea.vmem %s714, 56 [#allocation5]
        %2452 = vst.msk [vmem:[%s2451] sm:$0xff] %vm823, %v2450
        %2453 = vrot.lane.b32.xlu0 %v1857, 40
        %v2454 = vpop.permute.xlu0 %2453
        %v2457 = vsel %vm823, %v2450, 0
        %2459 = vmatprep.subr.mxu0 0.0
        %2460 = vmatpush1.msra.mxu0 %v2454
        %2461 = vmatprep.subr.mxu0 0.0
        %2462 = vmatpush1.msra.mxu0 0.0
        %2463 = vmatprep.subr.mxu0 0.0
        %2464 = vmatpush1.msra.mxu0 0.0
        %2465 = vmatprep.subr.mxu0 0.0
        %2466 = vmatpush1.msra.mxu0 0.0
        %2467 = vmatprep.subr.mxu0 0.0
        %2468 = vmatpush1.msra.mxu0 0.0
        %2469 = vmatprep.subr.mxu0 0.0
        %2470 = vmatpush1.msra.mxu0 0.0
        %2471 = vmatprep.subr.mxu0 0.0
        %2472 = vmatpush1.msra.mxu0 0.0
        %2473 = vmatprep.subr.mxu0 0.0
        %2474 = vmatpush1.msra.mxu0 0.0
        %2475 = vmatprep.subr.mxu0 0.0
        %2476 = vmatpush1.msra.mxu0 0.0
        %2477 = vmatprep.subr.mxu0 0.0
        %2478 = vmatpush1.msra.mxu0 0.0
        %2479 = vmatprep.subr.mxu0 0.0
        %2480 = vmatpush1.msra.mxu0 0.0
        %2481 = vmatprep.subr.mxu0 0.0
        %2482 = vmatpush1.msra.mxu0 0.0
        %2483 = vmatprep.subr.mxu0 0.0
        %2484 = vmatpush1.msra.mxu0 0.0
        %2485 = vmatprep.subr.mxu0 0.0
        %2486 = vmatpush1.msra.mxu0 0.0
        %2487 = vmatprep.subr.mxu0 0.0
        %2488 = vmatpush1.msra.mxu0 0.0
        %2489 = vmatprep.subr.mxu0 0.0
        %2490 = vmatpush1.msra.mxu0 0.0
        %2491 = vmatprep.subr.mxu0 0.0
        %2492 = vmatpush1.msra.mxu0 0.0
        %2493 = vmatprep.subr.mxu0 0.0
        %2494 = vmatpush1.msra.mxu0 0.0
        %2495 = vmatprep.subr.mxu0 0.0
        %2496 = vmatpush1.msra.mxu0 0.0
        %2497 = vmatprep.subr.mxu0 0.0
        %2498 = vmatpush1.msra.mxu0 0.0
        %2499 = vmatprep.subr.mxu0 0.0
        %2500 = vmatpush1.msra.mxu0 0.0
        %2501 = vmatprep.subr.mxu0 0.0
        %2502 = vmatpush1.msra.mxu0 0.0
        %2503 = vmatprep.subr.mxu0 0.0
        %2504 = vmatpush1.msra.mxu0 0.0
        %2505 = vmatprep.subr.mxu0 0.0
        %2506 = vmatpush1.msra.mxu0 0.0
        %2507 = vmatprep.subr.mxu0 0.0
        %2508 = vmatpush1.msra.mxu0 0.0
        %2509 = vmatprep.subr.mxu0 0.0
        %2510 = vmatpush1.msra.mxu0 0.0
        %2511 = vmatprep.subr.mxu0 0.0
        %2512 = vmatpush1.msra.mxu0 0.0
        %2513 = vmatprep.subr.mxu0 0.0
        %2514 = vmatpush1.msra.mxu0 0.0
        %2515 = vmatprep.subr.mxu0 0.0
        %2516 = vmatpush1.msra.mxu0 0.0
        %2517 = vmatprep.subr.mxu0 0.0
        %2518 = vmatpush1.msra.mxu0 0.0
        %2519 = vmatprep.subr.mxu0 0.0
        %2520 = vmatpush1.msra.mxu0 0.0
        %2521 = vmatprep.subr.mxu0 0.0
        %2522 = vmatpush1.msra.mxu0 0.0
        %2523 = vmatprep.mubr.f32.mxu0 0.0
        %2524 = vmatmul.mubr.f32.gmra.mrb[0].mxu0 %v2457
        %v2525 = vpop.f32.mrb[0].mxu0
        %v2526 = vadd.f32 0.0, %v2525
        %v2527 = vpop.f32.mrb[0].mxu0
        %2528 = vdwg.mxu0
        %2530 = vrot.lane.b32.xlu0 %v2192, 8
        %v2531 = vpop.permute.xlu0 %2530
        %2534 = vrot.lane.b32.xlu0 %v2359, 16
        %v2535 = vpop.permute.xlu0 %2534
        %2538 = vrot.lane.b32.xlu0 %v2526, 24
        %v2539 = vpop.permute.xlu0 %2538
        %v2541 = vsel %vm823, %v2025, %v2531
        %v2542 = vsel %vm1500, %v2541, %v2535
        %v2543 = vsel %vm1502, %v2542, %v2539
        %s2544 = scalar_lea.vmem %s5, 16
        %v2545 = vld [vmem:[%s2544] sm:$0xf]
        %v2546 = vld [vmem:[%s2544 + $0x4] sm:$0xf]
        %v2547 = vld [vmem:[%s2544 + $0x8] sm:$0xf]
        %v2548 = vld [vmem:[%s2544 + $0xc] sm:$0xf]
        %s2549 = scalar_lea.vmem %s6, 1
        %v2550 = vld [vmem:[%s2549] sm:$0x1]
        %v2551 = vpack.c.bf16 %v2543, %v2543
        %v2553 = vlaneseq
        %v2554 = vshrl.u32 %v2553, 7
        %v2555 = vsub.s32 0, %v2554
        %v2556 = vrot.slane %v2550, %v2555
        %v2562 = vunpack.c.l.b16 %v2545
        %v2563 = vunpack.c.l.b16 %v2546
        %v2564 = vunpack.c.l.b16 %v2547
        %v2565 = vunpack.c.l.b16 %v2548
        %v2566 = vpack.c.b16 %v2563, %v2562
        %v2567 = vpack.c.b16 %v2565, %v2564
        %v2571 = vsel %vm723, %v2551, 0
        %2573 = vmatprep.subr.bf16.mxu0 0
        %2574 = vmatpush1.bf16.msra.mxu0 %v2566
        %2575 = vmatprep.subr.bf16.mxu0 0
        %2576 = vmatpush1.bf16.msra.mxu0 %v2567
        %2577 = vmatprep.subr.bf16.mxu0 0
        %2578 = vmatpush1.bf16.msra.mxu0 0
        %2579 = vmatprep.subr.bf16.mxu0 0
        %2580 = vmatpush1.bf16.msra.mxu0 0
        %2581 = vmatprep.subr.bf16.mxu0 0
        %2582 = vmatpush1.bf16.msra.mxu0 0
        %2583 = vmatprep.subr.bf16.mxu0 0
        %2584 = vmatpush1.bf16.msra.mxu0 0
        %2585 = vmatprep.subr.bf16.mxu0 0
        %2586 = vmatpush1.bf16.msra.mxu0 0
        %2587 = vmatprep.subr.bf16.mxu0 0
        %2588 = vmatpush1.bf16.msra.mxu0 0
        %2589 = vmatprep.subr.bf16.mxu0 0
        %2590 = vmatpush1.bf16.msra.mxu0 0
        %2591 = vmatprep.subr.bf16.mxu0 0
        %2592 = vmatpush1.bf16.msra.mxu0 0
        %2593 = vmatprep.subr.bf16.mxu0 0
        %2594 = vmatpush1.bf16.msra.mxu0 0
        %2595 = vmatprep.subr.bf16.mxu0 0
        %2596 = vmatpush1.bf16.msra.mxu0 0
        %2597 = vmatprep.subr.bf16.mxu0 0
        %2598 = vmatpush1.bf16.msra.mxu0 0
        %2599 = vmatprep.subr.bf16.mxu0 0
        %2600 = vmatpush1.bf16.msra.mxu0 0
        %2601 = vmatprep.subr.bf16.mxu0 0
        %2602 = vmatpush1.bf16.msra.mxu0 0
        %2603 = vmatprep.subr.bf16.mxu0 0
        %2604 = vmatpush1.bf16.msra.mxu0 0
        %2605 = vmatprep.mubr.bf16.mxu0 0
        %2606 = vmatmul.mubr.bf16.gmra.mrb[0].mxu0 %v2571
        %v2607 = vpop.f32.mrb[0].mxu0
        %v2608 = vadd.f32 %v2556, %v2607
        %v2609 = vpop.f32.mrb[0].mxu0
        %v2610 = vpop.f32.mrb[0].mxu0
        %v2611 = vpop.f32.mrb[0].mxu0
        %2612 = vdwg.mxu0
        %v2613 = vadd.f32 %v2608, %v1790
        %s2614 = scalar_lea.vmem %s7, 1
        %v2615 = vld [vmem:[%s2614] sm:$0x1]
        %s2616 = scalar_lea.vmem %s8, 1
        %v2617 = vld [vmem:[%s2616] sm:$0x1]
        %v2618 = vsel %vm723, %v2613, 0.0
        %2619 = vadd.xlane.f32.xlu0 %v2618
        %v2620 = vpop.xlane.xlu0 %2619
        %v2621 = vmul.f32 %v2620, %v727
        %v2622 = vsub.f32 %v2613, %v2621
        %v2623 = vmul.f32 %v2622, %v2622
        %v2624 = vsel %vm723, %v2623, 0.0
        %2625 = vadd.xlane.f32.xlu0 %v2624
        %v2626 = vpop.xlane.xlu0 %2625
        %v2627 = vmul.f32 %v2626, %v727
        %v2628 = vadd.f32 %v2627, 1e-05
        %v2629 = vrsqrt.pop %v2628
        %v2630 = vmul.f32 %v2622, %v2629
        %v2632 = vlaneseq
        %v2633 = vshrl.u32 %v2632, 7
        %v2634 = vsub.s32 0, %v2633
        %v2635 = vrot.slane %v2615, %v2634
        %v2637 = vmul.f32 %v2630, %v2635
        %v2639 = vlaneseq
        %v2640 = vshrl.u32 %v2639, 7
        %v2641 = vsub.s32 0, %v2640
        %v2642 = vrot.slane %v2617, %v2641
        %v2644 = vadd.f32 %v2637, %v2642
        %s2645 = scalar_lea.vmem %s9, 16
        %v2646 = vld [vmem:[%s2645] sm:$0xf]
        %v2647 = vld [vmem:[%s2645 + $0x4] sm:$0xf]
        %v2648 = vld [vmem:[%s2645 + $0x8] sm:$0xf]
        %v2649 = vld [vmem:[%s2645 + $0xc] sm:$0xf]
        %s2650 = scalar_lea.vmem %s10, 1
        %v2651 = vld [vmem:[%s2650] sm:$0x1]
        %v2652 = vpack.c.bf16 %v2644, %v2644
        %v2654 = vlaneseq
        %v2655 = vshrl.u32 %v2654, 7
        %v2656 = vsub.s32 0, %v2655
        %v2657 = vrot.slane %v2651, %v2656
        %v2663 = vunpack.c.l.b16 %v2646
        %v2664 = vunpack.c.l.b16 %v2647
        %v2665 = vunpack.c.l.b16 %v2648
        %v2666 = vunpack.c.l.b16 %v2649
        %v2667 = vpack.c.b16 %v2664, %v2663
        %v2668 = vpack.c.b16 %v2666, %v2665
        %v2672 = vsel %vm723, %v2652, 0
        %2674 = vmatprep.subr.bf16.mxu0 0
        %2675 = vmatpush1.bf16.msra.mxu0 %v2667
        %2676 = vmatprep.subr.bf16.mxu0 0
        %2677 = vmatpush1.bf16.msra.mxu0 %v2668
        %2678 = vmatprep.subr.bf16.mxu0 0
        %2679 = vmatpush1.bf16.msra.mxu0 0
        %2680 = vmatprep.subr.bf16.mxu0 0
        %2681 = vmatpush1.bf16.msra.mxu0 0
        %2682 = vmatprep.subr.bf16.mxu0 0
        %2683 = vmatpush1.bf16.msra.mxu0 0
        %2684 = vmatprep.subr.bf16.mxu0 0
        %2685 = vmatpush1.bf16.msra.mxu0 0
        %2686 = vmatprep.subr.bf16.mxu0 0
        %2687 = vmatpush1.bf16.msra.mxu0 0
        %2688 = vmatprep.subr.bf16.mxu0 0
        %2689 = vmatpush1.bf16.msra.mxu0 0
        %2690 = vmatprep.subr.bf16.mxu0 0
        %2691 = vmatpush1.bf16.msra.mxu0 0
        %2692 = vmatprep.subr.bf16.mxu0 0
        %2693 = vmatpush1.bf16.msra.mxu0 0
        %2694 = vmatprep.subr.bf16.mxu0 0
        %2695 = vmatpush1.bf16.msra.mxu0 0
        %2696 = vmatprep.subr.bf16.mxu0 0
        %2697 = vmatpush1.bf16.msra.mxu0 0
        %2698 = vmatprep.subr.bf16.mxu0 0
        %2699 = vmatpush1.bf16.msra.mxu0 0
        %2700 = vmatprep.subr.bf16.mxu0 0
        %2701 = vmatpush1.bf16.msra.mxu0 0
        %2702 = vmatprep.subr.bf16.mxu0 0
        %2703 = vmatpush1.bf16.msra.mxu0 0
        %2704 = vmatprep.subr.bf16.mxu0 0
        %2705 = vmatpush1.bf16.msra.mxu0 0
        %2706 = vmatprep.mubr.bf16.mxu0 0
        %2707 = vmatmul.mubr.bf16.gmra.mrb[0].mxu0 %v2672
        %v2708 = vpop.f32.mrb[0].mxu0
        %v2709 = vadd.f32 %v2657, %v2708
        %v2710 = vpop.f32.mrb[0].mxu0
        %v2711 = vpop.f32.mrb[0].mxu0
        %v2712 = vpop.f32.mrb[0].mxu0
        %2713 = vdwg.mxu0
        %v2714 = vmul.f32 %v2709, 0.5
        %v2715 = vmul.f32 %v2709, 0.044715
        %v2716 = vmul.f32 %v2715, %v2709
        %v2717 = vmul.f32 %v2716, %v2709
        %v2718 = vadd.f32 %v2709, %v2717
        %v2719 = vmul.f32 %v2718, 0.7978846
        %v2720 = vtanh.pop %v2719
        %v2721 = vadd.f32 %v2720, 1.0
        %v2722 = vmul.f32 %v2714, %v2721
        %s2723 = scalar_lea.vmem %s11, 32
        %v2724 = vld [vmem:[%s2723] sm:$0xf]
        %v2725 = vld [vmem:[%s2723 + $0x4] sm:$0xf]
        %v2726 = vld [vmem:[%s2723 + $0x8] sm:$0xf]
        %v2727 = vld [vmem:[%s2723 + $0xc] sm:$0xf]
        %v2728 = vld [vmem:[%s2723 + $0x10] sm:$0xf]
        %v2729 = vld [vmem:[%s2723 + $0x14] sm:$0xf]
        %v2730 = vld [vmem:[%s2723 + $0x18] sm:$0xf]
        %v2731 = vld [vmem:[%s2723 + $0x1c] sm:$0xf]
        %s2732 = scalar_lea.vmem %s12, 1
        %v2733 = vld [vmem:[%s2732] sm:$0x1]
        %v2734 = vpack.c.bf16 %v2722, %v2722
        %v2736 = vlaneseq
        %v2737 = vshrl.u32 %v2736, 7
        %v2738 = vsub.s32 0, %v2737
        %v2739 = vrot.slane %v2733, %v2738
        %v2749 = vunpack.c.l.b16 %v2724
        %v2750 = vunpack.c.l.b16 %v2725
        %v2751 = vunpack.c.l.b16 %v2726
        %v2752 = vunpack.c.l.b16 %v2727
        %v2753 = vunpack.c.l.b16 %v2728
        %v2754 = vunpack.c.l.b16 %v2729
        %v2755 = vunpack.c.l.b16 %v2730
        %v2756 = vunpack.c.l.b16 %v2731
        %v2757 = vpack.c.b16 %v2750, %v2749
        %v2758 = vpack.c.b16 %v2752, %v2751
        %v2759 = vpack.c.b16 %v2754, %v2753
        %v2760 = vpack.c.b16 %v2756, %v2755
        %v2766 = vsel %vm1717, %v2734, 0
        %2768 = vmatprep.subr.bf16.mxu0 0
        %2769 = vmatpush1.bf16.msra.mxu0 %v2757
        %2770 = vmatprep.subr.bf16.mxu0 0
        %2771 = vmatpush1.bf16.msra.mxu0 %v2758
        %2772 = vmatprep.subr.bf16.mxu0 0
        %2773 = vmatpush1.bf16.msra.mxu0 %v2759
        %2774 = vmatprep.subr.bf16.mxu0 0
        %2775 = vmatpush1.bf16.msra.mxu0 %v2760
        %2776 = vmatprep.subr.bf16.mxu0 0
        %2777 = vmatpush1.bf16.msra.mxu0 0
        %2778 = vmatprep.subr.bf16.mxu0 0
        %2779 = vmatpush1.bf16.msra.mxu0 0
        %2780 = vmatprep.subr.bf16.mxu0 0
        %2781 = vmatpush1.bf16.msra.mxu0 0
        %2782 = vmatprep.subr.bf16.mxu0 0
        %2783 = vmatpush1.bf16.msra.mxu0 0
        %2784 = vmatprep.subr.bf16.mxu0 0
        %2785 = vmatpush1.bf16.msra.mxu0 0
        %2786 = vmatprep.subr.bf16.mxu0 0
        %2787 = vmatpush1.bf16.msra.mxu0 0
        %2788 = vmatprep.subr.bf16.mxu0 0
        %2789 = vmatpush1.bf16.msra.mxu0 0
        %2790 = vmatprep.subr.bf16.mxu0 0
        %2791 = vmatpush1.bf16.msra.mxu0 0
        %2792 = vmatprep.subr.bf16.mxu0 0
        %2793 = vmatpush1.bf16.msra.mxu0 0
        %2794 = vmatprep.subr.bf16.mxu0 0
        %2795 = vmatpush1.bf16.msra.mxu0 0
        %2796 = vmatprep.subr.bf16.mxu0 0
        %2797 = vmatpush1.bf16.msra.mxu0 0
        %2798 = vmatprep.subr.bf16.mxu0 0
        %2799 = vmatpush1.bf16.msra.mxu0 0
        %2800 = vmatprep.mubr.bf16.mxu0 0
        %2801 = vmatmul.mubr.bf16.gmra.mrb[0].mxu0 %v2766
        %v2802 = vpop.f32.mrb[0].mxu0
        %v2803 = vadd.f32 %v2739, %v2802
        %v2804 = vpop.f32.mrb[0].mxu0
        %v2805 = vpop.f32.mrb[0].mxu0
        %v2806 = vpop.f32.mrb[0].mxu0
        %2807 = vdwg.mxu0
        %v2808 = vadd.f32 %v2803, %v2644
        %s2809 = scalar_lea.vmem %s13, 1
        %v2810 = vld [vmem:[%s2809] sm:$0x1]
        %s2811 = scalar_lea.vmem %s14, 1
        %v2812 = vld [vmem:[%s2811] sm:$0x1]
        %v2813 = vsel %vm723, %v2808, 0.0
        %2814 = vadd.xlane.f32.xlu0 %v2813
        %v2815 = vpop.xlane.xlu0 %2814
        %v2816 = vmul.f32 %v2815, %v727
        %v2817 = vsub.f32 %v2808, %v2816
        %v2818 = vmul.f32 %v2817, %v2817
        %v2819 = vsel %vm723, %v2818, 0.0
        %2820 = vadd.xlane.f32.xlu0 %v2819
        %v2821 = vpop.xlane.xlu0 %2820
        %v2822 = vmul.f32 %v2821, %v727
        %v2823 = vadd.f32 %v2822, 1e-05
        %v2824 = vrsqrt.pop %v2823
        %v2825 = vmul.f32 %v2817, %v2824
        %v2827 = vlaneseq
        %v2828 = vshrl.u32 %v2827, 7
        %v2829 = vsub.s32 0, %v2828
        %v2830 = vrot.slane %v2810, %v2829
        %v2832 = vmul.f32 %v2825, %v2830
        %v2834 = vlaneseq
        %v2835 = vshrl.u32 %v2834, 7
        %v2836 = vsub.s32 0, %v2835
        %v2837 = vrot.slane %v2812, %v2836
        %v2839 = vadd.f32 %v2832, %v2837
        %s2840 = scalar_lea.vmem %s708, 16 [#allocation4]
        %2841 = vst.msk [vmem:[%s2840] sm:$0xff] %vm723, %v2839
        %v2842 = vld [vmem:[%s15] sm:$0xf]
        %v2843 = vld [vmem:[%s15 + $0x4] sm:$0xf]
        %v2844 = vld [vmem:[%s15 + $0x8] sm:$0xf]
        %v2845 = vld [vmem:[%s15 + $0xc] sm:$0xf]
        %v2846 = vld [vmem:[%s16] sm:$0x1]
        %v2847 = vpack.c.bf16 %v2839, %v2839
        %v2849 = vlaneseq
        %v2850 = vshrl.u32 %v2849, 7
        %v2851 = vsub.s32 0, %v2850
        %v2852 = vrot.slane %v2846, %v2851
        %v2858 = vunpack.c.l.b16 %v2842
        %v2859 = vunpack.c.l.b16 %v2843
        %v2860 = vunpack.c.l.b16 %v2844
        %v2861 = vunpack.c.l.b16 %v2845
        %v2862 = vpack.c.b16 %v2859, %v2858
        %v2863 = vpack.c.b16 %v2861, %v2860
        %v2867 = vsel %vm723, %v2847, 0
        %2869 = vmatprep.subr.bf16.mxu0 0
        %2870 = vmatpush1.bf16.msra.mxu0 %v2862
        %2871 = vmatprep.subr.bf16.mxu0 0
        %2872 = vmatpush1.bf16.msra.mxu0 %v2863
        %2873 = vmatprep.subr.bf16.mxu0 0
        %2874 = vmatpush1.bf16.msra.mxu0 0
        %2875 = vmatprep.subr.bf16.mxu0 0
        %2876 = vmatpush1.bf16.msra.mxu0 0
        %2877 = vmatprep.subr.bf16.mxu0 0
        %2878 = vmatpush1.bf16.msra.mxu0 0
        %2879 = vmatprep.subr.bf16.mxu0 0
        %2880 = vmatpush1.bf16.msra.mxu0 0
        %2881 = vmatprep.subr.bf16.mxu0 0
        %2882 = vmatpush1.bf16.msra.mxu0 0
        %2883 = vmatprep.subr.bf16.mxu0 0
        %2884 = vmatpush1.bf16.msra.mxu0 0
        %2885 = vmatprep.subr.bf16.mxu0 0
        %2886 = vmatpush1.bf16.msra.mxu0 0
        %2887 = vmatprep.subr.bf16.mxu0 0
        %2888 = vmatpush1.bf16.msra.mxu0 0
        %2889 = vmatprep.subr.bf16.mxu0 0
        %2890 = vmatpush1.bf16.msra.mxu0 0
        %2891 = vmatprep.subr.bf16.mxu0 0
        %2892 = vmatpush1.bf16.msra.mxu0 0
        %2893 = vmatprep.subr.bf16.mxu0 0
        %2894 = vmatpush1.bf16.msra.mxu0 0
        %2895 = vmatprep.subr.bf16.mxu0 0
        %2896 = vmatpush1.bf16.msra.mxu0 0
        %2897 = vmatprep.subr.bf16.mxu0 0
        %2898 = vmatpush1.bf16.msra.mxu0 0
        %2899 = vmatprep.subr.bf16.mxu0 0
        %2900 = vmatpush1.bf16.msra.mxu0 0
        %2901 = vmatprep.mubr.bf16.mxu0 0
        %2902 = vmatmul.mubr.bf16.gmra.mrb[0].mxu0 %v2867
        %v2903 = vpop.f32.mrb[0].mxu0
        %v2904 = vadd.f32 %v2852, %v2903
        %v2905 = vpop.f32.mrb[0].mxu0
        %v2906 = vpop.f32.mrb[0].mxu0
        %v2907 = vpop.f32.mrb[0].mxu0
        %2908 = vdwg.mxu0
        %v2909 = vmul.f32 %v2904, 0.5
        %v2910 = vmul.f32 %v2904, 0.044715
        %v2911 = vmul.f32 %v2910, %v2904
        %v2912 = vmul.f32 %v2911, %v2904
        %v2913 = vadd.f32 %v2904, %v2912
        %v2914 = vmul.f32 %v2913, 0.7978846
        %v2915 = vtanh.pop %v2914
        %v2916 = vadd.f32 %v2915, 1.0
        %v2917 = vmul.f32 %v2909, %v2916
        %v2918 = vld [vmem:[%s17] sm:$0x1]
        %v2919 = vld [vmem:[%s18] sm:$0x1]
        %v2920 = vsel %vm723, %v2917, 0.0
        %2921 = vadd.xlane.f32.xlu0 %v2920
        %v2922 = vpop.xlane.xlu0 %2921
        %v2923 = vmul.f32 %v2922, %v727
        %v2924 = vsub.f32 %v2917, %v2923
        %v2925 = vmul.f32 %v2924, %v2924
        %v2926 = vsel %vm723, %v2925, 0.0
        %2927 = vadd.xlane.f32.xlu0 %v2926
        %v2928 = vpop.xlane.xlu0 %2927
        %v2929 = vmul.f32 %v2928, %v727
        %v2930 = vadd.f32 %v2929, 1e-05
        %v2931 = vrsqrt.pop %v2930
        %v2932 = vmul.f32 %v2924, %v2931
        %v2934 = vlaneseq
        %v2935 = vshrl.u32 %v2934, 7
        %v2936 = vsub.s32 0, %v2935
        %v2937 = vrot.slane %v2918, %v2936
        %v2939 = vmul.f32 %v2932, %v2937
        %v2941 = vlaneseq
        %v2942 = vshrl.u32 %v2941, 7
        %v2943 = vsub.s32 0, %v2942
        %v2944 = vrot.slane %v2919, %v2943
        %v2946 = vadd.f32 %v2939, %v2944
        %v2947 = vld [vmem:[%s19] sm:$0xf]
        %v2948 = vld [vmem:[%s19 + $0x4] sm:$0xf]
        %v2949 = vld [vmem:[%s19 + $0x8] sm:$0xf]
        %v2950 = vld [vmem:[%s19 + $0xc] sm:$0xf]
        %v2951 = vld [vmem:[%s20] sm:$0x1]
        %v2952 = vpack.c.bf16 %v2946, %v2946
        %v2954 = vlaneseq
        %v2955 = vshrl.u32 %v2954, 7
        %v2956 = vsub.s32 0, %v2955
        %v2957 = vrot.slane %v2951, %v2956
        %v2963 = vunpack.c.l.b16 %v2947
        %v2964 = vunpack.c.l.b16 %v2948
        %v2965 = vunpack.c.l.b16 %v2949
        %v2966 = vunpack.c.l.b16 %v2950
        %v2967 = vpack.c.b16 %v2964, %v2963
        %v2968 = vpack.c.b16 %v2966, %v2965
        %v2972 = vsel %vm723, %v2952, 0
        %2974 = vmatprep.subr.bf16.mxu0 0
        %2975 = vmatpush1.bf16.msra.mxu0 %v2967
        %2976 = vmatprep.subr.bf16.mxu0 0
        %2977 = vmatpush1.bf16.msra.mxu0 %v2968
        %2978 = vmatprep.subr.bf16.mxu0 0
        %2979 = vmatpush1.bf16.msra.mxu0 0
        %2980 = vmatprep.subr.bf16.mxu0 0
        %2981 = vmatpush1.bf16.msra.mxu0 0
        %2982 = vmatprep.subr.bf16.mxu0 0
        %2983 = vmatpush1.bf16.msra.mxu0 0
        %2984 = vmatprep.subr.bf16.mxu0 0
        %2985 = vmatpush1.bf16.msra.mxu0 0
        %2986 = vmatprep.subr.bf16.mxu0 0
        %2987 = vmatpush1.bf16.msra.mxu0 0
        %2988 = vmatprep.subr.bf16.mxu0 0
        %2989 = vmatpush1.bf16.msra.mxu0 0
        %2990 = vmatprep.subr.bf16.mxu0 0
        %2991 = vmatpush1.bf16.msra.mxu0 0
        %2992 = vmatprep.subr.bf16.mxu0 0
        %2993 = vmatpush1.bf16.msra.mxu0 0
        %2994 = vmatprep.subr.bf16.mxu0 0
        %2995 = vmatpush1.bf16.msra.mxu0 0
        %2996 = vmatprep.subr.bf16.mxu0 0
        %2997 = vmatpush1.bf16.msra.mxu0 0
        %2998 = vmatprep.subr.bf16.mxu0 0
        %2999 = vmatpush1.bf16.msra.mxu0 0
        %3000 = vmatprep.subr.bf16.mxu0 0
        %3001 = vmatpush1.bf16.msra.mxu0 0
        %3002 = vmatprep.subr.bf16.mxu0 0
        %3003 = vmatpush1.bf16.msra.mxu0 0
        %3004 = vmatprep.subr.bf16.mxu0 0
        %3005 = vmatpush1.bf16.msra.mxu0 0
        %3006 = vmatprep.mubr.bf16.mxu0 0
        %3007 = vmatmul.mubr.bf16.gmra.mrb[0].mxu0 %v2972
        %v3008 = vpop.f32.mrb[0].mxu0
        %v3009 = vadd.f32 %v2957, %v3008
        %v3010 = vpop.f32.mrb[0].mxu0
        %v3011 = vpop.f32.mrb[0].mxu0
        %v3012 = vpop.f32.mrb[0].mxu0
        %3013 = vdwg.mxu0
        %3014 = vst [vmem:[%s702] sm:$0xff] %v3009
        %s3015 = sand.u32 %s492, 1
        %s3016 = scalar_lea.sflag [#allocation3], %s3015
        %s3017 = sand.u32 %s492, 1
        %s3018 = smul.addr %s3017, 8
        %s3019 = scalar_lea.vmem [#allocation2], %s3018
        %s3020 = sand.u32 %s518, 1
        %s3021 = sand.u32 %s518, 1
        %s3022 = smul.addr %s3021, 24
        %s3023 = scalar_lea.vmem [#allocation4], %s3022
        %s3024 = sand.u32 %s544, 1
        %s3025 = sand.u32 %s544, 1
        %s3026 = smul.addr %s3025, 64
        %s3027 = scalar_lea.vmem [#allocation5], %s3026
        // Predicated region
        $region105: #{roberta_forward.1} parent=103 // pred_check
          %p3028 = pneg %p502
        $region106: #{roberta_forward.1} parent=103 // pred_check_branch
          %3030 = sbr.rel (%p3028) target = $region108
        $region107: #{roberta_forward.1} parent=103 // pred_region
          %s3032 = ssub.s32 128, 128
          %3033 = vsyncadd %s3016, %s3032
          %s3034 = smul.addr %s38, 128
          %s3035 = scalar_lea.hbm %s21, %s3034
          %s3037 = sshll.u32 %s3019, 4
          %s3038 = int_to_ptr.vmem [resolvable:$true] %s3037
          %3040 = dma.vmem_to_hbm [thread:$0]  %s3038, 128, %s3035, %s3016
        $region108: #{roberta_forward.1} parent=103 // pred_fallthru
          _
        // Predicated region
        $region109: #{roberta_forward.1} parent=103 // pred_check
          %p3041 = pneg %p528
        $region110: #{roberta_forward.1} parent=103 // pred_check_branch
          %3043 = sbr.rel (%p3041) target = $region112
        $region111: #{roberta_forward.1} parent=103 // pred_region
          %s3044 = smul.addr %s38, 8
          %s3045 = scalar_lea.vmem %s22, %s3044
          // Predicated region
          $region113: #{roberta_forward.1} parent=111 // pred_check
            _
          $region114: #{roberta_forward.1} parent=111 // pred_check_branch
            %3047 = sbr.rel (0) target = $region116
          $region115: #{roberta_forward.1} parent=111 // pred_region
            // Predicated region
            $region117: #{roberta_forward.1} parent=115 // pred_check
              _
            $region118: #{roberta_forward.1} parent=115 // pred_check_branch
              %3049 = sbr.rel (0) target = $region120
            $region119: #{roberta_forward.1} parent=115 // pred_region
              // Predicated region
              $region132: #{roberta_forward.1} parent=119 // pred_check
                _
              $region133: #{roberta_forward.1} parent=119 // pred_check_branch
                %3068 = sbr.rel (0) target = $region135
              $region134: #{roberta_forward.1} parent=119 // pred_region
                loop: start=0, step=1, limit=1
                $region136: #{roberta_forward.1} parent=134 // loop_pre_header
                  _
                $region137: #{roberta_forward.1} parent=134 // loop_header
                  %s3070 = sphi 0, %s3074
                  %p3071 = scmp.ge.s32.totalorder %s3070, 1
                  %s3075 = sphi %s3023, %s3023
                  %s3076 = sphi %s3045, %s3045
                $region138: #{roberta_forward.1} parent=134 // loop_header_branch
                  %3073 = sbr.rel (%p3071) target = $region142
                $region139: #{roberta_forward.1} parent=134 // loop_body
                  %v3077 = vld [vmem:[%s3075] sm:$0xff]
                  %3078 = vst [vmem:[%s3076] sm:$0xff] %v3077
                  %v3079 = vld [vmem:[%s3075 + $0x8] sm:$0xff]
                  %3080 = vst [vmem:[%s3076 + $0x10] sm:$0xff] %v3079
                  %v3081 = vld [vmem:[%s3075 + $0x10] sm:$0xff]
                  %3082 = vst [vmem:[%s3076 + $0x20] sm:$0xff] %v3081
                $region140: #{roberta_forward.1} parent=134 // loop_footer
                  %s3074 = sadd.s32 1, %s3070
                $region141: #{roberta_forward.1} parent=134 // loop_footer_branch
                  %3069 = sbr.rel target = $region137
                $region142: #{roberta_forward.1} parent=134 // loop_exit
                  _
              $region135: #{roberta_forward.1} parent=119 // pred_fallthru
                _
              // Predicated region
              $region143: #{roberta_forward.1} parent=119 // pred_check
                _
              $region144: #{roberta_forward.1} parent=119 // pred_check_branch
                %3084 = sbr.rel target = $region146
              $region145: #{roberta_forward.1} parent=119 // pred_region
                _
              $region146: #{roberta_forward.1} parent=119 // pred_fallthru
                _
            $region120: #{roberta_forward.1} parent=115 // pred_fallthru
              _
            // Predicated region
            $region121: #{roberta_forward.1} parent=115 // pred_check
              _
            $region122: #{roberta_forward.1} parent=115 // pred_check_branch
              %3051 = sbr.rel target = $region124
            $region123: #{roberta_forward.1} parent=115 // pred_region
              loop: start=0, step=1, limit=1
              $region125: #{roberta_forward.1} parent=123 // loop_pre_header
                _
              $region126: #{roberta_forward.1} parent=123 // loop_header
                %s3054 = sphi 0, %s3058
                %p3055 = scmp.ge.s32.totalorder %s3054, 1
                %s3059 = sphi %s3023, %s3023
                %s3060 = sphi %s3045, %s3045
              $region127: #{roberta_forward.1} parent=123 // loop_header_branch
                %3057 = sbr.rel (%p3055) target = $region131
              $region128: #{roberta_forward.1} parent=123 // loop_body
                %v3061 = vld [vmem:[%s3059] sm:$0xff]
                %3062 = vst [vmem:[%s3060] sm:$0xff] %v3061
                %v3063 = vld [vmem:[%s3059 + $0x8] sm:$0xff]
                %3064 = vst [vmem:[%s3060 + $0x10] sm:$0xff] %v3063
                %v3065 = vld [vmem:[%s3059 + $0x10] sm:$0xff]
                %3066 = vst [vmem:[%s3060 + $0x20] sm:$0xff] %v3065
              $region129: #{roberta_forward.1} parent=123 // loop_footer
                %s3058 = sadd.s32 1, %s3054
              $region130: #{roberta_forward.1} parent=123 // loop_footer_branch
                %3053 = sbr.rel target = $region126
              $region131: #{roberta_forward.1} parent=123 // loop_exit
                _
            $region124: #{roberta_forward.1} parent=115 // pred_fallthru
              _
          $region116: #{roberta_forward.1} parent=111 // pred_fallthru
            _
          %3085 = vnop
        $region112: #{roberta_forward.1} parent=103 // pred_fallthru
          _
        // Predicated region
        $region147: #{roberta_forward.1} parent=103 // pred_check
          %p3086 = pneg %p554
        $region148: #{roberta_forward.1} parent=103 // pred_check_branch
          %3088 = sbr.rel (%p3086) target = $region150
        $region149: #{roberta_forward.1} parent=103 // pred_region
          %s3089 = smul.addr %s38, 4
          %s3090 = smul.addr %s3089, 8
          %s3091 = scalar_lea.vmem %s23, %s3090
          // Predicated region
          $region151: #{roberta_forward.1} parent=149 // pred_check
            _
          $region152: #{roberta_forward.1} parent=149 // pred_check_branch
            %3093 = sbr.rel (0) target = $region154
          $region153: #{roberta_forward.1} parent=149 // pred_region
            // Predicated region
            $region155: #{roberta_forward.1} parent=153 // pred_check
              _
            $region156: #{roberta_forward.1} parent=153 // pred_check_branch
              %3095 = sbr.rel (0) target = $region158
            $region157: #{roberta_forward.1} parent=153 // pred_region
              // Predicated region
              $region170: #{roberta_forward.1} parent=157 // pred_check
                _
              $region171: #{roberta_forward.1} parent=157 // pred_check_branch
                %3124 = sbr.rel (0) target = $region173
              $region172: #{roberta_forward.1} parent=157 // pred_region
                loop: start=0, step=1, limit=1
                $region174: #{roberta_forward.1} parent=172 // loop_pre_header
                  _
                $region175: #{roberta_forward.1} parent=172 // loop_header
                  %s3126 = sphi 0, %s3130
                  %p3127 = scmp.ge.s32.totalorder %s3126, 1
                  %s3131 = sphi %s3027, %s3027
                  %s3132 = sphi %s3091, %s3091
                $region176: #{roberta_forward.1} parent=172 // loop_header_branch
                  %3129 = sbr.rel (%p3127) target = $region180
                $region177: #{roberta_forward.1} parent=172 // loop_body
                  %v3133 = vld [vmem:[%s3131] sm:$0xff]
                  %3134 = vst [vmem:[%s3132] sm:$0xff] %v3133
                  %v3135 = vld [vmem:[%s3131 + $0x8] sm:$0xff]
                  %3136 = vst [vmem:[%s3132 + $0x8] sm:$0xff] %v3135
                  %v3137 = vld [vmem:[%s3131 + $0x10] sm:$0xff]
                  %3138 = vst [vmem:[%s3132 + $0x10] sm:$0xff] %v3137
                  %v3139 = vld [vmem:[%s3131 + $0x18] sm:$0xff]
                  %3140 = vst [vmem:[%s3132 + $0x18] sm:$0xff] %v3139
                  %v3141 = vld [vmem:[%s3131 + $0x20] sm:$0xff]
                  %3142 = vst [vmem:[%s3132 + $0x40] sm:$0xff] %v3141
                  %v3143 = vld [vmem:[%s3131 + $0x28] sm:$0xff]
                  %3144 = vst [vmem:[%s3132 + $0x48] sm:$0xff] %v3143
                  %v3145 = vld [vmem:[%s3131 + $0x30] sm:$0xff]
                  %3146 = vst [vmem:[%s3132 + $0x50] sm:$0xff] %v3145
                  %v3147 = vld [vmem:[%s3131 + $0x38] sm:$0xff]
                  %3148 = vst [vmem:[%s3132 + $0x58] sm:$0xff] %v3147
                $region178: #{roberta_forward.1} parent=172 // loop_footer
                  %s3130 = sadd.s32 1, %s3126
                $region179: #{roberta_forward.1} parent=172 // loop_footer_branch
                  %3125 = sbr.rel target = $region175
                $region180: #{roberta_forward.1} parent=172 // loop_exit
                  _
              $region173: #{roberta_forward.1} parent=157 // pred_fallthru
                _
              // Predicated region
              $region181: #{roberta_forward.1} parent=157 // pred_check
                _
              $region182: #{roberta_forward.1} parent=157 // pred_check_branch
                %3150 = sbr.rel target = $region184
              $region183: #{roberta_forward.1} parent=157 // pred_region
                _
              $region184: #{roberta_forward.1} parent=157 // pred_fallthru
                _
            $region158: #{roberta_forward.1} parent=153 // pred_fallthru
              _
            // Predicated region
            $region159: #{roberta_forward.1} parent=153 // pred_check
              _
            $region160: #{roberta_forward.1} parent=153 // pred_check_branch
              %3097 = sbr.rel target = $region162
            $region161: #{roberta_forward.1} parent=153 // pred_region
              loop: start=0, step=1, limit=1
              $region163: #{roberta_forward.1} parent=161 // loop_pre_header
                _
              $region164: #{roberta_forward.1} parent=161 // loop_header
                %s3100 = sphi 0, %s3104
                %p3101 = scmp.ge.s32.totalorder %s3100, 1
                %s3105 = sphi %s3027, %s3027
                %s3106 = sphi %s3091, %s3091
              $region165: #{roberta_forward.1} parent=161 // loop_header_branch
                %3103 = sbr.rel (%p3101) target = $region169
              $region166: #{roberta_forward.1} parent=161 // loop_body
                %v3107 = vld [vmem:[%s3105] sm:$0xff]
                %3108 = vst [vmem:[%s3106] sm:$0xff] %v3107
                %v3109 = vld [vmem:[%s3105 + $0x8] sm:$0xff]
                %3110 = vst [vmem:[%s3106 + $0x8] sm:$0xff] %v3109
                %v3111 = vld [vmem:[%s3105 + $0x10] sm:$0xff]
                %3112 = vst [vmem:[%s3106 + $0x10] sm:$0xff] %v3111
                %v3113 = vld [vmem:[%s3105 + $0x18] sm:$0xff]
                %3114 = vst [vmem:[%s3106 + $0x18] sm:$0xff] %v3113
                %v3115 = vld [vmem:[%s3105 + $0x20] sm:$0xff]
                %3116 = vst [vmem:[%s3106 + $0x40] sm:$0xff] %v3115
                %v3117 = vld [vmem:[%s3105 + $0x28] sm:$0xff]
                %3118 = vst [vmem:[%s3106 + $0x48] sm:$0xff] %v3117
                %v3119 = vld [vmem:[%s3105 + $0x30] sm:$0xff]
                %3120 = vst [vmem:[%s3106 + $0x50] sm:$0xff] %v3119
                %v3121 = vld [vmem:[%s3105 + $0x38] sm:$0xff]
                %3122 = vst [vmem:[%s3106 + $0x58] sm:$0xff] %v3121
              $region167: #{roberta_forward.1} parent=161 // loop_footer
                %s3104 = sadd.s32 1, %s3100
              $region168: #{roberta_forward.1} parent=161 // loop_footer_branch
                %3099 = sbr.rel target = $region164
              $region169: #{roberta_forward.1} parent=161 // loop_exit
                _
            $region162: #{roberta_forward.1} parent=153 // pred_fallthru
              _
          $region154: #{roberta_forward.1} parent=149 // pred_fallthru
            _
          %3151 = vnop
        $region150: #{roberta_forward.1} parent=103 // pred_fallthru
          _
      $region104: #{roberta_forward.1} parent=5 // pred_fallthru
        _
      %p3152 = scmp.le.s32.totalorder 2, %s33
      // Predicated region
      $region185: #{roberta_forward.1} parent=5 // pred_check
        %p3153 = pneg %p3152
      $region186: #{roberta_forward.1} parent=5 // pred_check_branch
        %3155 = sbr.rel (%p3153) target = $region188
      $region187: #{roberta_forward.1} parent=5 // pred_region
        %s3156 = ssub.s32 %s33, 2
        // Predicated region
        $region189: #{roberta_forward.1} parent=187 // pred_check
          %p3157 = pneg %p508
        $region190: #{roberta_forward.1} parent=187 // pred_check_branch
          %3159 = sbr.rel (%p3157) target = $region192
        $region191: #{roberta_forward.1} parent=187 // pred_region
          %s3160 = sand.u32 %s493, 1
          %s3161 = scalar_lea.sflag [#allocation3], %s3160
          %s3162 = sand.u32 %s493, 1
          %s3163 = smul.addr %s3162, 8
          %s3164 = scalar_lea.vmem [#allocation2], %s3163
          %3165 = dma.done %s3161, 128
        $region192: #{roberta_forward.1} parent=187 // pred_fallthru
          _
        // Predicated region
        $region193: #{roberta_forward.1} parent=187 // pred_check
          %p3166 = pneg %p534
        $region194: #{roberta_forward.1} parent=187 // pred_check_branch
          %3168 = sbr.rel (%p3166) target = $region196
        $region195: #{roberta_forward.1} parent=187 // pred_region
          %s3169 = sand.u32 %s519, 1
          %s3170 = sand.u32 %s519, 1
          %s3171 = smul.addr %s3170, 24
          %s3172 = scalar_lea.vmem [#allocation4], %s3171
        $region196: #{roberta_forward.1} parent=187 // pred_fallthru
          _
        // Predicated region
        $region197: #{roberta_forward.1} parent=187 // pred_check
          %p3173 = pneg %p560
        $region198: #{roberta_forward.1} parent=187 // pred_check_branch
          %3175 = sbr.rel (%p3173) target = $region200
        $region199: #{roberta_forward.1} parent=187 // pred_region
          %s3176 = sand.u32 %s545, 1
          %s3177 = sand.u32 %s545, 1
          %s3178 = smul.addr %s3177, 64
          %s3179 = scalar_lea.vmem [#allocation5], %s3178
        $region200: #{roberta_forward.1} parent=187 // pred_fallthru
          _
      $region188: #{roberta_forward.1} parent=5 // pred_fallthru
        _
    $region6: #{roberta_forward.1} parent=1 // loop_footer
      %s37 = sadd.s32 1, %s33
    $region7: #{roberta_forward.1} parent=1 // loop_footer_branch
      %32 = sbr.rel target = $region3
    $region8: #{roberta_forward.1} parent=1 // loop_exit
      _
    %3180 = vsyncpa [#allocation3], 1
    %s3181 = scalar_lea.sflag [#allocation3], 1
    %3182 = vsyncpa %s3181, 1

</llo_original>
